<compile_context>
chip_gen: v7x
topology: tpu7x:2x2x1
jax: 0.10.0
libtpu: 0.0.40
codegen_flags: <defaults>
</compile_context>

<pallas_src>
import functools

import jax
import jax.numpy as jnp
from jax import lax
from jax.experimental import pallas as pl
from jax.experimental.pallas import tpu as pltpu


# ---------------------------------------------------------------------------
# Fused kernel: enc-GRU + dec-GRU + dot-attention + fc_final + log_softmax
# ---------------------------------------------------------------------------
def fused_kernel(x_hist_ref, x_dec_ref,
                 enc_wih_ref, enc_whh_ref, enc_bih_ref, enc_bhh_ref,
                 dec_wih_ref, dec_whh_ref, dec_bih_ref, dec_bhh_ref,
                 uid_ref, fcw_hs_ref, fcw_ctx_ref, fcw_uid_ref, fcb_ref,
                 out_ref, hh_scr, hs_scr):
    H = enc_whh_ref.shape[0]

    def run_gru(x_ref, wih_ref, whh_ref, bih_ref, bhh_ref, out_scr):
        S = x_ref.shape[0]

        # Hoisted input projection: one (S, D_in) x (D_in, 3H) matmul for all steps.
        gi_all = jnp.dot(x_ref[...], wih_ref[...],
                         preferred_element_type=jnp.float32) + bih_ref[...]
        gi_r = gi_all[:, 0:H]
        gi_z = gi_all[:, H:2 * H]
        gi_n = gi_all[:, 2 * H:3 * H]

        # Per-gate hidden-to-hidden slabs, sliced once (not per step) so the
        # recurrence produces lane-contiguous (1, H) gate results.
        whh = whh_ref[...]
        w_hr = whh[:, 0:H]
        w_hz = whh[:, H:2 * H]
        w_hn = whh[:, 2 * H:3 * H]
        bhh = bhh_ref[...]
        b_hr = bhh[:, 0:H]
        b_hz = bhh[:, H:2 * H]
        b_hn = bhh[:, 2 * H:3 * H]

        h = jnp.zeros((1, H), jnp.float32)                 # torch zeros init
        # Fully unrolled recurrence (S is small and static).
        for t in range(S):
            gh_r = jnp.dot(h, w_hr, preferred_element_type=jnp.float32) + b_hr
            gh_z = jnp.dot(h, w_hz, preferred_element_type=jnp.float32) + b_hz
            gh_n = jnp.dot(h, w_hn, preferred_element_type=jnp.float32) + b_hn
            r = jax.nn.sigmoid(gi_r[t:t + 1, :] + gh_r)
            z = jax.nn.sigmoid(gi_z[t:t + 1, :] + gh_z)
            n = jnp.tanh(gi_n[t:t + 1, :] + r * gh_n)      # b_hn inside r-mul (PyTorch)
            h = (1.0 - z) * n + z * h
            out_scr[t:t + 1, :] = h

    run_gru(x_hist_ref, enc_wih_ref, enc_whh_ref, enc_bih_ref, enc_bhh_ref, hh_scr)
    run_gru(x_dec_ref, dec_wih_ref, dec_whh_ref, dec_bih_ref, dec_bhh_ref, hs_scr)

    hs = hs_scr[...]                                       # (T, H)
    hh = hh_scr[...]                                       # (S_hist, H)

    # dot-attention: energies = hs . hh^T without an explicit transpose.
    e = lax.dot_general(hs, hh, dimension_numbers=(((1,), (1,)), ((), ())),
                        preferred_element_type=jnp.float32)       # (T, S_hist)
    m = jnp.max(e, axis=-1, keepdims=True)
    p = jnp.exp(e - m)
    w = p * pl.reciprocal(jnp.sum(p, axis=-1, keepdims=True), approx=True)
    ctx = jnp.dot(w, hh, preferred_element_type=jnp.float32)      # (T, H)

    # fc_final via split matmuls (replaces the (T, 2H+uid) concat) + log_softmax.
    y = (jnp.dot(hs, fcw_hs_ref[...], preferred_element_type=jnp.float32)
         + jnp.dot(ctx, fcw_ctx_ref[...], preferred_element_type=jnp.float32)
         + jnp.dot(uid_ref[...], fcw_uid_ref[...],
                   preferred_element_type=jnp.float32)            # (1, L) bcast over T
         + fcb_ref[...])                                          # (T, L_pad)
    my = jnp.max(y, axis=-1, keepdims=True)
    lse = my + jnp.log(jnp.sum(jnp.exp(y - my), axis=-1, keepdims=True))
    out_ref[...] = y - lse


# ---------------------------------------------------------------------------
# Full forward (embedding gathers / padding glue in plain JAX, one pallas_call)
# ---------------------------------------------------------------------------
def traj_pre_local_attn_long_forward(params, loc, tim, cluster, uid, target_len):
    # Embedding lookups (glue)
    loc_emb = jnp.take(params["emb_loc"], loc, axis=0)
    tim_emb = jnp.take(params["emb_tim"], tim, axis=0)
    clu_emb = jnp.take(params["emb_cluster"], cluster, axis=0)
    x = jnp.concatenate([loc_emb, tim_emb, clu_emb], axis=1)       # (S, input_size)
    # self.dropout(x): identity in eval mode.

    x_hist = x[:-target_len]
    x_dec = x[-target_len:]
    uid_row = jnp.take(params["emb_uid"], uid, axis=0)             # (1, uid_emb)

    H = params["enc_whh"].shape[0]
    fc_w = params["fc_w"]                                          # (2H+uid_emb, L)
    fc_b = params["fc_b"]                                          # (1, L)
    L = fc_w.shape[1]

    # Lane-dense output: pad loc_size up to a multiple of 128. Padded bias columns
    # get a large negative value so they contribute exp() = 0 to the log-softmax.
    L_pad = max(128, ((L + 127) // 128) * 128)
    pad = L_pad - L
    fc_w_p = jnp.pad(fc_w, ((0, 0), (0, pad)))
    fc_b_p = jnp.pad(fc_b, ((0, 0), (0, pad)), constant_values=-1e30)
    fcw_hs = fc_w_p[0:H]
    fcw_ctx = fc_w_p[H:2 * H]
    fcw_uid = fc_w_p[2 * H:]

    S_hist = x_hist.shape[0]
    T = target_len

    score_pad = pl.pallas_call(
        fused_kernel,
        out_shape=jax.ShapeDtypeStruct((T, L_pad), jnp.float32),
        in_specs=[pl.BlockSpec(memory_space=pltpu.MemorySpace.VMEM)] * 15,
        out_specs=pl.BlockSpec(memory_space=pltpu.MemorySpace.VMEM),
        scratch_shapes=[pltpu.VMEM((S_hist, H), jnp.float32),      # hidden_history
                        pltpu.VMEM((T, H), jnp.float32)],          # hidden_state
    )(x_hist, x_dec,
      params["enc_wih"], params["enc_whh"], params["enc_bih"], params["enc_bhh"],
      params["dec_wih"], params["dec_whh"], params["dec_bih"], params["dec_bhh"],
      uid_row, fcw_hs, fcw_ctx, fcw_uid, fc_b_p)

    # self.dropout(out): identity in eval mode.
    return score_pad[:, :L]                                        # (T, loc_size)


# ---------------------------------------------------------------------------
# Deterministic parameter construction
# ---------------------------------------------------------------------------
def make_params(key, *, uid_size, uid_emb, loc_size, loc_emb, tim_size, tim_emb,
                cluster_size, cluster_emb, hidden):
    ks = jax.random.split(key, 16)
    input_size = loc_emb + tim_emb + cluster_emb
    s = 0.1

    def rnd(k, shape):
        return (s * jax.random.normal(k, shape)).astype(jnp.float32)

    params = {
        "emb_uid": rnd(ks[0], (uid_size, uid_emb)),
        "emb_loc": rnd(ks[1], (loc_size, loc_emb)),
        "emb_tim": rnd(ks[2], (tim_size, tim_emb)),
        "emb_cluster": rnd(ks[3], (cluster_size, cluster_emb)),
        # GRU encoder (gate order r,z,n; stored as (in, 3H)/(H, 3H))
        "enc_wih": rnd(ks[4], (input_size, 3 * hidden)),
        "enc_whh": rnd(ks[5], (hidden, 3 * hidden)),
        "enc_bih": jnp.zeros((1, 3 * hidden), jnp.float32),   # init_weights: bias = 0
        "enc_bhh": jnp.zeros((1, 3 * hidden), jnp.float32),
        # GRU decoder
        "dec_wih": rnd(ks[6], (input_size, 3 * hidden)),
        "dec_whh": rnd(ks[7], (hidden, 3 * hidden)),
        "dec_bih": jnp.zeros((1, 3 * hidden), jnp.float32),
        "dec_bhh": jnp.zeros((1, 3 * hidden), jnp.float32),
        # fc_final: (2H + uid_emb) -> loc_size  (stored as (in, out))
        "fc_w": rnd(ks[8], (2 * hidden + uid_emb, loc_size)),
        "fc_b": jnp.zeros((1, loc_size), jnp.float32),
    }
    # TODO(synk): fc_attn / Attn('general'/'concat') params unused for attn_type='dot'.
    return params


if __name__ == "__main__":
    uid_size, uid_emb = 10, 8
    loc_size, loc_emb = 50, 16
    tim_size, tim_emb = 24, 8
    cluster_size, cluster_emb = 10, 8
    hidden = 32
    seq_len, target_len = 12, 4

    key = jax.random.PRNGKey(0)
    kp, k1, k2, k3, k4 = jax.random.split(key, 5)

    params = make_params(kp, uid_size=uid_size, uid_emb=uid_emb,
                         loc_size=loc_size, loc_emb=loc_emb,
                         tim_size=tim_size, tim_emb=tim_emb,
                         cluster_size=cluster_size, cluster_emb=cluster_emb,
                         hidden=hidden)

    loc = jax.random.randint(k1, (seq_len,), 0, loc_size)
    tim = jax.random.randint(k2, (seq_len,), 0, tim_size)
    cluster = jax.random.randint(k3, (seq_len,), 0, cluster_size)
    uid = jax.random.randint(k4, (1,), 0, uid_size)

    fwd = jax.jit(functools.partial(traj_pre_local_attn_long_forward,
                                    target_len=target_len))
    score = fwd(params, loc, tim, cluster, uid)
    jax.block_until_ready(score)

    assert score.shape == (target_len, loc_size)
    assert bool(jnp.all(jnp.isfinite(score)))
    # log_softmax rows should (approximately) sum to 1 in prob space.
    row_sums = jnp.sum(jnp.exp(score), axis=-1)
    assert bool(jnp.all(jnp.abs(row_sums - 1.0) < 1e-3))
    print("KERNEL_OK")
</pallas_src>

<mosaic_0001>
module attributes {stable_mosaic.version = 11 : i64} {
  func.func @fused_kernel(%arg0: memref<8x32xf32, #tpu.memory_space<vmem>>, %arg1: memref<4x32xf32, #tpu.memory_space<vmem>>, %arg2: memref<32x96xf32, #tpu.memory_space<vmem>>, %arg3: memref<32x96xf32, #tpu.memory_space<vmem>>, %arg4: memref<1x96xf32, #tpu.memory_space<vmem>>, %arg5: memref<1x96xf32, #tpu.memory_space<vmem>>, %arg6: memref<32x96xf32, #tpu.memory_space<vmem>>, %arg7: memref<32x96xf32, #tpu.memory_space<vmem>>, %arg8: memref<1x96xf32, #tpu.memory_space<vmem>>, %arg9: memref<1x96xf32, #tpu.memory_space<vmem>>, %arg10: memref<1x8xf32, #tpu.memory_space<vmem>>, %arg11: memref<32x128xf32, #tpu.memory_space<vmem>>, %arg12: memref<32x128xf32, #tpu.memory_space<vmem>>, %arg13: memref<8x128xf32, #tpu.memory_space<vmem>>, %arg14: memref<1x128xf32, #tpu.memory_space<vmem>>, %arg15: memref<4x128xf32, #tpu.memory_space<vmem>>, %arg16: memref<8x32xf32, #tpu.memory_space<vmem>>, %arg17: memref<4x32xf32, #tpu.memory_space<vmem>>) attributes {dimension_semantics = [], scalar_prefetch = 0 : i64, scratch_operands = 2 : i64, tpu.core_type = #tpu.core_type<tc>} {
    %c0 = arith.constant 0 : index
    %c0_0 = arith.constant 0 : index
    %0 = vector.load %arg0[%c0, %c0_0] : memref<8x32xf32, #tpu.memory_space<vmem>>, vector<8x32xf32>
    %c0_1 = arith.constant 0 : index
    %c0_2 = arith.constant 0 : index
    %1 = vector.load %arg2[%c0_1, %c0_2] : memref<32x96xf32, #tpu.memory_space<vmem>>, vector<32x96xf32>
    %cst = arith.constant dense<0.000000e+00> : vector<8x96xf32>
    %2 = tpu.matmul %0, %1, %cst {dimension_numbers = #tpu.dot_dimension_numbers<[1], [0], [0], [1], [0, 0, 1, 1], [], []>} : vector<8x32xf32>, vector<32x96xf32>, vector<8x96xf32> -> vector<8x96xf32>
    %c0_3 = arith.constant 0 : index
    %c0_4 = arith.constant 0 : index
    %3 = vector.load %arg4[%c0_3, %c0_4] : memref<1x96xf32, #tpu.memory_space<vmem>>, vector<1x96xf32>
    %4 = vector.broadcast %3 : vector<1x96xf32> to vector<8x96xf32>
    %5 = arith.addf %2, %4 : vector<8x96xf32>
    %6 = vector.extract_strided_slice %5 {offsets = [0, 0], sizes = [8, 32], strides = [1, 1]} : vector<8x96xf32> to vector<8x32xf32>
    %7 = vector.extract_strided_slice %5 {offsets = [0, 32], sizes = [8, 32], strides = [1, 1]} : vector<8x96xf32> to vector<8x32xf32>
    %8 = vector.extract_strided_slice %5 {offsets = [0, 64], sizes = [8, 32], strides = [1, 1]} : vector<8x96xf32> to vector<8x32xf32>
    %c0_5 = arith.constant 0 : index
    %c0_6 = arith.constant 0 : index
    %9 = vector.load %arg3[%c0_5, %c0_6] : memref<32x96xf32, #tpu.memory_space<vmem>>, vector<32x96xf32>
    %10 = vector.extract_strided_slice %9 {offsets = [0, 0], sizes = [32, 32], strides = [1, 1]} : vector<32x96xf32> to vector<32x32xf32>
    %11 = vector.extract_strided_slice %9 {offsets = [0, 32], sizes = [32, 32], strides = [1, 1]} : vector<32x96xf32> to vector<32x32xf32>
    %12 = vector.extract_strided_slice %9 {offsets = [0, 64], sizes = [32, 32], strides = [1, 1]} : vector<32x96xf32> to vector<32x32xf32>
    %c0_7 = arith.constant 0 : index
    %c0_8 = arith.constant 0 : index
    %13 = vector.load %arg5[%c0_7, %c0_8] : memref<1x96xf32, #tpu.memory_space<vmem>>, vector<1x96xf32>
    %14 = vector.extract_strided_slice %13 {offsets = [0, 0], sizes = [1, 32], strides = [1, 1]} : vector<1x96xf32> to vector<1x32xf32>
    %15 = vector.extract_strided_slice %13 {offsets = [0, 32], sizes = [1, 32], strides = [1, 1]} : vector<1x96xf32> to vector<1x32xf32>
    %16 = vector.extract_strided_slice %13 {offsets = [0, 64], sizes = [1, 32], strides = [1, 1]} : vector<1x96xf32> to vector<1x32xf32>
    %cst_9 = arith.constant 0.000000e+00 : f32
    %17 = vector.broadcast %cst_9 : f32 to vector<1x32xf32>
    %cst_10 = arith.constant dense<0.000000e+00> : vector<1x32xf32>
    %18 = tpu.matmul %17, %10, %cst_10 {dimension_numbers = #tpu.dot_dimension_numbers<[1], [0], [0], [1], [0, 0, 1, 1], [], []>} : vector<1x32xf32>, vector<32x32xf32>, vector<1x32xf32> -> vector<1x32xf32>
    %19 = arith.addf %18, %14 : vector<1x32xf32>
    %cst_11 = arith.constant dense<0.000000e+00> : vector<1x32xf32>
    %20 = tpu.matmul %17, %11, %cst_11 {dimension_numbers = #tpu.dot_dimension_numbers<[1], [0], [0], [1], [0, 0, 1, 1], [], []>} : vector<1x32xf32>, vector<32x32xf32>, vector<1x32xf32> -> vector<1x32xf32>
    %21 = arith.addf %20, %15 : vector<1x32xf32>
    %cst_12 = arith.constant dense<0.000000e+00> : vector<1x32xf32>
    %22 = tpu.matmul %17, %12, %cst_12 {dimension_numbers = #tpu.dot_dimension_numbers<[1], [0], [0], [1], [0, 0, 1, 1], [], []>} : vector<1x32xf32>, vector<32x32xf32>, vector<1x32xf32> -> vector<1x32xf32>
    %23 = arith.addf %22, %16 : vector<1x32xf32>
    %24 = vector.extract_strided_slice %6 {offsets = [0, 0], sizes = [1, 32], strides = [1, 1]} : vector<8x32xf32> to vector<1x32xf32>
    %25 = arith.addf %24, %19 : vector<1x32xf32>
    %26 = arith.negf %25 : vector<1x32xf32>
    %27 = math.exp %26 : vector<1x32xf32>
    %cst_13 = arith.constant 1.000000e+00 : f32
    %28 = vector.broadcast %cst_13 : f32 to vector<1x32xf32>
    %29 = arith.addf %28, %27 : vector<1x32xf32>
    %30 = arith.divf %28, %29 : vector<1x32xf32>
    %31 = vector.extract_strided_slice %7 {offsets = [0, 0], sizes = [1, 32], strides = [1, 1]} : vector<8x32xf32> to vector<1x32xf32>
    %32 = arith.addf %31, %21 : vector<1x32xf32>
    %33 = arith.negf %32 : vector<1x32xf32>
    %34 = math.exp %33 : vector<1x32xf32>
    %cst_14 = arith.constant 1.000000e+00 : f32
    %35 = vector.broadcast %cst_14 : f32 to vector<1x32xf32>
    %36 = arith.addf %35, %34 : vector<1x32xf32>
    %37 = arith.divf %35, %36 : vector<1x32xf32>
    %38 = vector.extract_strided_slice %8 {offsets = [0, 0], sizes = [1, 32], strides = [1, 1]} : vector<8x32xf32> to vector<1x32xf32>
    %39 = arith.mulf %30, %23 : vector<1x32xf32>
    %40 = arith.addf %38, %39 : vector<1x32xf32>
    %41 = math.tanh %40 : vector<1x32xf32>
    %cst_15 = arith.constant 1.000000e+00 : f32
    %42 = vector.broadcast %cst_15 : f32 to vector<1x32xf32>
    %43 = arith.subf %42, %37 : vector<1x32xf32>
    %44 = arith.mulf %43, %41 : vector<1x32xf32>
    %45 = arith.mulf %37, %17 : vector<1x32xf32>
    %46 = arith.addf %44, %45 : vector<1x32xf32>
    %c0_16 = arith.constant 0 : index
    %c0_17 = arith.constant 0 : index
    %47 = vector.load %arg16[%c0_16, %c0_17] : memref<8x32xf32, #tpu.memory_space<vmem>>, vector<1x32xf32>
    tpu.vector_store %arg16[%c0_16, %c0_17], %46 {strides = array<i32>} : memref<8x32xf32, #tpu.memory_space<vmem>>, vector<1x32xf32>,
    %cst_18 = arith.constant dense<0.000000e+00> : vector<1x32xf32>
    %48 = tpu.matmul %46, %10, %cst_18 {dimension_numbers = #tpu.dot_dimension_numbers<[1], [0], [0], [1], [0, 0, 1, 1], [], []>} : vector<1x32xf32>, vector<32x32xf32>, vector<1x32xf32> -> vector<1x32xf32>
    %49 = arith.addf %48, %14 : vector<1x32xf32>
    %cst_19 = arith.constant dense<0.000000e+00> : vector<1x32xf32>
    %50 = tpu.matmul %46, %11, %cst_19 {dimension_numbers = #tpu.dot_dimension_numbers<[1], [0], [0], [1], [0, 0, 1, 1], [], []>} : vector<1x32xf32>, vector<32x32xf32>, vector<1x32xf32> -> vector<1x32xf32>
    %51 = arith.addf %50, %15 : vector<1x32xf32>
    %cst_20 = arith.constant dense<0.000000e+00> : vector<1x32xf32>
    %52 = tpu.matmul %46, %12, %cst_20 {dimension_numbers = #tpu.dot_dimension_numbers<[1], [0], [0], [1], [0, 0, 1, 1], [], []>} : vector<1x32xf32>, vector<32x32xf32>, vector<1x32xf32> -> vector<1x32xf32>
    %53 = arith.addf %52, %16 : vector<1x32xf32>
    %54 = vector.extract_strided_slice %6 {offsets = [1, 0], sizes = [1, 32], strides = [1, 1]} : vector<8x32xf32> to vector<1x32xf32>
    %55 = arith.addf %54, %49 : vector<1x32xf32>
    %56 = arith.negf %55 : vector<1x32xf32>
    %57 = math.exp %56 : vector<1x32xf32>
    %cst_21 = arith.constant 1.000000e+00 : f32
    %58 = vector.broadcast %cst_21 : f32 to vector<1x32xf32>
    %59 = arith.addf %58, %57 : vector<1x32xf32>
    %60 = arith.divf %58, %59 : vector<1x32xf32>
    %61 = vector.extract_strided_slice %7 {offsets = [1, 0], sizes = [1, 32], strides = [1, 1]} : vector<8x32xf32> to vector<1x32xf32>
    %62 = arith.addf %61, %51 : vector<1x32xf32>
    %63 = arith.negf %62 : vector<1x32xf32>
    %64 = math.exp %63 : vector<1x32xf32>
    %cst_22 = arith.constant 1.000000e+00 : f32
    %65 = vector.broadcast %cst_22 : f32 to vector<1x32xf32>
    %66 = arith.addf %65, %64 : vector<1x32xf32>
    %67 = arith.divf %65, %66 : vector<1x32xf32>
    %68 = vector.extract_strided_slice %8 {offsets = [1, 0], sizes = [1, 32], strides = [1, 1]} : vector<8x32xf32> to vector<1x32xf32>
    %69 = arith.mulf %60, %53 : vector<1x32xf32>
    %70 = arith.addf %68, %69 : vector<1x32xf32>
    %71 = math.tanh %70 : vector<1x32xf32>
    %cst_23 = arith.constant 1.000000e+00 : f32
    %72 = vector.broadcast %cst_23 : f32 to vector<1x32xf32>
    %73 = arith.subf %72, %67 : vector<1x32xf32>
    %74 = arith.mulf %73, %71 : vector<1x32xf32>
    %75 = arith.mulf %67, %46 : vector<1x32xf32>
    %76 = arith.addf %74, %75 : vector<1x32xf32>
    %c1 = arith.constant 1 : index
    %c0_24 = arith.constant 0 : index
    %77 = vector.load %arg16[%c1, %c0_24] : memref<8x32xf32, #tpu.memory_space<vmem>>, vector<1x32xf32>
    tpu.vector_store %arg16[%c1, %c0_24], %76 {strides = array<i32>} : memref<8x32xf32, #tpu.memory_space<vmem>>, vector<1x32xf32>,
    %cst_25 = arith.constant dense<0.000000e+00> : vector<1x32xf32>
    %78 = tpu.matmul %76, %10, %cst_25 {dimension_numbers = #tpu.dot_dimension_numbers<[1], [0], [0], [1], [0, 0, 1, 1], [], []>} : vector<1x32xf32>, vector<32x32xf32>, vector<1x32xf32> -> vector<1x32xf32>
    %79 = arith.addf %78, %14 : vector<1x32xf32>
    %cst_26 = arith.constant dense<0.000000e+00> : vector<1x32xf32>
    %80 = tpu.matmul %76, %11, %cst_26 {dimension_numbers = #tpu.dot_dimension_numbers<[1], [0], [0], [1], [0, 0, 1, 1], [], []>} : vector<1x32xf32>, vector<32x32xf32>, vector<1x32xf32> -> vector<1x32xf32>
    %81 = arith.addf %80, %15 : vector<1x32xf32>
    %cst_27 = arith.constant dense<0.000000e+00> : vector<1x32xf32>
    %82 = tpu.matmul %76, %12, %cst_27 {dimension_numbers = #tpu.dot_dimension_numbers<[1], [0], [0], [1], [0, 0, 1, 1], [], []>} : vector<1x32xf32>, vector<32x32xf32>, vector<1x32xf32> -> vector<1x32xf32>
    %83 = arith.addf %82, %16 : vector<1x32xf32>
    %84 = vector.extract_strided_slice %6 {offsets = [2, 0], sizes = [1, 32], strides = [1, 1]} : vector<8x32xf32> to vector<1x32xf32>
    %85 = arith.addf %84, %79 : vector<1x32xf32>
    %86 = arith.negf %85 : vector<1x32xf32>
    %87 = math.exp %86 : vector<1x32xf32>
    %cst_28 = arith.constant 1.000000e+00 : f32
    %88 = vector.broadcast %cst_28 : f32 to vector<1x32xf32>
    %89 = arith.addf %88, %87 : vector<1x32xf32>
    %90 = arith.divf %88, %89 : vector<1x32xf32>
    %91 = vector.extract_strided_slice %7 {offsets = [2, 0], sizes = [1, 32], strides = [1, 1]} : vector<8x32xf32> to vector<1x32xf32>
    %92 = arith.addf %91, %81 : vector<1x32xf32>
    %93 = arith.negf %92 : vector<1x32xf32>
    %94 = math.exp %93 : vector<1x32xf32>
    %cst_29 = arith.constant 1.000000e+00 : f32
    %95 = vector.broadcast %cst_29 : f32 to vector<1x32xf32>
    %96 = arith.addf %95, %94 : vector<1x32xf32>
    %97 = arith.divf %95, %96 : vector<1x32xf32>
    %98 = vector.extract_strided_slice %8 {offsets = [2, 0], sizes = [1, 32], strides = [1, 1]} : vector<8x32xf32> to vector<1x32xf32>
    %99 = arith.mulf %90, %83 : vector<1x32xf32>
    %100 = arith.addf %98, %99 : vector<1x32xf32>
    %101 = math.tanh %100 : vector<1x32xf32>
    %cst_30 = arith.constant 1.000000e+00 : f32
    %102 = vector.broadcast %cst_30 : f32 to vector<1x32xf32>
    %103 = arith.subf %102, %97 : vector<1x32xf32>
    %104 = arith.mulf %103, %101 : vector<1x32xf32>
    %105 = arith.mulf %97, %76 : vector<1x32xf32>
    %106 = arith.addf %104, %105 : vector<1x32xf32>
    %c2 = arith.constant 2 : index
    %c0_31 = arith.constant 0 : index
    %107 = vector.load %arg16[%c2, %c0_31] : memref<8x32xf32, #tpu.memory_space<vmem>>, vector<1x32xf32>
    tpu.vector_store %arg16[%c2, %c0_31], %106 {strides = array<i32>} : memref<8x32xf32, #tpu.memory_space<vmem>>, vector<1x32xf32>,
    %cst_32 = arith.constant dense<0.000000e+00> : vector<1x32xf32>
    %108 = tpu.matmul %106, %10, %cst_32 {dimension_numbers = #tpu.dot_dimension_numbers<[1], [0], [0], [1], [0, 0, 1, 1], [], []>} : vector<1x32xf32>, vector<32x32xf32>, vector<1x32xf32> -> vector<1x32xf32>
    %109 = arith.addf %108, %14 : vector<1x32xf32>
    %cst_33 = arith.constant dense<0.000000e+00> : vector<1x32xf32>
    %110 = tpu.matmul %106, %11, %cst_33 {dimension_numbers = #tpu.dot_dimension_numbers<[1], [0], [0], [1], [0, 0, 1, 1], [], []>} : vector<1x32xf32>, vector<32x32xf32>, vector<1x32xf32> -> vector<1x32xf32>
    %111 = arith.addf %110, %15 : vector<1x32xf32>
    %cst_34 = arith.constant dense<0.000000e+00> : vector<1x32xf32>
    %112 = tpu.matmul %106, %12, %cst_34 {dimension_numbers = #tpu.dot_dimension_numbers<[1], [0], [0], [1], [0, 0, 1, 1], [], []>} : vector<1x32xf32>, vector<32x32xf32>, vector<1x32xf32> -> vector<1x32xf32>
    %113 = arith.addf %112, %16 : vector<1x32xf32>
    %114 = vector.extract_strided_slice %6 {offsets = [3, 0], sizes = [1, 32], strides = [1, 1]} : vector<8x32xf32> to vector<1x32xf32>
    %115 = arith.addf %114, %109 : vector<1x32xf32>
    %116 = arith.negf %115 : vector<1x32xf32>
    %117 = math.exp %116 : vector<1x32xf32>
    %cst_35 = arith.constant 1.000000e+00 : f32
    %118 = vector.broadcast %cst_35 : f32 to vector<1x32xf32>
    %119 = arith.addf %118, %117 : vector<1x32xf32>
    %120 = arith.divf %118, %119 : vector<1x32xf32>
    %121 = vector.extract_strided_slice %7 {offsets = [3, 0], sizes = [1, 32], strides = [1, 1]} : vector<8x32xf32> to vector<1x32xf32>
    %122 = arith.addf %121, %111 : vector<1x32xf32>
    %123 = arith.negf %122 : vector<1x32xf32>
    %124 = math.exp %123 : vector<1x32xf32>
    %cst_36 = arith.constant 1.000000e+00 : f32
    %125 = vector.broadcast %cst_36 : f32 to vector<1x32xf32>
    %126 = arith.addf %125, %124 : vector<1x32xf32>
    %127 = arith.divf %125, %126 : vector<1x32xf32>
    %128 = vector.extract_strided_slice %8 {offsets = [3, 0], sizes = [1, 32], strides = [1, 1]} : vector<8x32xf32> to vector<1x32xf32>
    %129 = arith.mulf %120, %113 : vector<1x32xf32>
    %130 = arith.addf %128, %129 : vector<1x32xf32>
    %131 = math.tanh %130 : vector<1x32xf32>
    %cst_37 = arith.constant 1.000000e+00 : f32
    %132 = vector.broadcast %cst_37 : f32 to vector<1x32xf32>
    %133 = arith.subf %132, %127 : vector<1x32xf32>
    %134 = arith.mulf %133, %131 : vector<1x32xf32>
    %135 = arith.mulf %127, %106 : vector<1x32xf32>
    %136 = arith.addf %134, %135 : vector<1x32xf32>
    %c3 = arith.constant 3 : index
    %c0_38 = arith.constant 0 : index
    %137 = vector.load %arg16[%c3, %c0_38] : memref<8x32xf32, #tpu.memory_space<vmem>>, vector<1x32xf32>
    tpu.vector_store %arg16[%c3, %c0_38], %136 {strides = array<i32>} : memref<8x32xf32, #tpu.memory_space<vmem>>, vector<1x32xf32>,
    %cst_39 = arith.constant dense<0.000000e+00> : vector<1x32xf32>
    %138 = tpu.matmul %136, %10, %cst_39 {dimension_numbers = #tpu.dot_dimension_numbers<[1], [0], [0], [1], [0, 0, 1, 1], [], []>} : vector<1x32xf32>, vector<32x32xf32>, vector<1x32xf32> -> vector<1x32xf32>
    %139 = arith.addf %138, %14 : vector<1x32xf32>
    %cst_40 = arith.constant dense<0.000000e+00> : vector<1x32xf32>
    %140 = tpu.matmul %136, %11, %cst_40 {dimension_numbers = #tpu.dot_dimension_numbers<[1], [0], [0], [1], [0, 0, 1, 1], [], []>} : vector<1x32xf32>, vector<32x32xf32>, vector<1x32xf32> -> vector<1x32xf32>
    %141 = arith.addf %140, %15 : vector<1x32xf32>
    %cst_41 = arith.constant dense<0.000000e+00> : vector<1x32xf32>
    %142 = tpu.matmul %136, %12, %cst_41 {dimension_numbers = #tpu.dot_dimension_numbers<[1], [0], [0], [1], [0, 0, 1, 1], [], []>} : vector<1x32xf32>, vector<32x32xf32>, vector<1x32xf32> -> vector<1x32xf32>
    %143 = arith.addf %142, %16 : vector<1x32xf32>
    %144 = vector.extract_strided_slice %6 {offsets = [4, 0], sizes = [1, 32], strides = [1, 1]} : vector<8x32xf32> to vector<1x32xf32>
    %145 = arith.addf %144, %139 : vector<1x32xf32>
    %146 = arith.negf %145 : vector<1x32xf32>
    %147 = math.exp %146 : vector<1x32xf32>
    %cst_42 = arith.constant 1.000000e+00 : f32
    %148 = vector.broadcast %cst_42 : f32 to vector<1x32xf32>
    %149 = arith.addf %148, %147 : vector<1x32xf32>
    %150 = arith.divf %148, %149 : vector<1x32xf32>
    %151 = vector.extract_strided_slice %7 {offsets = [4, 0], sizes = [1, 32], strides = [1, 1]} : vector<8x32xf32> to vector<1x32xf32>
    %152 = arith.addf %151, %141 : vector<1x32xf32>
    %153 = arith.negf %152 : vector<1x32xf32>
    %154 = math.exp %153 : vector<1x32xf32>
    %cst_43 = arith.constant 1.000000e+00 : f32
    %155 = vector.broadcast %cst_43 : f32 to vector<1x32xf32>
    %156 = arith.addf %155, %154 : vector<1x32xf32>
    %157 = arith.divf %155, %156 : vector<1x32xf32>
    %158 = vector.extract_strided_slice %8 {offsets = [4, 0], sizes = [1, 32], strides = [1, 1]} : vector<8x32xf32> to vector<1x32xf32>
    %159 = arith.mulf %150, %143 : vector<1x32xf32>
    %160 = arith.addf %158, %159 : vector<1x32xf32>
    %161 = math.tanh %160 : vector<1x32xf32>
    %cst_44 = arith.constant 1.000000e+00 : f32
    %162 = vector.broadcast %cst_44 : f32 to vector<1x32xf32>
    %163 = arith.subf %162, %157 : vector<1x32xf32>
    %164 = arith.mulf %163, %161 : vector<1x32xf32>
    %165 = arith.mulf %157, %136 : vector<1x32xf32>
    %166 = arith.addf %164, %165 : vector<1x32xf32>
    %c4 = arith.constant 4 : index
    %c0_45 = arith.constant 0 : index
    %167 = vector.load %arg16[%c4, %c0_45] : memref<8x32xf32, #tpu.memory_space<vmem>>, vector<1x32xf32>
    tpu.vector_store %arg16[%c4, %c0_45], %166 {strides = array<i32>} : memref<8x32xf32, #tpu.memory_space<vmem>>, vector<1x32xf32>,
    %cst_46 = arith.constant dense<0.000000e+00> : vector<1x32xf32>
    %168 = tpu.matmul %166, %10, %cst_46 {dimension_numbers = #tpu.dot_dimension_numbers<[1], [0], [0], [1], [0, 0, 1, 1], [], []>} : vector<1x32xf32>, vector<32x32xf32>, vector<1x32xf32> -> vector<1x32xf32>
    %169 = arith.addf %168, %14 : vector<1x32xf32>
    %cst_47 = arith.constant dense<0.000000e+00> : vector<1x32xf32>
    %170 = tpu.matmul %166, %11, %cst_47 {dimension_numbers = #tpu.dot_dimension_numbers<[1], [0], [0], [1], [0, 0, 1, 1], [], []>} : vector<1x32xf32>, vector<32x32xf32>, vector<1x32xf32> -> vector<1x32xf32>
    %171 = arith.addf %170, %15 : vector<1x32xf32>
    %cst_48 = arith.constant dense<0.000000e+00> : vector<1x32xf32>
    %172 = tpu.matmul %166, %12, %cst_48 {dimension_numbers = #tpu.dot_dimension_numbers<[1], [0], [0], [1], [0, 0, 1, 1], [], []>} : vector<1x32xf32>, vector<32x32xf32>, vector<1x32xf32> -> vector<1x32xf32>
    %173 = arith.addf %172, %16 : vector<1x32xf32>
    %174 = vector.extract_strided_slice %6 {offsets = [5, 0], sizes = [1, 32], strides = [1, 1]} : vector<8x32xf32> to vector<1x32xf32>
    %175 = arith.addf %174, %169 : vector<1x32xf32>
    %176 = arith.negf %175 : vector<1x32xf32>
    %177 = math.exp %176 : vector<1x32xf32>
    %cst_49 = arith.constant 1.000000e+00 : f32
    %178 = vector.broadcast %cst_49 : f32 to vector<1x32xf32>
    %179 = arith.addf %178, %177 : vector<1x32xf32>
    %180 = arith.divf %178, %179 : vector<1x32xf32>
    %181 = vector.extract_strided_slice %7 {offsets = [5, 0], sizes = [1, 32], strides = [1, 1]} : vector<8x32xf32> to vector<1x32xf32>
    %182 = arith.addf %181, %171 : vector<1x32xf32>
    %183 = arith.negf %182 : vector<1x32xf32>
    %184 = math.exp %183 : vector<1x32xf32>
    %cst_50 = arith.constant 1.000000e+00 : f32
    %185 = vector.broadcast %cst_50 : f32 to vector<1x32xf32>
    %186 = arith.addf %185, %184 : vector<1x32xf32>
    %187 = arith.divf %185, %186 : vector<1x32xf32>
    %188 = vector.extract_strided_slice %8 {offsets = [5, 0], sizes = [1, 32], strides = [1, 1]} : vector<8x32xf32> to vector<1x32xf32>
    %189 = arith.mulf %180, %173 : vector<1x32xf32>
    %190 = arith.addf %188, %189 : vector<1x32xf32>
    %191 = math.tanh %190 : vector<1x32xf32>
    %cst_51 = arith.constant 1.000000e+00 : f32
    %192 = vector.broadcast %cst_51 : f32 to vector<1x32xf32>
    %193 = arith.subf %192, %187 : vector<1x32xf32>
    %194 = arith.mulf %193, %191 : vector<1x32xf32>
    %195 = arith.mulf %187, %166 : vector<1x32xf32>
    %196 = arith.addf %194, %195 : vector<1x32xf32>
    %c5 = arith.constant 5 : index
    %c0_52 = arith.constant 0 : index
    %197 = vector.load %arg16[%c5, %c0_52] : memref<8x32xf32, #tpu.memory_space<vmem>>, vector<1x32xf32>
    tpu.vector_store %arg16[%c5, %c0_52], %196 {strides = array<i32>} : memref<8x32xf32, #tpu.memory_space<vmem>>, vector<1x32xf32>,
    %cst_53 = arith.constant dense<0.000000e+00> : vector<1x32xf32>
    %198 = tpu.matmul %196, %10, %cst_53 {dimension_numbers = #tpu.dot_dimension_numbers<[1], [0], [0], [1], [0, 0, 1, 1], [], []>} : vector<1x32xf32>, vector<32x32xf32>, vector<1x32xf32> -> vector<1x32xf32>
    %199 = arith.addf %198, %14 : vector<1x32xf32>
    %cst_54 = arith.constant dense<0.000000e+00> : vector<1x32xf32>
    %200 = tpu.matmul %196, %11, %cst_54 {dimension_numbers = #tpu.dot_dimension_numbers<[1], [0], [0], [1], [0, 0, 1, 1], [], []>} : vector<1x32xf32>, vector<32x32xf32>, vector<1x32xf32> -> vector<1x32xf32>
    %201 = arith.addf %200, %15 : vector<1x32xf32>
    %cst_55 = arith.constant dense<0.000000e+00> : vector<1x32xf32>
    %202 = tpu.matmul %196, %12, %cst_55 {dimension_numbers = #tpu.dot_dimension_numbers<[1], [0], [0], [1], [0, 0, 1, 1], [], []>} : vector<1x32xf32>, vector<32x32xf32>, vector<1x32xf32> -> vector<1x32xf32>
    %203 = arith.addf %202, %16 : vector<1x32xf32>
    %204 = vector.extract_strided_slice %6 {offsets = [6, 0], sizes = [1, 32], strides = [1, 1]} : vector<8x32xf32> to vector<1x32xf32>
    %205 = arith.addf %204, %199 : vector<1x32xf32>
    %206 = arith.negf %205 : vector<1x32xf32>
    %207 = math.exp %206 : vector<1x32xf32>
    %cst_56 = arith.constant 1.000000e+00 : f32
    %208 = vector.broadcast %cst_56 : f32 to vector<1x32xf32>
    %209 = arith.addf %208, %207 : vector<1x32xf32>
    %210 = arith.divf %208, %209 : vector<1x32xf32>
    %211 = vector.extract_strided_slice %7 {offsets = [6, 0], sizes = [1, 32], strides = [1, 1]} : vector<8x32xf32> to vector<1x32xf32>
    %212 = arith.addf %211, %201 : vector<1x32xf32>
    %213 = arith.negf %212 : vector<1x32xf32>
    %214 = math.exp %213 : vector<1x32xf32>
    %cst_57 = arith.constant 1.000000e+00 : f32
    %215 = vector.broadcast %cst_57 : f32 to vector<1x32xf32>
    %216 = arith.addf %215, %214 : vector<1x32xf32>
    %217 = arith.divf %215, %216 : vector<1x32xf32>
    %218 = vector.extract_strided_slice %8 {offsets = [6, 0], sizes = [1, 32], strides = [1, 1]} : vector<8x32xf32> to vector<1x32xf32>
    %219 = arith.mulf %210, %203 : vector<1x32xf32>
    %220 = arith.addf %218, %219 : vector<1x32xf32>
    %221 = math.tanh %220 : vector<1x32xf32>
    %cst_58 = arith.constant 1.000000e+00 : f32
    %222 = vector.broadcast %cst_58 : f32 to vector<1x32xf32>
    %223 = arith.subf %222, %217 : vector<1x32xf32>
    %224 = arith.mulf %223, %221 : vector<1x32xf32>
    %225 = arith.mulf %217, %196 : vector<1x32xf32>
    %226 = arith.addf %224, %225 : vector<1x32xf32>
    %c6 = arith.constant 6 : index
    %c0_59 = arith.constant 0 : index
    %227 = vector.load %arg16[%c6, %c0_59] : memref<8x32xf32, #tpu.memory_space<vmem>>, vector<1x32xf32>
    tpu.vector_store %arg16[%c6, %c0_59], %226 {strides = array<i32>} : memref<8x32xf32, #tpu.memory_space<vmem>>, vector<1x32xf32>,
    %cst_60 = arith.constant dense<0.000000e+00> : vector<1x32xf32>
    %228 = tpu.matmul %226, %10, %cst_60 {dimension_numbers = #tpu.dot_dimension_numbers<[1], [0], [0], [1], [0, 0, 1, 1], [], []>} : vector<1x32xf32>, vector<32x32xf32>, vector<1x32xf32> -> vector<1x32xf32>
    %229 = arith.addf %228, %14 : vector<1x32xf32>
    %cst_61 = arith.constant dense<0.000000e+00> : vector<1x32xf32>
    %230 = tpu.matmul %226, %11, %cst_61 {dimension_numbers = #tpu.dot_dimension_numbers<[1], [0], [0], [1], [0, 0, 1, 1], [], []>} : vector<1x32xf32>, vector<32x32xf32>, vector<1x32xf32> -> vector<1x32xf32>
    %231 = arith.addf %230, %15 : vector<1x32xf32>
    %cst_62 = arith.constant dense<0.000000e+00> : vector<1x32xf32>
    %232 = tpu.matmul %226, %12, %cst_62 {dimension_numbers = #tpu.dot_dimension_numbers<[1], [0], [0], [1], [0, 0, 1, 1], [], []>} : vector<1x32xf32>, vector<32x32xf32>, vector<1x32xf32> -> vector<1x32xf32>
    %233 = arith.addf %232, %16 : vector<1x32xf32>
    %234 = vector.extract_strided_slice %6 {offsets = [7, 0], sizes = [1, 32], strides = [1, 1]} : vector<8x32xf32> to vector<1x32xf32>
    %235 = arith.addf %234, %229 : vector<1x32xf32>
    %236 = arith.negf %235 : vector<1x32xf32>
    %237 = math.exp %236 : vector<1x32xf32>
    %cst_63 = arith.constant 1.000000e+00 : f32
    %238 = vector.broadcast %cst_63 : f32 to vector<1x32xf32>
    %239 = arith.addf %238, %237 : vector<1x32xf32>
    %240 = arith.divf %238, %239 : vector<1x32xf32>
    %241 = vector.extract_strided_slice %7 {offsets = [7, 0], sizes = [1, 32], strides = [1, 1]} : vector<8x32xf32> to vector<1x32xf32>
    %242 = arith.addf %241, %231 : vector<1x32xf32>
    %243 = arith.negf %242 : vector<1x32xf32>
    %244 = math.exp %243 : vector<1x32xf32>
    %cst_64 = arith.constant 1.000000e+00 : f32
    %245 = vector.broadcast %cst_64 : f32 to vector<1x32xf32>
    %246 = arith.addf %245, %244 : vector<1x32xf32>
    %247 = arith.divf %245, %246 : vector<1x32xf32>
    %248 = vector.extract_strided_slice %8 {offsets = [7, 0], sizes = [1, 32], strides = [1, 1]} : vector<8x32xf32> to vector<1x32xf32>
    %249 = arith.mulf %240, %233 : vector<1x32xf32>
    %250 = arith.addf %248, %249 : vector<1x32xf32>
    %251 = math.tanh %250 : vector<1x32xf32>
    %cst_65 = arith.constant 1.000000e+00 : f32
    %252 = vector.broadcast %cst_65 : f32 to vector<1x32xf32>
    %253 = arith.subf %252, %247 : vector<1x32xf32>
    %254 = arith.mulf %253, %251 : vector<1x32xf32>
    %255 = arith.mulf %247, %226 : vector<1x32xf32>
    %256 = arith.addf %254, %255 : vector<1x32xf32>
    %c7 = arith.constant 7 : index
    %c0_66 = arith.constant 0 : index
    %257 = vector.load %arg16[%c7, %c0_66] : memref<8x32xf32, #tpu.memory_space<vmem>>, vector<1x32xf32>
    tpu.vector_store %arg16[%c7, %c0_66], %256 {strides = array<i32>} : memref<8x32xf32, #tpu.memory_space<vmem>>, vector<1x32xf32>,
    %c0_67 = arith.constant 0 : index
    %c0_68 = arith.constant 0 : index
    %258 = vector.load %arg1[%c0_67, %c0_68] : memref<4x32xf32, #tpu.memory_space<vmem>>, vector<4x32xf32>
    %c0_69 = arith.constant 0 : index
    %c0_70 = arith.constant 0 : index
    %259 = vector.load %arg6[%c0_69, %c0_70] : memref<32x96xf32, #tpu.memory_space<vmem>>, vector<32x96xf32>
    %cst_71 = arith.constant dense<0.000000e+00> : vector<4x96xf32>
    %260 = tpu.matmul %258, %259, %cst_71 {dimension_numbers = #tpu.dot_dimension_numbers<[1], [0], [0], [1], [0, 0, 1, 1], [], []>} : vector<4x32xf32>, vector<32x96xf32>, vector<4x96xf32> -> vector<4x96xf32>
    %c0_72 = arith.constant 0 : index
    %c0_73 = arith.constant 0 : index
    %261 = vector.load %arg8[%c0_72, %c0_73] : memref<1x96xf32, #tpu.memory_space<vmem>>, vector<1x96xf32>
    %262 = vector.broadcast %261 : vector<1x96xf32> to vector<4x96xf32>
    %263 = arith.addf %260, %262 : vector<4x96xf32>
    %264 = vector.extract_strided_slice %263 {offsets = [0, 0], sizes = [4, 32], strides = [1, 1]} : vector<4x96xf32> to vector<4x32xf32>
    %265 = vector.extract_strided_slice %263 {offsets = [0, 32], sizes = [4, 32], strides = [1, 1]} : vector<4x96xf32> to vector<4x32xf32>
    %266 = vector.extract_strided_slice %263 {offsets = [0, 64], sizes = [4, 32], strides = [1, 1]} : vector<4x96xf32> to vector<4x32xf32>
    %c0_74 = arith.constant 0 : index
    %c0_75 = arith.constant 0 : index
    %267 = vector.load %arg7[%c0_74, %c0_75] : memref<32x96xf32, #tpu.memory_space<vmem>>, vector<32x96xf32>
    %268 = vector.extract_strided_slice %267 {offsets = [0, 0], sizes = [32, 32], strides = [1, 1]} : vector<32x96xf32> to vector<32x32xf32>
    %269 = vector.extract_strided_slice %267 {offsets = [0, 32], sizes = [32, 32], strides = [1, 1]} : vector<32x96xf32> to vector<32x32xf32>
    %270 = vector.extract_strided_slice %267 {offsets = [0, 64], sizes = [32, 32], strides = [1, 1]} : vector<32x96xf32> to vector<32x32xf32>
    %c0_76 = arith.constant 0 : index
    %c0_77 = arith.constant 0 : index
    %271 = vector.load %arg9[%c0_76, %c0_77] : memref<1x96xf32, #tpu.memory_space<vmem>>, vector<1x96xf32>
    %272 = vector.extract_strided_slice %271 {offsets = [0, 0], sizes = [1, 32], strides = [1, 1]} : vector<1x96xf32> to vector<1x32xf32>
    %273 = vector.extract_strided_slice %271 {offsets = [0, 32], sizes = [1, 32], strides = [1, 1]} : vector<1x96xf32> to vector<1x32xf32>
    %274 = vector.extract_strided_slice %271 {offsets = [0, 64], sizes = [1, 32], strides = [1, 1]} : vector<1x96xf32> to vector<1x32xf32>
    %cst_78 = arith.constant 0.000000e+00 : f32
    %275 = vector.broadcast %cst_78 : f32 to vector<1x32xf32>
    %cst_79 = arith.constant dense<0.000000e+00> : vector<1x32xf32>
    %276 = tpu.matmul %275, %268, %cst_79 {dimension_numbers = #tpu.dot_dimension_numbers<[1], [0], [0], [1], [0, 0, 1, 1], [], []>} : vector<1x32xf32>, vector<32x32xf32>, vector<1x32xf32> -> vector<1x32xf32>
    %277 = arith.addf %276, %272 : vector<1x32xf32>
    %cst_80 = arith.constant dense<0.000000e+00> : vector<1x32xf32>
    %278 = tpu.matmul %275, %269, %cst_80 {dimension_numbers = #tpu.dot_dimension_numbers<[1], [0], [0], [1], [0, 0, 1, 1], [], []>} : vector<1x32xf32>, vector<32x32xf32>, vector<1x32xf32> -> vector<1x32xf32>
    %279 = arith.addf %278, %273 : vector<1x32xf32>
    %cst_81 = arith.constant dense<0.000000e+00> : vector<1x32xf32>
    %280 = tpu.matmul %275, %270, %cst_81 {dimension_numbers = #tpu.dot_dimension_numbers<[1], [0], [0], [1], [0, 0, 1, 1], [], []>} : vector<1x32xf32>, vector<32x32xf32>, vector<1x32xf32> -> vector<1x32xf32>
    %281 = arith.addf %280, %274 : vector<1x32xf32>
    %282 = vector.extract_strided_slice %264 {offsets = [0, 0], sizes = [1, 32], strides = [1, 1]} : vector<4x32xf32> to vector<1x32xf32>
    %283 = arith.addf %282, %277 : vector<1x32xf32>
    %284 = arith.negf %283 : vector<1x32xf32>
    %285 = math.exp %284 : vector<1x32xf32>
    %cst_82 = arith.constant 1.000000e+00 : f32
    %286 = vector.broadcast %cst_82 : f32 to vector<1x32xf32>
    %287 = arith.addf %286, %285 : vector<1x32xf32>
    %288 = arith.divf %286, %287 : vector<1x32xf32>
    %289 = vector.extract_strided_slice %265 {offsets = [0, 0], sizes = [1, 32], strides = [1, 1]} : vector<4x32xf32> to vector<1x32xf32>
    %290 = arith.addf %289, %279 : vector<1x32xf32>
    %291 = arith.negf %290 : vector<1x32xf32>
    %292 = math.exp %291 : vector<1x32xf32>
    %cst_83 = arith.constant 1.000000e+00 : f32
    %293 = vector.broadcast %cst_83 : f32 to vector<1x32xf32>
    %294 = arith.addf %293, %292 : vector<1x32xf32>
    %295 = arith.divf %293, %294 : vector<1x32xf32>
    %296 = vector.extract_strided_slice %266 {offsets = [0, 0], sizes = [1, 32], strides = [1, 1]} : vector<4x32xf32> to vector<1x32xf32>
    %297 = arith.mulf %288, %281 : vector<1x32xf32>
    %298 = arith.addf %296, %297 : vector<1x32xf32>
    %299 = math.tanh %298 : vector<1x32xf32>
    %cst_84 = arith.constant 1.000000e+00 : f32
    %300 = vector.broadcast %cst_84 : f32 to vector<1x32xf32>
    %301 = arith.subf %300, %295 : vector<1x32xf32>
    %302 = arith.mulf %301, %299 : vector<1x32xf32>
    %303 = arith.mulf %295, %275 : vector<1x32xf32>
    %304 = arith.addf %302, %303 : vector<1x32xf32>
    %c0_85 = arith.constant 0 : index
    %c0_86 = arith.constant 0 : index
    %305 = vector.load %arg17[%c0_85, %c0_86] : memref<4x32xf32, #tpu.memory_space<vmem>>, vector<1x32xf32>
    tpu.vector_store %arg17[%c0_85, %c0_86], %304 {strides = array<i32>} : memref<4x32xf32, #tpu.memory_space<vmem>>, vector<1x32xf32>,
    %cst_87 = arith.constant dense<0.000000e+00> : vector<1x32xf32>
    %306 = tpu.matmul %304, %268, %cst_87 {dimension_numbers = #tpu.dot_dimension_numbers<[1], [0], [0], [1], [0, 0, 1, 1], [], []>} : vector<1x32xf32>, vector<32x32xf32>, vector<1x32xf32> -> vector<1x32xf32>
    %307 = arith.addf %306, %272 : vector<1x32xf32>
    %cst_88 = arith.constant dense<0.000000e+00> : vector<1x32xf32>
    %308 = tpu.matmul %304, %269, %cst_88 {dimension_numbers = #tpu.dot_dimension_numbers<[1], [0], [0], [1], [0, 0, 1, 1], [], []>} : vector<1x32xf32>, vector<32x32xf32>, vector<1x32xf32> -> vector<1x32xf32>
    %309 = arith.addf %308, %273 : vector<1x32xf32>
    %cst_89 = arith.constant dense<0.000000e+00> : vector<1x32xf32>
    %310 = tpu.matmul %304, %270, %cst_89 {dimension_numbers = #tpu.dot_dimension_numbers<[1], [0], [0], [1], [0, 0, 1, 1], [], []>} : vector<1x32xf32>, vector<32x32xf32>, vector<1x32xf32> -> vector<1x32xf32>
    %311 = arith.addf %310, %274 : vector<1x32xf32>
    %312 = vector.extract_strided_slice %264 {offsets = [1, 0], sizes = [1, 32], strides = [1, 1]} : vector<4x32xf32> to vector<1x32xf32>
    %313 = arith.addf %312, %307 : vector<1x32xf32>
    %314 = arith.negf %313 : vector<1x32xf32>
    %315 = math.exp %314 : vector<1x32xf32>
    %cst_90 = arith.constant 1.000000e+00 : f32
    %316 = vector.broadcast %cst_90 : f32 to vector<1x32xf32>
    %317 = arith.addf %316, %315 : vector<1x32xf32>
    %318 = arith.divf %316, %317 : vector<1x32xf32>
    %319 = vector.extract_strided_slice %265 {offsets = [1, 0], sizes = [1, 32], strides = [1, 1]} : vector<4x32xf32> to vector<1x32xf32>
    %320 = arith.addf %319, %309 : vector<1x32xf32>
    %321 = arith.negf %320 : vector<1x32xf32>
    %322 = math.exp %321 : vector<1x32xf32>
    %cst_91 = arith.constant 1.000000e+00 : f32
    %323 = vector.broadcast %cst_91 : f32 to vector<1x32xf32>
    %324 = arith.addf %323, %322 : vector<1x32xf32>
    %325 = arith.divf %323, %324 : vector<1x32xf32>
    %326 = vector.extract_strided_slice %266 {offsets = [1, 0], sizes = [1, 32], strides = [1, 1]} : vector<4x32xf32> to vector<1x32xf32>
    %327 = arith.mulf %318, %311 : vector<1x32xf32>
    %328 = arith.addf %326, %327 : vector<1x32xf32>
    %329 = math.tanh %328 : vector<1x32xf32>
    %cst_92 = arith.constant 1.000000e+00 : f32
    %330 = vector.broadcast %cst_92 : f32 to vector<1x32xf32>
    %331 = arith.subf %330, %325 : vector<1x32xf32>
    %332 = arith.mulf %331, %329 : vector<1x32xf32>
    %333 = arith.mulf %325, %304 : vector<1x32xf32>
    %334 = arith.addf %332, %333 : vector<1x32xf32>
    %c1_93 = arith.constant 1 : index
    %c0_94 = arith.constant 0 : index
    %335 = vector.load %arg17[%c1_93, %c0_94] : memref<4x32xf32, #tpu.memory_space<vmem>>, vector<1x32xf32>
    tpu.vector_store %arg17[%c1_93, %c0_94], %334 {strides = array<i32>} : memref<4x32xf32, #tpu.memory_space<vmem>>, vector<1x32xf32>,
    %cst_95 = arith.constant dense<0.000000e+00> : vector<1x32xf32>
    %336 = tpu.matmul %334, %268, %cst_95 {dimension_numbers = #tpu.dot_dimension_numbers<[1], [0], [0], [1], [0, 0, 1, 1], [], []>} : vector<1x32xf32>, vector<32x32xf32>, vector<1x32xf32> -> vector<1x32xf32>
    %337 = arith.addf %336, %272 : vector<1x32xf32>
    %cst_96 = arith.constant dense<0.000000e+00> : vector<1x32xf32>
    %338 = tpu.matmul %334, %269, %cst_96 {dimension_numbers = #tpu.dot_dimension_numbers<[1], [0], [0], [1], [0, 0, 1, 1], [], []>} : vector<1x32xf32>, vector<32x32xf32>, vector<1x32xf32> -> vector<1x32xf32>
    %339 = arith.addf %338, %273 : vector<1x32xf32>
    %cst_97 = arith.constant dense<0.000000e+00> : vector<1x32xf32>
    %340 = tpu.matmul %334, %270, %cst_97 {dimension_numbers = #tpu.dot_dimension_numbers<[1], [0], [0], [1], [0, 0, 1, 1], [], []>} : vector<1x32xf32>, vector<32x32xf32>, vector<1x32xf32> -> vector<1x32xf32>
    %341 = arith.addf %340, %274 : vector<1x32xf32>
    %342 = vector.extract_strided_slice %264 {offsets = [2, 0], sizes = [1, 32], strides = [1, 1]} : vector<4x32xf32> to vector<1x32xf32>
    %343 = arith.addf %342, %337 : vector<1x32xf32>
    %344 = arith.negf %343 : vector<1x32xf32>
    %345 = math.exp %344 : vector<1x32xf32>
    %cst_98 = arith.constant 1.000000e+00 : f32
    %346 = vector.broadcast %cst_98 : f32 to vector<1x32xf32>
    %347 = arith.addf %346, %345 : vector<1x32xf32>
    %348 = arith.divf %346, %347 : vector<1x32xf32>
    %349 = vector.extract_strided_slice %265 {offsets = [2, 0], sizes = [1, 32], strides = [1, 1]} : vector<4x32xf32> to vector<1x32xf32>
    %350 = arith.addf %349, %339 : vector<1x32xf32>
    %351 = arith.negf %350 : vector<1x32xf32>
    %352 = math.exp %351 : vector<1x32xf32>
    %cst_99 = arith.constant 1.000000e+00 : f32
    %353 = vector.broadcast %cst_99 : f32 to vector<1x32xf32>
    %354 = arith.addf %353, %352 : vector<1x32xf32>
    %355 = arith.divf %353, %354 : vector<1x32xf32>
    %356 = vector.extract_strided_slice %266 {offsets = [2, 0], sizes = [1, 32], strides = [1, 1]} : vector<4x32xf32> to vector<1x32xf32>
    %357 = arith.mulf %348, %341 : vector<1x32xf32>
    %358 = arith.addf %356, %357 : vector<1x32xf32>
    %359 = math.tanh %358 : vector<1x32xf32>
    %cst_100 = arith.constant 1.000000e+00 : f32
    %360 = vector.broadcast %cst_100 : f32 to vector<1x32xf32>
    %361 = arith.subf %360, %355 : vector<1x32xf32>
    %362 = arith.mulf %361, %359 : vector<1x32xf32>
    %363 = arith.mulf %355, %334 : vector<1x32xf32>
    %364 = arith.addf %362, %363 : vector<1x32xf32>
    %c2_101 = arith.constant 2 : index
    %c0_102 = arith.constant 0 : index
    %365 = vector.load %arg17[%c2_101, %c0_102] : memref<4x32xf32, #tpu.memory_space<vmem>>, vector<1x32xf32>
    tpu.vector_store %arg17[%c2_101, %c0_102], %364 {strides = array<i32>} : memref<4x32xf32, #tpu.memory_space<vmem>>, vector<1x32xf32>,
    %cst_103 = arith.constant dense<0.000000e+00> : vector<1x32xf32>
    %366 = tpu.matmul %364, %268, %cst_103 {dimension_numbers = #tpu.dot_dimension_numbers<[1], [0], [0], [1], [0, 0, 1, 1], [], []>} : vector<1x32xf32>, vector<32x32xf32>, vector<1x32xf32> -> vector<1x32xf32>
    %367 = arith.addf %366, %272 : vector<1x32xf32>
    %cst_104 = arith.constant dense<0.000000e+00> : vector<1x32xf32>
    %368 = tpu.matmul %364, %269, %cst_104 {dimension_numbers = #tpu.dot_dimension_numbers<[1], [0], [0], [1], [0, 0, 1, 1], [], []>} : vector<1x32xf32>, vector<32x32xf32>, vector<1x32xf32> -> vector<1x32xf32>
    %369 = arith.addf %368, %273 : vector<1x32xf32>
    %cst_105 = arith.constant dense<0.000000e+00> : vector<1x32xf32>
    %370 = tpu.matmul %364, %270, %cst_105 {dimension_numbers = #tpu.dot_dimension_numbers<[1], [0], [0], [1], [0, 0, 1, 1], [], []>} : vector<1x32xf32>, vector<32x32xf32>, vector<1x32xf32> -> vector<1x32xf32>
    %371 = arith.addf %370, %274 : vector<1x32xf32>
    %372 = vector.extract_strided_slice %264 {offsets = [3, 0], sizes = [1, 32], strides = [1, 1]} : vector<4x32xf32> to vector<1x32xf32>
    %373 = arith.addf %372, %367 : vector<1x32xf32>
    %374 = arith.negf %373 : vector<1x32xf32>
    %375 = math.exp %374 : vector<1x32xf32>
    %cst_106 = arith.constant 1.000000e+00 : f32
    %376 = vector.broadcast %cst_106 : f32 to vector<1x32xf32>
    %377 = arith.addf %376, %375 : vector<1x32xf32>
    %378 = arith.divf %376, %377 : vector<1x32xf32>
    %379 = vector.extract_strided_slice %265 {offsets = [3, 0], sizes = [1, 32], strides = [1, 1]} : vector<4x32xf32> to vector<1x32xf32>
    %380 = arith.addf %379, %369 : vector<1x32xf32>
    %381 = arith.negf %380 : vector<1x32xf32>
    %382 = math.exp %381 : vector<1x32xf32>
    %cst_107 = arith.constant 1.000000e+00 : f32
    %383 = vector.broadcast %cst_107 : f32 to vector<1x32xf32>
    %384 = arith.addf %383, %382 : vector<1x32xf32>
    %385 = arith.divf %383, %384 : vector<1x32xf32>
    %386 = vector.extract_strided_slice %266 {offsets = [3, 0], sizes = [1, 32], strides = [1, 1]} : vector<4x32xf32> to vector<1x32xf32>
    %387 = arith.mulf %378, %371 : vector<1x32xf32>
    %388 = arith.addf %386, %387 : vector<1x32xf32>
    %389 = math.tanh %388 : vector<1x32xf32>
    %cst_108 = arith.constant 1.000000e+00 : f32
    %390 = vector.broadcast %cst_108 : f32 to vector<1x32xf32>
    %391 = arith.subf %390, %385 : vector<1x32xf32>
    %392 = arith.mulf %391, %389 : vector<1x32xf32>
    %393 = arith.mulf %385, %364 : vector<1x32xf32>
    %394 = arith.addf %392, %393 : vector<1x32xf32>
    %c3_109 = arith.constant 3 : index
    %c0_110 = arith.constant 0 : index
    %395 = vector.load %arg17[%c3_109, %c0_110] : memref<4x32xf32, #tpu.memory_space<vmem>>, vector<1x32xf32>
    tpu.vector_store %arg17[%c3_109, %c0_110], %394 {strides = array<i32>} : memref<4x32xf32, #tpu.memory_space<vmem>>, vector<1x32xf32>,
    %c0_111 = arith.constant 0 : index
    %c0_112 = arith.constant 0 : index
    %396 = vector.load %arg17[%c0_111, %c0_112] : memref<4x32xf32, #tpu.memory_space<vmem>>, vector<4x32xf32>
    %c0_113 = arith.constant 0 : index
    %c0_114 = arith.constant 0 : index
    %397 = vector.load %arg16[%c0_113, %c0_114] : memref<8x32xf32, #tpu.memory_space<vmem>>, vector<8x32xf32>
    %cst_115 = arith.constant dense<0.000000e+00> : vector<4x8xf32>
    %398 = tpu.matmul %396, %397, %cst_115 {dimension_numbers = #tpu.dot_dimension_numbers<[1], [1], [0], [0], [0, 0, 1, 0], [], []>} : vector<4x32xf32>, vector<8x32xf32>, vector<4x8xf32> -> vector<4x8xf32>
    %cst_116 = arith.constant dense<0xFF800000> : vector<4xf32>
    %399 = vector.multi_reduction <maximumf>, %398, %cst_116 [1] : vector<4x8xf32> to vector<4xf32>
    %400 = vector.shape_cast %399 : vector<4xf32> to vector<4x1xf32>
    %401 = vector.broadcast %400 : vector<4x1xf32> to vector<4x8xf32>
    %402 = arith.subf %398, %401 : vector<4x8xf32>
    %403 = math.exp %402 : vector<4x8xf32>
    %cst_117 = arith.constant dense<0.000000e+00> : vector<4xf32>
    %404 = vector.multi_reduction <add>, %403, %cst_117 [1] : vector<4x8xf32> to vector<4xf32>
    %405 = vector.shape_cast %404 : vector<4xf32> to vector<4x1xf32>
    %406 = tpu.reciprocal %405 {approx = true} : vector<4x1xf32> -> vector<4x1xf32>
    %407 = vector.broadcast %406 : vector<4x1xf32> to vector<4x8xf32>
    %408 = arith.mulf %403, %407 : vector<4x8xf32>
    %cst_118 = arith.constant dense<0.000000e+00> : vector<4x32xf32>
    %409 = tpu.matmul %408, %397, %cst_118 {dimension_numbers = #tpu.dot_dimension_numbers<[1], [0], [0], [1], [0, 0, 1, 1], [], []>} : vector<4x8xf32>, vector<8x32xf32>, vector<4x32xf32> -> vector<4x32xf32>
    %c0_119 = arith.constant 0 : index
    %c0_120 = arith.constant 0 : index
    %410 = vector.load %arg11[%c0_119, %c0_120] : memref<32x128xf32, #tpu.memory_space<vmem>>, vector<32x128xf32>
    %cst_121 = arith.constant dense<0.000000e+00> : vector<4x128xf32>
    %411 = tpu.matmul %396, %410, %cst_121 {dimension_numbers = #tpu.dot_dimension_numbers<[1], [0], [0], [1], [0, 0, 1, 1], [], []>} : vector<4x32xf32>, vector<32x128xf32>, vector<4x128xf32> -> vector<4x128xf32>
    %c0_122 = arith.constant 0 : index
    %c0_123 = arith.constant 0 : index
    %412 = vector.load %arg12[%c0_122, %c0_123] : memref<32x128xf32, #tpu.memory_space<vmem>>, vector<32x128xf32>
    %cst_124 = arith.constant dense<0.000000e+00> : vector<4x128xf32>
    %413 = tpu.matmul %409, %412, %cst_124 {dimension_numbers = #tpu.dot_dimension_numbers<[1], [0], [0], [1], [0, 0, 1, 1], [], []>} : vector<4x32xf32>, vector<32x128xf32>, vector<4x128xf32> -> vector<4x128xf32>
    %414 = arith.addf %411, %413 : vector<4x128xf32>
    %c0_125 = arith.constant 0 : index
    %c0_126 = arith.constant 0 : index
    %415 = vector.load %arg10[%c0_125, %c0_126] : memref<1x8xf32, #tpu.memory_space<vmem>>, vector<1x8xf32>
    %c0_127 = arith.constant 0 : index
    %c0_128 = arith.constant 0 : index
    %416 = vector.load %arg13[%c0_127, %c0_128] : memref<8x128xf32, #tpu.memory_space<vmem>>, vector<8x128xf32>
    %cst_129 = arith.constant dense<0.000000e+00> : vector<1x128xf32>
    %417 = tpu.matmul %415, %416, %cst_129 {dimension_numbers = #tpu.dot_dimension_numbers<[1], [0], [0], [1], [0, 0, 1, 1], [], []>} : vector<1x8xf32>, vector<8x128xf32>, vector<1x128xf32> -> vector<1x128xf32>
    %418 = vector.broadcast %417 : vector<1x128xf32> to vector<4x128xf32>
    %419 = arith.addf %414, %418 : vector<4x128xf32>
    %c0_130 = arith.constant 0 : index
    %c0_131 = arith.constant 0 : index
    %420 = vector.load %arg14[%c0_130, %c0_131] : memref<1x128xf32, #tpu.memory_space<vmem>>, vector<1x128xf32>
    %421 = vector.broadcast %420 : vector<1x128xf32> to vector<4x128xf32>
    %422 = arith.addf %419, %421 : vector<4x128xf32>
    %cst_132 = arith.constant dense<0xFF800000> : vector<4xf32>
    %423 = vector.multi_reduction <maximumf>, %422, %cst_132 [1] : vector<4x128xf32> to vector<4xf32>
    %424 = vector.shape_cast %423 : vector<4xf32> to vector<4x1xf32>
    %425 = vector.broadcast %424 : vector<4x1xf32> to vector<4x128xf32>
    %426 = arith.subf %422, %425 : vector<4x128xf32>
    %427 = math.exp %426 : vector<4x128xf32>
    %cst_133 = arith.constant dense<0.000000e+00> : vector<4xf32>
    %428 = vector.multi_reduction <add>, %427, %cst_133 [1] : vector<4x128xf32> to vector<4xf32>
    %429 = vector.shape_cast %428 : vector<4xf32> to vector<4x1xf32>
    %430 = math.log %429 : vector<4x1xf32>
    %431 = arith.addf %424, %430 : vector<4x1xf32>
    %432 = vector.broadcast %431 : vector<4x1xf32> to vector<4x128xf32>
    %433 = arith.subf %422, %432 : vector<4x128xf32>
    %c0_134 = arith.constant 0 : index
    %c0_135 = arith.constant 0 : index
    %434 = vector.load %arg15[%c0_134, %c0_135] : memref<4x128xf32, #tpu.memory_space<vmem>>, vector<4x128xf32>
    tpu.vector_store %arg15[%c0_134, %c0_135], %433 {strides = array<i32>} : memref<4x128xf32, #tpu.memory_space<vmem>>, vector<4x128xf32>,
    return
  }
}

</mosaic_0001>

<llo_original>
// kernel: traj_pre_local_attn_long_forward.1
$region0: #{traj_pre_local_attn_long_forward.1}
  #allocation0 [shape = 'u32[]', space=smem, size = 0x4, offset = 0x4, fixed_abs, tag = 'smem constant byte address 0x4 - core index']
  #allocation1 [shape = 'u32[144,128]{1,0:T(1,128)}', space=vmem, size = 0x12000, scoped, tag = 'internal scratch']
  #allocation2 [shape = 'f32[8,32]{1,0:T(8,128)}', space=vmem, size = 0x1000, scoped, tag = 'scratch operand']
  #allocation3 [shape = 'f32[4,32]{1,0:T(4,128)}', space=vmem, size = 0x800, scoped, tag = 'scratch operand']
  %s0 = inlined_call_operand.vmem [shape: f32[8,32], index: 0, kind: input, shape index: {}]
  %s1 = inlined_call_operand.vmem [shape: f32[4,32], index: 1, kind: input, shape index: {}]
  %s2 = inlined_call_operand.vmem [shape: f32[32,96], index: 2, kind: input, shape index: {}]
  %s3 = inlined_call_operand.vmem [shape: f32[32,96], index: 3, kind: input, shape index: {}]
  %s4 = inlined_call_operand.vmem [shape: f32[1,96], index: 4, kind: input, shape index: {}]
  %s5 = inlined_call_operand.vmem [shape: f32[1,96], index: 5, kind: input, shape index: {}]
  %s6 = inlined_call_operand.vmem [shape: f32[32,96], index: 6, kind: input, shape index: {}]
  %s7 = inlined_call_operand.vmem [shape: f32[32,96], index: 7, kind: input, shape index: {}]
  %s8 = inlined_call_operand.vmem [shape: f32[1,96], index: 8, kind: input, shape index: {}]
  %s9 = inlined_call_operand.vmem [shape: f32[1,96], index: 9, kind: input, shape index: {}]
  %s10 = inlined_call_operand.vmem [shape: f32[1,8], index: 10, kind: input, shape index: {}]
  %s11 = inlined_call_operand.vmem [shape: f32[32,128], index: 11, kind: input, shape index: {}]
  %s12 = inlined_call_operand.vmem [shape: f32[32,128], index: 12, kind: input, shape index: {}]
  %s13 = inlined_call_operand.vmem [shape: f32[8,128], index: 13, kind: input, shape index: {}]
  %s14 = inlined_call_operand.vmem [shape: f32[1,128], index: 14, kind: input, shape index: {}]
  %s15 = inlined_call_operand.hbm [shape: f32[4,128], index: 15, kind: output, shape index: {}]
  %s16 = sld [smem:[#allocation0]]
  $region70: #{traj_pre_local_attn_long_forward.1} parent=0
    _
  %s18 = ssub.s32 1, %s16
  %s19 = scalar_select 0, %s18, %s16
  $region1: #{traj_pre_local_attn_long_forward.1} parent=0
    #allocation4 [shape = 'u8[2048]{0}', space=vmem, size = 0x800, scoped, tag = 'output window, operand 0, single buffered']
    #allocation5 [shape = 's32[1]{0}', space=sflag, size = 0x4, scoped, tag = 'scoped memory for traj_pre_local_attn_long_forward.1']
    %20 = vsyncpa [#allocation5], 0
    // Predicated region
    $region2: #{traj_pre_local_attn_long_forward.1} parent=1 // pred_check
      _
    $region3: #{traj_pre_local_attn_long_forward.1} parent=1 // pred_check_branch
      %22 = sbr.rel (0) target = $region5
    $region4: #{traj_pre_local_attn_long_forward.1} parent=1 // pred_region
      _
    $region5: #{traj_pre_local_attn_long_forward.1} parent=1 // pred_fallthru
      _
    // Predicated region
    $region6: #{traj_pre_local_attn_long_forward.1} parent=1 // pred_check
      _
    $region7: #{traj_pre_local_attn_long_forward.1} parent=1 // pred_check_branch
      %24 = sbr.rel (0) target = $region9
    $region8: #{traj_pre_local_attn_long_forward.1} parent=1 // pred_region
      _
    $region9: #{traj_pre_local_attn_long_forward.1} parent=1 // pred_fallthru
      _
    // Predicated region
    $region10: #{traj_pre_local_attn_long_forward.1} parent=1 // pred_check
      _
    $region11: #{traj_pre_local_attn_long_forward.1} parent=1 // pred_check_branch
      %26 = sbr.rel (0) target = $region13
    $region12: #{traj_pre_local_attn_long_forward.1} parent=1 // pred_region
      _
    $region13: #{traj_pre_local_attn_long_forward.1} parent=1 // pred_fallthru
      _
    // Predicated region
    $region14: #{traj_pre_local_attn_long_forward.1} parent=1 // pred_check
      _
    $region15: #{traj_pre_local_attn_long_forward.1} parent=1 // pred_check_branch
      %28 = sbr.rel (0) target = $region17
    $region16: #{traj_pre_local_attn_long_forward.1} parent=1 // pred_region
      _
    $region17: #{traj_pre_local_attn_long_forward.1} parent=1 // pred_fallthru
      _
    // Predicated region
    $region18: #{traj_pre_local_attn_long_forward.1} parent=1 // pred_check
      _
    $region19: #{traj_pre_local_attn_long_forward.1} parent=1 // pred_check_branch
      %30 = sbr.rel (0) target = $region21
    $region20: #{traj_pre_local_attn_long_forward.1} parent=1 // pred_region
      _
    $region21: #{traj_pre_local_attn_long_forward.1} parent=1 // pred_fallthru
      _
    // Predicated region
    $region22: #{traj_pre_local_attn_long_forward.1} parent=1 // pred_check
      _
    $region23: #{traj_pre_local_attn_long_forward.1} parent=1 // pred_check_branch
      %32 = sbr.rel (0) target = $region25
    $region24: #{traj_pre_local_attn_long_forward.1} parent=1 // pred_region
      _
    $region25: #{traj_pre_local_attn_long_forward.1} parent=1 // pred_fallthru
      _
    // Predicated region
    $region26: #{traj_pre_local_attn_long_forward.1} parent=1 // pred_check
      _
    $region27: #{traj_pre_local_attn_long_forward.1} parent=1 // pred_check_branch
      %34 = sbr.rel (0) target = $region29
    $region28: #{traj_pre_local_attn_long_forward.1} parent=1 // pred_region
      _
    $region29: #{traj_pre_local_attn_long_forward.1} parent=1 // pred_fallthru
      _
    // Predicated region
    $region30: #{traj_pre_local_attn_long_forward.1} parent=1 // pred_check
      _
    $region31: #{traj_pre_local_attn_long_forward.1} parent=1 // pred_check_branch
      %36 = sbr.rel (0) target = $region33
    $region32: #{traj_pre_local_attn_long_forward.1} parent=1 // pred_region
      _
    $region33: #{traj_pre_local_attn_long_forward.1} parent=1 // pred_fallthru
      _
    // Predicated region
    $region34: #{traj_pre_local_attn_long_forward.1} parent=1 // pred_check
      _
    $region35: #{traj_pre_local_attn_long_forward.1} parent=1 // pred_check_branch
      %38 = sbr.rel (0) target = $region37
    $region36: #{traj_pre_local_attn_long_forward.1} parent=1 // pred_region
      _
    $region37: #{traj_pre_local_attn_long_forward.1} parent=1 // pred_fallthru
      _
    // Predicated region
    $region38: #{traj_pre_local_attn_long_forward.1} parent=1 // pred_check
      _
    $region39: #{traj_pre_local_attn_long_forward.1} parent=1 // pred_check_branch
      %40 = sbr.rel (0) target = $region41
    $region40: #{traj_pre_local_attn_long_forward.1} parent=1 // pred_region
      _
    $region41: #{traj_pre_local_attn_long_forward.1} parent=1 // pred_fallthru
      _
    // Predicated region
    $region42: #{traj_pre_local_attn_long_forward.1} parent=1 // pred_check
      _
    $region43: #{traj_pre_local_attn_long_forward.1} parent=1 // pred_check_branch
      %42 = sbr.rel (0) target = $region45
    $region44: #{traj_pre_local_attn_long_forward.1} parent=1 // pred_region
      _
    $region45: #{traj_pre_local_attn_long_forward.1} parent=1 // pred_fallthru
      _
    // Predicated region
    $region46: #{traj_pre_local_attn_long_forward.1} parent=1 // pred_check
      _
    $region47: #{traj_pre_local_attn_long_forward.1} parent=1 // pred_check_branch
      %44 = sbr.rel (0) target = $region49
    $region48: #{traj_pre_local_attn_long_forward.1} parent=1 // pred_region
      _
    $region49: #{traj_pre_local_attn_long_forward.1} parent=1 // pred_fallthru
      _
    // Predicated region
    $region50: #{traj_pre_local_attn_long_forward.1} parent=1 // pred_check
      _
    $region51: #{traj_pre_local_attn_long_forward.1} parent=1 // pred_check_branch
      %46 = sbr.rel (0) target = $region53
    $region52: #{traj_pre_local_attn_long_forward.1} parent=1 // pred_region
      _
    $region53: #{traj_pre_local_attn_long_forward.1} parent=1 // pred_fallthru
      _
    // Predicated region
    $region54: #{traj_pre_local_attn_long_forward.1} parent=1 // pred_check
      _
    $region55: #{traj_pre_local_attn_long_forward.1} parent=1 // pred_check_branch
      %48 = sbr.rel (0) target = $region57
    $region56: #{traj_pre_local_attn_long_forward.1} parent=1 // pred_region
      _
    $region57: #{traj_pre_local_attn_long_forward.1} parent=1 // pred_fallthru
      _
    // Predicated region
    $region58: #{traj_pre_local_attn_long_forward.1} parent=1 // pred_check
      _
    $region59: #{traj_pre_local_attn_long_forward.1} parent=1 // pred_check_branch
      %50 = sbr.rel (0) target = $region61
    $region60: #{traj_pre_local_attn_long_forward.1} parent=1 // pred_region
      _
    $region61: #{traj_pre_local_attn_long_forward.1} parent=1 // pred_fallthru
      _
    %v51 = vld [vmem:[%s0] sm:$0xff]
    %v52 = vld [vmem:[%s2] sm:$0xff]
    %v53 = vld [vmem:[%s2 + $0x8] sm:$0xff]
    %v54 = vld [vmem:[%s2 + $0x10] sm:$0xff]
    %v55 = vld [vmem:[%s2 + $0x18] sm:$0xff]
    %v56 = vld [vmem:[%s4] sm:$0x1]
    %v58 = vlaneseq
    %v59 = vshrl.u32 %v58, 7
    %v60 = vsub.s32 0, %v59
    %v61 = vrot.slane %v56, %v60
    %vm63 = vcmask 261120
    %v65 = vsel %vm63, %v51, 0
    %67 = vmatprep.subr.mxu0 0.0
    %68 = vmatpush1.msra.mxu0 %v52
    %69 = vmatprep.subr.mxu0 0.0
    %70 = vmatpush1.msra.mxu0 %v53
    %71 = vmatprep.subr.mxu0 0.0
    %72 = vmatpush1.msra.mxu0 %v54
    %73 = vmatprep.subr.mxu0 0.0
    %74 = vmatpush1.msra.mxu0 %v55
    %75 = vmatprep.subr.mxu0 0.0
    %76 = vmatpush1.msra.mxu0 0.0
    %77 = vmatprep.subr.mxu0 0.0
    %78 = vmatpush1.msra.mxu0 0.0
    %79 = vmatprep.subr.mxu0 0.0
    %80 = vmatpush1.msra.mxu0 0.0
    %81 = vmatprep.subr.mxu0 0.0
    %82 = vmatpush1.msra.mxu0 0.0
    %83 = vmatprep.subr.mxu0 0.0
    %84 = vmatpush1.msra.mxu0 0.0
    %85 = vmatprep.subr.mxu0 0.0
    %86 = vmatpush1.msra.mxu0 0.0
    %87 = vmatprep.subr.mxu0 0.0
    %88 = vmatpush1.msra.mxu0 0.0
    %89 = vmatprep.subr.mxu0 0.0
    %90 = vmatpush1.msra.mxu0 0.0
    %91 = vmatprep.subr.mxu0 0.0
    %92 = vmatpush1.msra.mxu0 0.0
    %93 = vmatprep.subr.mxu0 0.0
    %94 = vmatpush1.msra.mxu0 0.0
    %95 = vmatprep.subr.mxu0 0.0
    %96 = vmatpush1.msra.mxu0 0.0
    %97 = vmatprep.subr.mxu0 0.0
    %98 = vmatpush1.msra.mxu0 0.0
    %99 = vmatprep.subr.mxu0 0.0
    %100 = vmatpush1.msra.mxu0 0.0
    %101 = vmatprep.subr.mxu0 0.0
    %102 = vmatpush1.msra.mxu0 0.0
    %103 = vmatprep.subr.mxu0 0.0
    %104 = vmatpush1.msra.mxu0 0.0
    %105 = vmatprep.subr.mxu0 0.0
    %106 = vmatpush1.msra.mxu0 0.0
    %107 = vmatprep.subr.mxu0 0.0
    %108 = vmatpush1.msra.mxu0 0.0
    %109 = vmatprep.subr.mxu0 0.0
    %110 = vmatpush1.msra.mxu0 0.0
    %111 = vmatprep.subr.mxu0 0.0
    %112 = vmatpush1.msra.mxu0 0.0
    %113 = vmatprep.subr.mxu0 0.0
    %114 = vmatpush1.msra.mxu0 0.0
    %115 = vmatprep.subr.mxu0 0.0
    %116 = vmatpush1.msra.mxu0 0.0
    %117 = vmatprep.subr.mxu0 0.0
    %118 = vmatpush1.msra.mxu0 0.0
    %119 = vmatprep.subr.mxu0 0.0
    %120 = vmatpush1.msra.mxu0 0.0
    %121 = vmatprep.subr.mxu0 0.0
    %122 = vmatpush1.msra.mxu0 0.0
    %123 = vmatprep.subr.mxu0 0.0
    %124 = vmatpush1.msra.mxu0 0.0
    %125 = vmatprep.subr.mxu0 0.0
    %126 = vmatpush1.msra.mxu0 0.0
    %127 = vmatprep.subr.mxu0 0.0
    %128 = vmatpush1.msra.mxu0 0.0
    %129 = vmatprep.subr.mxu0 0.0
    %130 = vmatpush1.msra.mxu0 0.0
    %131 = vmatprep.mubr.f32.mxu0 0.0
    %132 = vmatmul.mubr.f32.gmra.mrb[0].mxu0 %v65
    %v133 = vpop.f32.mrb[0].mxu0
    %v134 = vadd.f32 %v61, %v133
    %v135 = vpop.f32.mrb[0].mxu0
    %136 = vdwg.mxu0
    %v137 = vld [vmem:[%s3] sm:$0xff]
    %v138 = vld [vmem:[%s3 + $0x8] sm:$0xff]
    %v139 = vld [vmem:[%s3 + $0x10] sm:$0xff]
    %v140 = vld [vmem:[%s3 + $0x18] sm:$0xff]
    %v141 = vld [vmem:[%s5] sm:$0x1]
    %v143 = vsel %vm63, 0.0, 0
    %145 = vmatprep.subr.mxu0 0.0
    %146 = vmatpush1.msra.mxu0 %v137
    %147 = vmatprep.subr.mxu0 0.0
    %148 = vmatpush1.msra.mxu0 %v138
    %149 = vmatprep.subr.mxu0 0.0
    %150 = vmatpush1.msra.mxu0 %v139
    %151 = vmatprep.subr.mxu0 0.0
    %152 = vmatpush1.msra.mxu0 %v140
    %153 = vmatprep.subr.mxu0 0.0
    %154 = vmatpush1.msra.mxu0 0.0
    %155 = vmatprep.subr.mxu0 0.0
    %156 = vmatpush1.msra.mxu0 0.0
    %157 = vmatprep.subr.mxu0 0.0
    %158 = vmatpush1.msra.mxu0 0.0
    %159 = vmatprep.subr.mxu0 0.0
    %160 = vmatpush1.msra.mxu0 0.0
    %161 = vmatprep.subr.mxu0 0.0
    %162 = vmatpush1.msra.mxu0 0.0
    %163 = vmatprep.subr.mxu0 0.0
    %164 = vmatpush1.msra.mxu0 0.0
    %165 = vmatprep.subr.mxu0 0.0
    %166 = vmatpush1.msra.mxu0 0.0
    %167 = vmatprep.subr.mxu0 0.0
    %168 = vmatpush1.msra.mxu0 0.0
    %169 = vmatprep.subr.mxu0 0.0
    %170 = vmatpush1.msra.mxu0 0.0
    %171 = vmatprep.subr.mxu0 0.0
    %172 = vmatpush1.msra.mxu0 0.0
    %173 = vmatprep.subr.mxu0 0.0
    %174 = vmatpush1.msra.mxu0 0.0
    %175 = vmatprep.subr.mxu0 0.0
    %176 = vmatpush1.msra.mxu0 0.0
    %177 = vmatprep.subr.mxu0 0.0
    %178 = vmatpush1.msra.mxu0 0.0
    %179 = vmatprep.subr.mxu0 0.0
    %180 = vmatpush1.msra.mxu0 0.0
    %181 = vmatprep.subr.mxu0 0.0
    %182 = vmatpush1.msra.mxu0 0.0
    %183 = vmatprep.subr.mxu0 0.0
    %184 = vmatpush1.msra.mxu0 0.0
    %185 = vmatprep.subr.mxu0 0.0
    %186 = vmatpush1.msra.mxu0 0.0
    %187 = vmatprep.subr.mxu0 0.0
    %188 = vmatpush1.msra.mxu0 0.0
    %189 = vmatprep.subr.mxu0 0.0
    %190 = vmatpush1.msra.mxu0 0.0
    %191 = vmatprep.subr.mxu0 0.0
    %192 = vmatpush1.msra.mxu0 0.0
    %193 = vmatprep.subr.mxu0 0.0
    %194 = vmatpush1.msra.mxu0 0.0
    %195 = vmatprep.subr.mxu0 0.0
    %196 = vmatpush1.msra.mxu0 0.0
    %197 = vmatprep.subr.mxu0 0.0
    %198 = vmatpush1.msra.mxu0 0.0
    %199 = vmatprep.subr.mxu0 0.0
    %200 = vmatpush1.msra.mxu0 0.0
    %201 = vmatprep.subr.mxu0 0.0
    %202 = vmatpush1.msra.mxu0 0.0
    %203 = vmatprep.subr.mxu0 0.0
    %204 = vmatpush1.msra.mxu0 0.0
    %205 = vmatprep.subr.mxu0 0.0
    %206 = vmatpush1.msra.mxu0 0.0
    %207 = vmatprep.subr.mxu0 0.0
    %208 = vmatpush1.msra.mxu0 0.0
    %209 = vmatprep.mubr.f32.mxu0 0.0
    %210 = vmatmul.mubr.f32.gmra.mrb[0].mxu0 %v143
    %v211 = vpop.f32.mrb[0].mxu0
    %v212 = vadd.f32 %v141, %v211
    %v213 = vpop.f32.mrb[0].mxu0
    %214 = vdwg.mxu0
    %219 = vrot.lane.b32.xlu0 %v137, 96
    %v220 = vpop.permute.xlu0 %219
    %221 = vrot.lane.b32.xlu0 %v138, 96
    %v222 = vpop.permute.xlu0 %221
    %223 = vrot.lane.b32.xlu0 %v139, 96
    %v224 = vpop.permute.xlu0 %223
    %225 = vrot.lane.b32.xlu0 %v140, 96
    %v226 = vpop.permute.xlu0 %225
    %v232 = vlaneseq
    %v233 = vshrl.u32 %v232, 7
    %v234 = vsub.s32 0, %v233
    %v235 = vrot.slane %v141, %v234
    %236 = vrot.lane.b32.xlu0 %v235, 96
    %v237 = vpop.permute.xlu0 %236
    %239 = vmatprep.subr.mxu0 0.0
    %240 = vmatpush1.msra.mxu0 %v220
    %241 = vmatprep.subr.mxu0 0.0
    %242 = vmatpush1.msra.mxu0 %v222
    %243 = vmatprep.subr.mxu0 0.0
    %244 = vmatpush1.msra.mxu0 %v224
    %245 = vmatprep.subr.mxu0 0.0
    %246 = vmatpush1.msra.mxu0 %v226
    %247 = vmatprep.subr.mxu0 0.0
    %248 = vmatpush1.msra.mxu0 0.0
    %249 = vmatprep.subr.mxu0 0.0
    %250 = vmatpush1.msra.mxu0 0.0
    %251 = vmatprep.subr.mxu0 0.0
    %252 = vmatpush1.msra.mxu0 0.0
    %253 = vmatprep.subr.mxu0 0.0
    %254 = vmatpush1.msra.mxu0 0.0
    %255 = vmatprep.subr.mxu0 0.0
    %256 = vmatpush1.msra.mxu0 0.0
    %257 = vmatprep.subr.mxu0 0.0
    %258 = vmatpush1.msra.mxu0 0.0
    %259 = vmatprep.subr.mxu0 0.0
    %260 = vmatpush1.msra.mxu0 0.0
    %261 = vmatprep.subr.mxu0 0.0
    %262 = vmatpush1.msra.mxu0 0.0
    %263 = vmatprep.subr.mxu0 0.0
    %264 = vmatpush1.msra.mxu0 0.0
    %265 = vmatprep.subr.mxu0 0.0
    %266 = vmatpush1.msra.mxu0 0.0
    %267 = vmatprep.subr.mxu0 0.0
    %268 = vmatpush1.msra.mxu0 0.0
    %269 = vmatprep.subr.mxu0 0.0
    %270 = vmatpush1.msra.mxu0 0.0
    %271 = vmatprep.subr.mxu0 0.0
    %272 = vmatpush1.msra.mxu0 0.0
    %273 = vmatprep.subr.mxu0 0.0
    %274 = vmatpush1.msra.mxu0 0.0
    %275 = vmatprep.subr.mxu0 0.0
    %276 = vmatpush1.msra.mxu0 0.0
    %277 = vmatprep.subr.mxu0 0.0
    %278 = vmatpush1.msra.mxu0 0.0
    %279 = vmatprep.subr.mxu0 0.0
    %280 = vmatpush1.msra.mxu0 0.0
    %281 = vmatprep.subr.mxu0 0.0
    %282 = vmatpush1.msra.mxu0 0.0
    %283 = vmatprep.subr.mxu0 0.0
    %284 = vmatpush1.msra.mxu0 0.0
    %285 = vmatprep.subr.mxu0 0.0
    %286 = vmatpush1.msra.mxu0 0.0
    %287 = vmatprep.subr.mxu0 0.0
    %288 = vmatpush1.msra.mxu0 0.0
    %289 = vmatprep.subr.mxu0 0.0
    %290 = vmatpush1.msra.mxu0 0.0
    %291 = vmatprep.subr.mxu0 0.0
    %292 = vmatpush1.msra.mxu0 0.0
    %293 = vmatprep.subr.mxu0 0.0
    %294 = vmatpush1.msra.mxu0 0.0
    %295 = vmatprep.subr.mxu0 0.0
    %296 = vmatpush1.msra.mxu0 0.0
    %297 = vmatprep.subr.mxu0 0.0
    %298 = vmatpush1.msra.mxu0 0.0
    %299 = vmatprep.subr.mxu0 0.0
    %300 = vmatpush1.msra.mxu0 0.0
    %301 = vmatprep.subr.mxu0 0.0
    %302 = vmatpush1.msra.mxu0 0.0
    %303 = vmatprep.mubr.f32.mxu0 0.0
    %304 = vmatmul.mubr.f32.gmra.mrb[0].mxu0 %v143
    %v305 = vpop.f32.mrb[0].mxu0
    %v306 = vadd.f32 %v237, %v305
    %v307 = vpop.f32.mrb[0].mxu0
    %308 = vdwg.mxu0
    %309 = vrot.lane.b32.xlu0 %v137, 64
    %v310 = vpop.permute.xlu0 %309
    %311 = vrot.lane.b32.xlu0 %v138, 64
    %v312 = vpop.permute.xlu0 %311
    %313 = vrot.lane.b32.xlu0 %v139, 64
    %v314 = vpop.permute.xlu0 %313
    %315 = vrot.lane.b32.xlu0 %v140, 64
    %v316 = vpop.permute.xlu0 %315
    %321 = vrot.lane.b32.xlu0 %v235, 64
    %v322 = vpop.permute.xlu0 %321
    %324 = vmatprep.subr.mxu0 0.0
    %325 = vmatpush1.msra.mxu0 %v310
    %326 = vmatprep.subr.mxu0 0.0
    %327 = vmatpush1.msra.mxu0 %v312
    %328 = vmatprep.subr.mxu0 0.0
    %329 = vmatpush1.msra.mxu0 %v314
    %330 = vmatprep.subr.mxu0 0.0
    %331 = vmatpush1.msra.mxu0 %v316
    %332 = vmatprep.subr.mxu0 0.0
    %333 = vmatpush1.msra.mxu0 0.0
    %334 = vmatprep.subr.mxu0 0.0
    %335 = vmatpush1.msra.mxu0 0.0
    %336 = vmatprep.subr.mxu0 0.0
    %337 = vmatpush1.msra.mxu0 0.0
    %338 = vmatprep.subr.mxu0 0.0
    %339 = vmatpush1.msra.mxu0 0.0
    %340 = vmatprep.subr.mxu0 0.0
    %341 = vmatpush1.msra.mxu0 0.0
    %342 = vmatprep.subr.mxu0 0.0
    %343 = vmatpush1.msra.mxu0 0.0
    %344 = vmatprep.subr.mxu0 0.0
    %345 = vmatpush1.msra.mxu0 0.0
    %346 = vmatprep.subr.mxu0 0.0
    %347 = vmatpush1.msra.mxu0 0.0
    %348 = vmatprep.subr.mxu0 0.0
    %349 = vmatpush1.msra.mxu0 0.0
    %350 = vmatprep.subr.mxu0 0.0
    %351 = vmatpush1.msra.mxu0 0.0
    %352 = vmatprep.subr.mxu0 0.0
    %353 = vmatpush1.msra.mxu0 0.0
    %354 = vmatprep.subr.mxu0 0.0
    %355 = vmatpush1.msra.mxu0 0.0
    %356 = vmatprep.subr.mxu0 0.0
    %357 = vmatpush1.msra.mxu0 0.0
    %358 = vmatprep.subr.mxu0 0.0
    %359 = vmatpush1.msra.mxu0 0.0
    %360 = vmatprep.subr.mxu0 0.0
    %361 = vmatpush1.msra.mxu0 0.0
    %362 = vmatprep.subr.mxu0 0.0
    %363 = vmatpush1.msra.mxu0 0.0
    %364 = vmatprep.subr.mxu0 0.0
    %365 = vmatpush1.msra.mxu0 0.0
    %366 = vmatprep.subr.mxu0 0.0
    %367 = vmatpush1.msra.mxu0 0.0
    %368 = vmatprep.subr.mxu0 0.0
    %369 = vmatpush1.msra.mxu0 0.0
    %370 = vmatprep.subr.mxu0 0.0
    %371 = vmatpush1.msra.mxu0 0.0
    %372 = vmatprep.subr.mxu0 0.0
    %373 = vmatpush1.msra.mxu0 0.0
    %374 = vmatprep.subr.mxu0 0.0
    %375 = vmatpush1.msra.mxu0 0.0
    %376 = vmatprep.subr.mxu0 0.0
    %377 = vmatpush1.msra.mxu0 0.0
    %378 = vmatprep.subr.mxu0 0.0
    %379 = vmatpush1.msra.mxu0 0.0
    %380 = vmatprep.subr.mxu0 0.0
    %381 = vmatpush1.msra.mxu0 0.0
    %382 = vmatprep.subr.mxu0 0.0
    %383 = vmatpush1.msra.mxu0 0.0
    %384 = vmatprep.subr.mxu0 0.0
    %385 = vmatpush1.msra.mxu0 0.0
    %386 = vmatprep.subr.mxu0 0.0
    %387 = vmatpush1.msra.mxu0 0.0
    %388 = vmatprep.mubr.f32.mxu0 0.0
    %389 = vmatmul.mubr.f32.gmra.mrb[0].mxu0 %v143
    %v390 = vpop.f32.mrb[0].mxu0
    %v391 = vadd.f32 %v322, %v390
    %v392 = vpop.f32.mrb[0].mxu0
    %393 = vdwg.mxu0
    %v394 = vadd.f32 %v134, %v212
    %v395 = vxor.u32 %v394, 2147483648
    %v396 = vmul.f32 %v395, 1.442695
    %v397 = vpow.pop %v396
    %v398 = vadd.f32 %v397, 1.0
    %v399 = vrcp.pop %v398
    %v400 = vmul.f32 1.0, %v399
    %402 = vrot.lane.b32.xlu0 %v306, 32
    %v403 = vpop.permute.xlu0 %402
    %v405 = vadd.f32 %v134, %v403
    %v406 = vxor.u32 %v405, 2147483648
    %v407 = vmul.f32 %v406, 1.442695
    %v408 = vpow.pop %v407
    %v409 = vadd.f32 %v408, 1.0
    %v410 = vrcp.pop %v409
    %v411 = vmul.f32 1.0, %v410
    %v412 = vmul.f32 %v400, %v391
    %414 = vrot.lane.b32.xlu0 %v412, 64
    %v415 = vpop.permute.xlu0 %414
    %v417 = vadd.f32 %v134, %v415
    %v418 = vtanh.pop %v417
    %v419 = vsub.f32 1.0, %v411
    %421 = vrot.lane.b32.xlu0 %v418, 96
    %v422 = vpop.permute.xlu0 %421
    %v424 = vmul.f32 %v419, %v422
    %v425 = vmul.f32 %v411, 0.0
    %v426 = vadd.f32 %v424, %v425
    %428 = vrot.lane.b32.xlu0 %v426, 96
    %v429 = vpop.permute.xlu0 %428
    %vm431 = vcmask 253952
    %432 = vst.msk [vmem:[#allocation2] sm:$0x1] %vm431, %v429
    %v433 = vsel %vm63, %v429, 0
    %435 = vmatprep.subr.mxu0 0.0
    %436 = vmatpush1.msra.mxu0 %v137
    %437 = vmatprep.subr.mxu0 0.0
    %438 = vmatpush1.msra.mxu0 %v138
    %439 = vmatprep.subr.mxu0 0.0
    %440 = vmatpush1.msra.mxu0 %v139
    %441 = vmatprep.subr.mxu0 0.0
    %442 = vmatpush1.msra.mxu0 %v140
    %443 = vmatprep.subr.mxu0 0.0
    %444 = vmatpush1.msra.mxu0 0.0
    %445 = vmatprep.subr.mxu0 0.0
    %446 = vmatpush1.msra.mxu0 0.0
    %447 = vmatprep.subr.mxu0 0.0
    %448 = vmatpush1.msra.mxu0 0.0
    %449 = vmatprep.subr.mxu0 0.0
    %450 = vmatpush1.msra.mxu0 0.0
    %451 = vmatprep.subr.mxu0 0.0
    %452 = vmatpush1.msra.mxu0 0.0
    %453 = vmatprep.subr.mxu0 0.0
    %454 = vmatpush1.msra.mxu0 0.0
    %455 = vmatprep.subr.mxu0 0.0
    %456 = vmatpush1.msra.mxu0 0.0
    %457 = vmatprep.subr.mxu0 0.0
    %458 = vmatpush1.msra.mxu0 0.0
    %459 = vmatprep.subr.mxu0 0.0
    %460 = vmatpush1.msra.mxu0 0.0
    %461 = vmatprep.subr.mxu0 0.0
    %462 = vmatpush1.msra.mxu0 0.0
    %463 = vmatprep.subr.mxu0 0.0
    %464 = vmatpush1.msra.mxu0 0.0
    %465 = vmatprep.subr.mxu0 0.0
    %466 = vmatpush1.msra.mxu0 0.0
    %467 = vmatprep.subr.mxu0 0.0
    %468 = vmatpush1.msra.mxu0 0.0
    %469 = vmatprep.subr.mxu0 0.0
    %470 = vmatpush1.msra.mxu0 0.0
    %471 = vmatprep.subr.mxu0 0.0
    %472 = vmatpush1.msra.mxu0 0.0
    %473 = vmatprep.subr.mxu0 0.0
    %474 = vmatpush1.msra.mxu0 0.0
    %475 = vmatprep.subr.mxu0 0.0
    %476 = vmatpush1.msra.mxu0 0.0
    %477 = vmatprep.subr.mxu0 0.0
    %478 = vmatpush1.msra.mxu0 0.0
    %479 = vmatprep.subr.mxu0 0.0
    %480 = vmatpush1.msra.mxu0 0.0
    %481 = vmatprep.subr.mxu0 0.0
    %482 = vmatpush1.msra.mxu0 0.0
    %483 = vmatprep.subr.mxu0 0.0
    %484 = vmatpush1.msra.mxu0 0.0
    %485 = vmatprep.subr.mxu0 0.0
    %486 = vmatpush1.msra.mxu0 0.0
    %487 = vmatprep.subr.mxu0 0.0
    %488 = vmatpush1.msra.mxu0 0.0
    %489 = vmatprep.subr.mxu0 0.0
    %490 = vmatpush1.msra.mxu0 0.0
    %491 = vmatprep.subr.mxu0 0.0
    %492 = vmatpush1.msra.mxu0 0.0
    %493 = vmatprep.subr.mxu0 0.0
    %494 = vmatpush1.msra.mxu0 0.0
    %495 = vmatprep.subr.mxu0 0.0
    %496 = vmatpush1.msra.mxu0 0.0
    %497 = vmatprep.subr.mxu0 0.0
    %498 = vmatpush1.msra.mxu0 0.0
    %499 = vmatprep.mubr.f32.mxu0 0.0
    %500 = vmatmul.mubr.f32.gmra.mrb[0].mxu0 %v433
    %v501 = vpop.f32.mrb[0].mxu0
    %v502 = vadd.f32 %v141, %v501
    %v503 = vpop.f32.mrb[0].mxu0
    %504 = vdwg.mxu0
    %505 = vmatprep.subr.mxu0 0.0
    %506 = vmatpush1.msra.mxu0 %v220
    %507 = vmatprep.subr.mxu0 0.0
    %508 = vmatpush1.msra.mxu0 %v222
    %509 = vmatprep.subr.mxu0 0.0
    %510 = vmatpush1.msra.mxu0 %v224
    %511 = vmatprep.subr.mxu0 0.0
    %512 = vmatpush1.msra.mxu0 %v226
    %513 = vmatprep.subr.mxu0 0.0
    %514 = vmatpush1.msra.mxu0 0.0
    %515 = vmatprep.subr.mxu0 0.0
    %516 = vmatpush1.msra.mxu0 0.0
    %517 = vmatprep.subr.mxu0 0.0
    %518 = vmatpush1.msra.mxu0 0.0
    %519 = vmatprep.subr.mxu0 0.0
    %520 = vmatpush1.msra.mxu0 0.0
    %521 = vmatprep.subr.mxu0 0.0
    %522 = vmatpush1.msra.mxu0 0.0
    %523 = vmatprep.subr.mxu0 0.0
    %524 = vmatpush1.msra.mxu0 0.0
    %525 = vmatprep.subr.mxu0 0.0
    %526 = vmatpush1.msra.mxu0 0.0
    %527 = vmatprep.subr.mxu0 0.0
    %528 = vmatpush1.msra.mxu0 0.0
    %529 = vmatprep.subr.mxu0 0.0
    %530 = vmatpush1.msra.mxu0 0.0
    %531 = vmatprep.subr.mxu0 0.0
    %532 = vmatpush1.msra.mxu0 0.0
    %533 = vmatprep.subr.mxu0 0.0
    %534 = vmatpush1.msra.mxu0 0.0
    %535 = vmatprep.subr.mxu0 0.0
    %536 = vmatpush1.msra.mxu0 0.0
    %537 = vmatprep.subr.mxu0 0.0
    %538 = vmatpush1.msra.mxu0 0.0
    %539 = vmatprep.subr.mxu0 0.0
    %540 = vmatpush1.msra.mxu0 0.0
    %541 = vmatprep.subr.mxu0 0.0
    %542 = vmatpush1.msra.mxu0 0.0
    %543 = vmatprep.subr.mxu0 0.0
    %544 = vmatpush1.msra.mxu0 0.0
    %545 = vmatprep.subr.mxu0 0.0
    %546 = vmatpush1.msra.mxu0 0.0
    %547 = vmatprep.subr.mxu0 0.0
    %548 = vmatpush1.msra.mxu0 0.0
    %549 = vmatprep.subr.mxu0 0.0
    %550 = vmatpush1.msra.mxu0 0.0
    %551 = vmatprep.subr.mxu0 0.0
    %552 = vmatpush1.msra.mxu0 0.0
    %553 = vmatprep.subr.mxu0 0.0
    %554 = vmatpush1.msra.mxu0 0.0
    %555 = vmatprep.subr.mxu0 0.0
    %556 = vmatpush1.msra.mxu0 0.0
    %557 = vmatprep.subr.mxu0 0.0
    %558 = vmatpush1.msra.mxu0 0.0
    %559 = vmatprep.subr.mxu0 0.0
    %560 = vmatpush1.msra.mxu0 0.0
    %561 = vmatprep.subr.mxu0 0.0
    %562 = vmatpush1.msra.mxu0 0.0
    %563 = vmatprep.subr.mxu0 0.0
    %564 = vmatpush1.msra.mxu0 0.0
    %565 = vmatprep.subr.mxu0 0.0
    %566 = vmatpush1.msra.mxu0 0.0
    %567 = vmatprep.subr.mxu0 0.0
    %568 = vmatpush1.msra.mxu0 0.0
    %569 = vmatprep.mubr.f32.mxu0 0.0
    %570 = vmatmul.mubr.f32.gmra.mrb[0].mxu0 %v433
    %v571 = vpop.f32.mrb[0].mxu0
    %v572 = vadd.f32 %v237, %v571
    %v573 = vpop.f32.mrb[0].mxu0
    %574 = vdwg.mxu0
    %575 = vmatprep.subr.mxu0 0.0
    %576 = vmatpush1.msra.mxu0 %v310
    %577 = vmatprep.subr.mxu0 0.0
    %578 = vmatpush1.msra.mxu0 %v312
    %579 = vmatprep.subr.mxu0 0.0
    %580 = vmatpush1.msra.mxu0 %v314
    %581 = vmatprep.subr.mxu0 0.0
    %582 = vmatpush1.msra.mxu0 %v316
    %583 = vmatprep.subr.mxu0 0.0
    %584 = vmatpush1.msra.mxu0 0.0
    %585 = vmatprep.subr.mxu0 0.0
    %586 = vmatpush1.msra.mxu0 0.0
    %587 = vmatprep.subr.mxu0 0.0
    %588 = vmatpush1.msra.mxu0 0.0
    %589 = vmatprep.subr.mxu0 0.0
    %590 = vmatpush1.msra.mxu0 0.0
    %591 = vmatprep.subr.mxu0 0.0
    %592 = vmatpush1.msra.mxu0 0.0
    %593 = vmatprep.subr.mxu0 0.0
    %594 = vmatpush1.msra.mxu0 0.0
    %595 = vmatprep.subr.mxu0 0.0
    %596 = vmatpush1.msra.mxu0 0.0
    %597 = vmatprep.subr.mxu0 0.0
    %598 = vmatpush1.msra.mxu0 0.0
    %599 = vmatprep.subr.mxu0 0.0
    %600 = vmatpush1.msra.mxu0 0.0
    %601 = vmatprep.subr.mxu0 0.0
    %602 = vmatpush1.msra.mxu0 0.0
    %603 = vmatprep.subr.mxu0 0.0
    %604 = vmatpush1.msra.mxu0 0.0
    %605 = vmatprep.subr.mxu0 0.0
    %606 = vmatpush1.msra.mxu0 0.0
    %607 = vmatprep.subr.mxu0 0.0
    %608 = vmatpush1.msra.mxu0 0.0
    %609 = vmatprep.subr.mxu0 0.0
    %610 = vmatpush1.msra.mxu0 0.0
    %611 = vmatprep.subr.mxu0 0.0
    %612 = vmatpush1.msra.mxu0 0.0
    %613 = vmatprep.subr.mxu0 0.0
    %614 = vmatpush1.msra.mxu0 0.0
    %615 = vmatprep.subr.mxu0 0.0
    %616 = vmatpush1.msra.mxu0 0.0
    %617 = vmatprep.subr.mxu0 0.0
    %618 = vmatpush1.msra.mxu0 0.0
    %619 = vmatprep.subr.mxu0 0.0
    %620 = vmatpush1.msra.mxu0 0.0
    %621 = vmatprep.subr.mxu0 0.0
    %622 = vmatpush1.msra.mxu0 0.0
    %623 = vmatprep.subr.mxu0 0.0
    %624 = vmatpush1.msra.mxu0 0.0
    %625 = vmatprep.subr.mxu0 0.0
    %626 = vmatpush1.msra.mxu0 0.0
    %627 = vmatprep.subr.mxu0 0.0
    %628 = vmatpush1.msra.mxu0 0.0
    %629 = vmatprep.subr.mxu0 0.0
    %630 = vmatpush1.msra.mxu0 0.0
    %631 = vmatprep.subr.mxu0 0.0
    %632 = vmatpush1.msra.mxu0 0.0
    %633 = vmatprep.subr.mxu0 0.0
    %634 = vmatpush1.msra.mxu0 0.0
    %635 = vmatprep.subr.mxu0 0.0
    %636 = vmatpush1.msra.mxu0 0.0
    %637 = vmatprep.subr.mxu0 0.0
    %638 = vmatpush1.msra.mxu0 0.0
    %639 = vmatprep.mubr.f32.mxu0 0.0
    %640 = vmatmul.mubr.f32.gmra.mrb[0].mxu0 %v433
    %v641 = vpop.f32.mrb[0].mxu0
    %v642 = vadd.f32 %v322, %v641
    %v643 = vpop.f32.mrb[0].mxu0
    %644 = vdwg.mxu0
    %v646 = vrot.slane %v502, 7
    %v648 = vadd.f32 %v134, %v646
    %v649 = vxor.u32 %v648, 2147483648
    %v650 = vmul.f32 %v649, 1.442695
    %v651 = vpow.pop %v650
    %v652 = vadd.f32 %v651, 1.0
    %v653 = vrcp.pop %v652
    %v654 = vmul.f32 1.0, %v653
    %v656 = vrot.slane %v572, 7
    %657 = vrot.lane.b32.xlu0 %v656, 32
    %v658 = vpop.permute.xlu0 %657
    %v660 = vadd.f32 %v134, %v658
    %v661 = vxor.u32 %v660, 2147483648
    %v662 = vmul.f32 %v661, 1.442695
    %v663 = vpow.pop %v662
    %v664 = vadd.f32 %v663, 1.0
    %v665 = vrcp.pop %v664
    %v666 = vmul.f32 1.0, %v665
    %v668 = vrot.slane %v642, 7
    %v670 = vmul.f32 %v654, %v668
    %672 = vrot.lane.b32.xlu0 %v670, 64
    %v673 = vpop.permute.xlu0 %672
    %v675 = vadd.f32 %v134, %v673
    %v676 = vtanh.pop %v675
    %v677 = vsub.f32 1.0, %v666
    %679 = vrot.lane.b32.xlu0 %v676, 96
    %v680 = vpop.permute.xlu0 %679
    %v682 = vmul.f32 %v677, %v680
    %v683 = vrot.slane %v426, 7
    %v685 = vmul.f32 %v666, %v683
    %v686 = vadd.f32 %v682, %v685
    %688 = vrot.lane.b32.xlu0 %v686, 96
    %v689 = vpop.permute.xlu0 %688
    %vm691 = vcmask 254977
    %692 = vst.msk [vmem:[#allocation2] sm:$0x2] %vm691, %v689
    %v693 = vrot.slane %v686, 1
    %694 = vrot.lane.b32.xlu0 %v693, 96
    %v695 = vpop.permute.xlu0 %694
    %v696 = vsel %vm63, %v695, 0
    %698 = vmatprep.subr.mxu0 0.0
    %699 = vmatpush1.msra.mxu0 %v137
    %700 = vmatprep.subr.mxu0 0.0
    %701 = vmatpush1.msra.mxu0 %v138
    %702 = vmatprep.subr.mxu0 0.0
    %703 = vmatpush1.msra.mxu0 %v139
    %704 = vmatprep.subr.mxu0 0.0
    %705 = vmatpush1.msra.mxu0 %v140
    %706 = vmatprep.subr.mxu0 0.0
    %707 = vmatpush1.msra.mxu0 0.0
    %708 = vmatprep.subr.mxu0 0.0
    %709 = vmatpush1.msra.mxu0 0.0
    %710 = vmatprep.subr.mxu0 0.0
    %711 = vmatpush1.msra.mxu0 0.0
    %712 = vmatprep.subr.mxu0 0.0
    %713 = vmatpush1.msra.mxu0 0.0
    %714 = vmatprep.subr.mxu0 0.0
    %715 = vmatpush1.msra.mxu0 0.0
    %716 = vmatprep.subr.mxu0 0.0
    %717 = vmatpush1.msra.mxu0 0.0
    %718 = vmatprep.subr.mxu0 0.0
    %719 = vmatpush1.msra.mxu0 0.0
    %720 = vmatprep.subr.mxu0 0.0
    %721 = vmatpush1.msra.mxu0 0.0
    %722 = vmatprep.subr.mxu0 0.0
    %723 = vmatpush1.msra.mxu0 0.0
    %724 = vmatprep.subr.mxu0 0.0
    %725 = vmatpush1.msra.mxu0 0.0
    %726 = vmatprep.subr.mxu0 0.0
    %727 = vmatpush1.msra.mxu0 0.0
    %728 = vmatprep.subr.mxu0 0.0
    %729 = vmatpush1.msra.mxu0 0.0
    %730 = vmatprep.subr.mxu0 0.0
    %731 = vmatpush1.msra.mxu0 0.0
    %732 = vmatprep.subr.mxu0 0.0
    %733 = vmatpush1.msra.mxu0 0.0
    %734 = vmatprep.subr.mxu0 0.0
    %735 = vmatpush1.msra.mxu0 0.0
    %736 = vmatprep.subr.mxu0 0.0
    %737 = vmatpush1.msra.mxu0 0.0
    %738 = vmatprep.subr.mxu0 0.0
    %739 = vmatpush1.msra.mxu0 0.0
    %740 = vmatprep.subr.mxu0 0.0
    %741 = vmatpush1.msra.mxu0 0.0
    %742 = vmatprep.subr.mxu0 0.0
    %743 = vmatpush1.msra.mxu0 0.0
    %744 = vmatprep.subr.mxu0 0.0
    %745 = vmatpush1.msra.mxu0 0.0
    %746 = vmatprep.subr.mxu0 0.0
    %747 = vmatpush1.msra.mxu0 0.0
    %748 = vmatprep.subr.mxu0 0.0
    %749 = vmatpush1.msra.mxu0 0.0
    %750 = vmatprep.subr.mxu0 0.0
    %751 = vmatpush1.msra.mxu0 0.0
    %752 = vmatprep.subr.mxu0 0.0
    %753 = vmatpush1.msra.mxu0 0.0
    %754 = vmatprep.subr.mxu0 0.0
    %755 = vmatpush1.msra.mxu0 0.0
    %756 = vmatprep.subr.mxu0 0.0
    %757 = vmatpush1.msra.mxu0 0.0
    %758 = vmatprep.subr.mxu0 0.0
    %759 = vmatpush1.msra.mxu0 0.0
    %760 = vmatprep.subr.mxu0 0.0
    %761 = vmatpush1.msra.mxu0 0.0
    %762 = vmatprep.mubr.f32.mxu0 0.0
    %763 = vmatmul.mubr.f32.gmra.mrb[0].mxu0 %v696
    %v764 = vpop.f32.mrb[0].mxu0
    %v765 = vadd.f32 %v141, %v764
    %v766 = vpop.f32.mrb[0].mxu0
    %767 = vdwg.mxu0
    %768 = vmatprep.subr.mxu0 0.0
    %769 = vmatpush1.msra.mxu0 %v220
    %770 = vmatprep.subr.mxu0 0.0
    %771 = vmatpush1.msra.mxu0 %v222
    %772 = vmatprep.subr.mxu0 0.0
    %773 = vmatpush1.msra.mxu0 %v224
    %774 = vmatprep.subr.mxu0 0.0
    %775 = vmatpush1.msra.mxu0 %v226
    %776 = vmatprep.subr.mxu0 0.0
    %777 = vmatpush1.msra.mxu0 0.0
    %778 = vmatprep.subr.mxu0 0.0
    %779 = vmatpush1.msra.mxu0 0.0
    %780 = vmatprep.subr.mxu0 0.0
    %781 = vmatpush1.msra.mxu0 0.0
    %782 = vmatprep.subr.mxu0 0.0
    %783 = vmatpush1.msra.mxu0 0.0
    %784 = vmatprep.subr.mxu0 0.0
    %785 = vmatpush1.msra.mxu0 0.0
    %786 = vmatprep.subr.mxu0 0.0
    %787 = vmatpush1.msra.mxu0 0.0
    %788 = vmatprep.subr.mxu0 0.0
    %789 = vmatpush1.msra.mxu0 0.0
    %790 = vmatprep.subr.mxu0 0.0
    %791 = vmatpush1.msra.mxu0 0.0
    %792 = vmatprep.subr.mxu0 0.0
    %793 = vmatpush1.msra.mxu0 0.0
    %794 = vmatprep.subr.mxu0 0.0
    %795 = vmatpush1.msra.mxu0 0.0
    %796 = vmatprep.subr.mxu0 0.0
    %797 = vmatpush1.msra.mxu0 0.0
    %798 = vmatprep.subr.mxu0 0.0
    %799 = vmatpush1.msra.mxu0 0.0
    %800 = vmatprep.subr.mxu0 0.0
    %801 = vmatpush1.msra.mxu0 0.0
    %802 = vmatprep.subr.mxu0 0.0
    %803 = vmatpush1.msra.mxu0 0.0
    %804 = vmatprep.subr.mxu0 0.0
    %805 = vmatpush1.msra.mxu0 0.0
    %806 = vmatprep.subr.mxu0 0.0
    %807 = vmatpush1.msra.mxu0 0.0
    %808 = vmatprep.subr.mxu0 0.0
    %809 = vmatpush1.msra.mxu0 0.0
    %810 = vmatprep.subr.mxu0 0.0
    %811 = vmatpush1.msra.mxu0 0.0
    %812 = vmatprep.subr.mxu0 0.0
    %813 = vmatpush1.msra.mxu0 0.0
    %814 = vmatprep.subr.mxu0 0.0
    %815 = vmatpush1.msra.mxu0 0.0
    %816 = vmatprep.subr.mxu0 0.0
    %817 = vmatpush1.msra.mxu0 0.0
    %818 = vmatprep.subr.mxu0 0.0
    %819 = vmatpush1.msra.mxu0 0.0
    %820 = vmatprep.subr.mxu0 0.0
    %821 = vmatpush1.msra.mxu0 0.0
    %822 = vmatprep.subr.mxu0 0.0
    %823 = vmatpush1.msra.mxu0 0.0
    %824 = vmatprep.subr.mxu0 0.0
    %825 = vmatpush1.msra.mxu0 0.0
    %826 = vmatprep.subr.mxu0 0.0
    %827 = vmatpush1.msra.mxu0 0.0
    %828 = vmatprep.subr.mxu0 0.0
    %829 = vmatpush1.msra.mxu0 0.0
    %830 = vmatprep.subr.mxu0 0.0
    %831 = vmatpush1.msra.mxu0 0.0
    %832 = vmatprep.mubr.f32.mxu0 0.0
    %833 = vmatmul.mubr.f32.gmra.mrb[0].mxu0 %v696
    %v834 = vpop.f32.mrb[0].mxu0
    %v835 = vadd.f32 %v237, %v834
    %v836 = vpop.f32.mrb[0].mxu0
    %837 = vdwg.mxu0
    %838 = vmatprep.subr.mxu0 0.0
    %839 = vmatpush1.msra.mxu0 %v310
    %840 = vmatprep.subr.mxu0 0.0
    %841 = vmatpush1.msra.mxu0 %v312
    %842 = vmatprep.subr.mxu0 0.0
    %843 = vmatpush1.msra.mxu0 %v314
    %844 = vmatprep.subr.mxu0 0.0
    %845 = vmatpush1.msra.mxu0 %v316
    %846 = vmatprep.subr.mxu0 0.0
    %847 = vmatpush1.msra.mxu0 0.0
    %848 = vmatprep.subr.mxu0 0.0
    %849 = vmatpush1.msra.mxu0 0.0
    %850 = vmatprep.subr.mxu0 0.0
    %851 = vmatpush1.msra.mxu0 0.0
    %852 = vmatprep.subr.mxu0 0.0
    %853 = vmatpush1.msra.mxu0 0.0
    %854 = vmatprep.subr.mxu0 0.0
    %855 = vmatpush1.msra.mxu0 0.0
    %856 = vmatprep.subr.mxu0 0.0
    %857 = vmatpush1.msra.mxu0 0.0
    %858 = vmatprep.subr.mxu0 0.0
    %859 = vmatpush1.msra.mxu0 0.0
    %860 = vmatprep.subr.mxu0 0.0
    %861 = vmatpush1.msra.mxu0 0.0
    %862 = vmatprep.subr.mxu0 0.0
    %863 = vmatpush1.msra.mxu0 0.0
    %864 = vmatprep.subr.mxu0 0.0
    %865 = vmatpush1.msra.mxu0 0.0
    %866 = vmatprep.subr.mxu0 0.0
    %867 = vmatpush1.msra.mxu0 0.0
    %868 = vmatprep.subr.mxu0 0.0
    %869 = vmatpush1.msra.mxu0 0.0
    %870 = vmatprep.subr.mxu0 0.0
    %871 = vmatpush1.msra.mxu0 0.0
    %872 = vmatprep.subr.mxu0 0.0
    %873 = vmatpush1.msra.mxu0 0.0
    %874 = vmatprep.subr.mxu0 0.0
    %875 = vmatpush1.msra.mxu0 0.0
    %876 = vmatprep.subr.mxu0 0.0
    %877 = vmatpush1.msra.mxu0 0.0
    %878 = vmatprep.subr.mxu0 0.0
    %879 = vmatpush1.msra.mxu0 0.0
    %880 = vmatprep.subr.mxu0 0.0
    %881 = vmatpush1.msra.mxu0 0.0
    %882 = vmatprep.subr.mxu0 0.0
    %883 = vmatpush1.msra.mxu0 0.0
    %884 = vmatprep.subr.mxu0 0.0
    %885 = vmatpush1.msra.mxu0 0.0
    %886 = vmatprep.subr.mxu0 0.0
    %887 = vmatpush1.msra.mxu0 0.0
    %888 = vmatprep.subr.mxu0 0.0
    %889 = vmatpush1.msra.mxu0 0.0
    %890 = vmatprep.subr.mxu0 0.0
    %891 = vmatpush1.msra.mxu0 0.0
    %892 = vmatprep.subr.mxu0 0.0
    %893 = vmatpush1.msra.mxu0 0.0
    %894 = vmatprep.subr.mxu0 0.0
    %895 = vmatpush1.msra.mxu0 0.0
    %896 = vmatprep.subr.mxu0 0.0
    %897 = vmatpush1.msra.mxu0 0.0
    %898 = vmatprep.subr.mxu0 0.0
    %899 = vmatpush1.msra.mxu0 0.0
    %900 = vmatprep.subr.mxu0 0.0
    %901 = vmatpush1.msra.mxu0 0.0
    %902 = vmatprep.mubr.f32.mxu0 0.0
    %903 = vmatmul.mubr.f32.gmra.mrb[0].mxu0 %v696
    %v904 = vpop.f32.mrb[0].mxu0
    %v905 = vadd.f32 %v322, %v904
    %v906 = vpop.f32.mrb[0].mxu0
    %907 = vdwg.mxu0
    %v909 = vrot.slane %v765, 6
    %v911 = vadd.f32 %v134, %v909
    %v912 = vxor.u32 %v911, 2147483648
    %v913 = vmul.f32 %v912, 1.442695
    %v914 = vpow.pop %v913
    %v915 = vadd.f32 %v914, 1.0
    %v916 = vrcp.pop %v915
    %v917 = vmul.f32 1.0, %v916
    %v919 = vrot.slane %v835, 6
    %920 = vrot.lane.b32.xlu0 %v919, 32
    %v921 = vpop.permute.xlu0 %920
    %v923 = vadd.f32 %v134, %v921
    %v924 = vxor.u32 %v923, 2147483648
    %v925 = vmul.f32 %v924, 1.442695
    %v926 = vpow.pop %v925
    %v927 = vadd.f32 %v926, 1.0
    %v928 = vrcp.pop %v927
    %v929 = vmul.f32 1.0, %v928
    %v931 = vrot.slane %v905, 6
    %v933 = vmul.f32 %v917, %v931
    %935 = vrot.lane.b32.xlu0 %v933, 64
    %v936 = vpop.permute.xlu0 %935
    %v938 = vadd.f32 %v134, %v936
    %v939 = vtanh.pop %v938
    %v940 = vsub.f32 1.0, %v929
    %942 = vrot.lane.b32.xlu0 %v939, 96
    %v943 = vpop.permute.xlu0 %942
    %v945 = vmul.f32 %v940, %v943
    %v946 = vrot.slane %v686, 7
    %v948 = vmul.f32 %v929, %v946
    %v949 = vadd.f32 %v945, %v948
    %951 = vrot.lane.b32.xlu0 %v949, 96
    %v952 = vpop.permute.xlu0 %951
    %vm954 = vcmask 256002
    %955 = vst.msk [vmem:[#allocation2] sm:$0x4] %vm954, %v952
    %v956 = vrot.slane %v949, 2
    %957 = vrot.lane.b32.xlu0 %v956, 96
    %v958 = vpop.permute.xlu0 %957
    %v959 = vsel %vm63, %v958, 0
    %961 = vmatprep.subr.mxu0 0.0
    %962 = vmatpush1.msra.mxu0 %v137
    %963 = vmatprep.subr.mxu0 0.0
    %964 = vmatpush1.msra.mxu0 %v138
    %965 = vmatprep.subr.mxu0 0.0
    %966 = vmatpush1.msra.mxu0 %v139
    %967 = vmatprep.subr.mxu0 0.0
    %968 = vmatpush1.msra.mxu0 %v140
    %969 = vmatprep.subr.mxu0 0.0
    %970 = vmatpush1.msra.mxu0 0.0
    %971 = vmatprep.subr.mxu0 0.0
    %972 = vmatpush1.msra.mxu0 0.0
    %973 = vmatprep.subr.mxu0 0.0
    %974 = vmatpush1.msra.mxu0 0.0
    %975 = vmatprep.subr.mxu0 0.0
    %976 = vmatpush1.msra.mxu0 0.0
    %977 = vmatprep.subr.mxu0 0.0
    %978 = vmatpush1.msra.mxu0 0.0
    %979 = vmatprep.subr.mxu0 0.0
    %980 = vmatpush1.msra.mxu0 0.0
    %981 = vmatprep.subr.mxu0 0.0
    %982 = vmatpush1.msra.mxu0 0.0
    %983 = vmatprep.subr.mxu0 0.0
    %984 = vmatpush1.msra.mxu0 0.0
    %985 = vmatprep.subr.mxu0 0.0
    %986 = vmatpush1.msra.mxu0 0.0
    %987 = vmatprep.subr.mxu0 0.0
    %988 = vmatpush1.msra.mxu0 0.0
    %989 = vmatprep.subr.mxu0 0.0
    %990 = vmatpush1.msra.mxu0 0.0
    %991 = vmatprep.subr.mxu0 0.0
    %992 = vmatpush1.msra.mxu0 0.0
    %993 = vmatprep.subr.mxu0 0.0
    %994 = vmatpush1.msra.mxu0 0.0
    %995 = vmatprep.subr.mxu0 0.0
    %996 = vmatpush1.msra.mxu0 0.0
    %997 = vmatprep.subr.mxu0 0.0
    %998 = vmatpush1.msra.mxu0 0.0
    %999 = vmatprep.subr.mxu0 0.0
    %1000 = vmatpush1.msra.mxu0 0.0
    %1001 = vmatprep.subr.mxu0 0.0
    %1002 = vmatpush1.msra.mxu0 0.0
    %1003 = vmatprep.subr.mxu0 0.0
    %1004 = vmatpush1.msra.mxu0 0.0
    %1005 = vmatprep.subr.mxu0 0.0
    %1006 = vmatpush1.msra.mxu0 0.0
    %1007 = vmatprep.subr.mxu0 0.0
    %1008 = vmatpush1.msra.mxu0 0.0
    %1009 = vmatprep.subr.mxu0 0.0
    %1010 = vmatpush1.msra.mxu0 0.0
    %1011 = vmatprep.subr.mxu0 0.0
    %1012 = vmatpush1.msra.mxu0 0.0
    %1013 = vmatprep.subr.mxu0 0.0
    %1014 = vmatpush1.msra.mxu0 0.0
    %1015 = vmatprep.subr.mxu0 0.0
    %1016 = vmatpush1.msra.mxu0 0.0
    %1017 = vmatprep.subr.mxu0 0.0
    %1018 = vmatpush1.msra.mxu0 0.0
    %1019 = vmatprep.subr.mxu0 0.0
    %1020 = vmatpush1.msra.mxu0 0.0
    %1021 = vmatprep.subr.mxu0 0.0
    %1022 = vmatpush1.msra.mxu0 0.0
    %1023 = vmatprep.subr.mxu0 0.0
    %1024 = vmatpush1.msra.mxu0 0.0
    %1025 = vmatprep.mubr.f32.mxu0 0.0
    %1026 = vmatmul.mubr.f32.gmra.mrb[0].mxu0 %v959
    %v1027 = vpop.f32.mrb[0].mxu0
    %v1028 = vadd.f32 %v141, %v1027
    %v1029 = vpop.f32.mrb[0].mxu0
    %1030 = vdwg.mxu0
    %1031 = vmatprep.subr.mxu0 0.0
    %1032 = vmatpush1.msra.mxu0 %v220
    %1033 = vmatprep.subr.mxu0 0.0
    %1034 = vmatpush1.msra.mxu0 %v222
    %1035 = vmatprep.subr.mxu0 0.0
    %1036 = vmatpush1.msra.mxu0 %v224
    %1037 = vmatprep.subr.mxu0 0.0
    %1038 = vmatpush1.msra.mxu0 %v226
    %1039 = vmatprep.subr.mxu0 0.0
    %1040 = vmatpush1.msra.mxu0 0.0
    %1041 = vmatprep.subr.mxu0 0.0
    %1042 = vmatpush1.msra.mxu0 0.0
    %1043 = vmatprep.subr.mxu0 0.0
    %1044 = vmatpush1.msra.mxu0 0.0
    %1045 = vmatprep.subr.mxu0 0.0
    %1046 = vmatpush1.msra.mxu0 0.0
    %1047 = vmatprep.subr.mxu0 0.0
    %1048 = vmatpush1.msra.mxu0 0.0
    %1049 = vmatprep.subr.mxu0 0.0
    %1050 = vmatpush1.msra.mxu0 0.0
    %1051 = vmatprep.subr.mxu0 0.0
    %1052 = vmatpush1.msra.mxu0 0.0
    %1053 = vmatprep.subr.mxu0 0.0
    %1054 = vmatpush1.msra.mxu0 0.0
    %1055 = vmatprep.subr.mxu0 0.0
    %1056 = vmatpush1.msra.mxu0 0.0
    %1057 = vmatprep.subr.mxu0 0.0
    %1058 = vmatpush1.msra.mxu0 0.0
    %1059 = vmatprep.subr.mxu0 0.0
    %1060 = vmatpush1.msra.mxu0 0.0
    %1061 = vmatprep.subr.mxu0 0.0
    %1062 = vmatpush1.msra.mxu0 0.0
    %1063 = vmatprep.subr.mxu0 0.0
    %1064 = vmatpush1.msra.mxu0 0.0
    %1065 = vmatprep.subr.mxu0 0.0
    %1066 = vmatpush1.msra.mxu0 0.0
    %1067 = vmatprep.subr.mxu0 0.0
    %1068 = vmatpush1.msra.mxu0 0.0
    %1069 = vmatprep.subr.mxu0 0.0
    %1070 = vmatpush1.msra.mxu0 0.0
    %1071 = vmatprep.subr.mxu0 0.0
    %1072 = vmatpush1.msra.mxu0 0.0
    %1073 = vmatprep.subr.mxu0 0.0
    %1074 = vmatpush1.msra.mxu0 0.0
    %1075 = vmatprep.subr.mxu0 0.0
    %1076 = vmatpush1.msra.mxu0 0.0
    %1077 = vmatprep.subr.mxu0 0.0
    %1078 = vmatpush1.msra.mxu0 0.0
    %1079 = vmatprep.subr.mxu0 0.0
    %1080 = vmatpush1.msra.mxu0 0.0
    %1081 = vmatprep.subr.mxu0 0.0
    %1082 = vmatpush1.msra.mxu0 0.0
    %1083 = vmatprep.subr.mxu0 0.0
    %1084 = vmatpush1.msra.mxu0 0.0
    %1085 = vmatprep.subr.mxu0 0.0
    %1086 = vmatpush1.msra.mxu0 0.0
    %1087 = vmatprep.subr.mxu0 0.0
    %1088 = vmatpush1.msra.mxu0 0.0
    %1089 = vmatprep.subr.mxu0 0.0
    %1090 = vmatpush1.msra.mxu0 0.0
    %1091 = vmatprep.subr.mxu0 0.0
    %1092 = vmatpush1.msra.mxu0 0.0
    %1093 = vmatprep.subr.mxu0 0.0
    %1094 = vmatpush1.msra.mxu0 0.0
    %1095 = vmatprep.mubr.f32.mxu0 0.0
    %1096 = vmatmul.mubr.f32.gmra.mrb[0].mxu0 %v959
    %v1097 = vpop.f32.mrb[0].mxu0
    %v1098 = vadd.f32 %v237, %v1097
    %v1099 = vpop.f32.mrb[0].mxu0
    %1100 = vdwg.mxu0
    %1101 = vmatprep.subr.mxu0 0.0
    %1102 = vmatpush1.msra.mxu0 %v310
    %1103 = vmatprep.subr.mxu0 0.0
    %1104 = vmatpush1.msra.mxu0 %v312
    %1105 = vmatprep.subr.mxu0 0.0
    %1106 = vmatpush1.msra.mxu0 %v314
    %1107 = vmatprep.subr.mxu0 0.0
    %1108 = vmatpush1.msra.mxu0 %v316
    %1109 = vmatprep.subr.mxu0 0.0
    %1110 = vmatpush1.msra.mxu0 0.0
    %1111 = vmatprep.subr.mxu0 0.0
    %1112 = vmatpush1.msra.mxu0 0.0
    %1113 = vmatprep.subr.mxu0 0.0
    %1114 = vmatpush1.msra.mxu0 0.0
    %1115 = vmatprep.subr.mxu0 0.0
    %1116 = vmatpush1.msra.mxu0 0.0
    %1117 = vmatprep.subr.mxu0 0.0
    %1118 = vmatpush1.msra.mxu0 0.0
    %1119 = vmatprep.subr.mxu0 0.0
    %1120 = vmatpush1.msra.mxu0 0.0
    %1121 = vmatprep.subr.mxu0 0.0
    %1122 = vmatpush1.msra.mxu0 0.0
    %1123 = vmatprep.subr.mxu0 0.0
    %1124 = vmatpush1.msra.mxu0 0.0
    %1125 = vmatprep.subr.mxu0 0.0
    %1126 = vmatpush1.msra.mxu0 0.0
    %1127 = vmatprep.subr.mxu0 0.0
    %1128 = vmatpush1.msra.mxu0 0.0
    %1129 = vmatprep.subr.mxu0 0.0
    %1130 = vmatpush1.msra.mxu0 0.0
    %1131 = vmatprep.subr.mxu0 0.0
    %1132 = vmatpush1.msra.mxu0 0.0
    %1133 = vmatprep.subr.mxu0 0.0
    %1134 = vmatpush1.msra.mxu0 0.0
    %1135 = vmatprep.subr.mxu0 0.0
    %1136 = vmatpush1.msra.mxu0 0.0
    %1137 = vmatprep.subr.mxu0 0.0
    %1138 = vmatpush1.msra.mxu0 0.0
    %1139 = vmatprep.subr.mxu0 0.0
    %1140 = vmatpush1.msra.mxu0 0.0
    %1141 = vmatprep.subr.mxu0 0.0
    %1142 = vmatpush1.msra.mxu0 0.0
    %1143 = vmatprep.subr.mxu0 0.0
    %1144 = vmatpush1.msra.mxu0 0.0
    %1145 = vmatprep.subr.mxu0 0.0
    %1146 = vmatpush1.msra.mxu0 0.0
    %1147 = vmatprep.subr.mxu0 0.0
    %1148 = vmatpush1.msra.mxu0 0.0
    %1149 = vmatprep.subr.mxu0 0.0
    %1150 = vmatpush1.msra.mxu0 0.0
    %1151 = vmatprep.subr.mxu0 0.0
    %1152 = vmatpush1.msra.mxu0 0.0
    %1153 = vmatprep.subr.mxu0 0.0
    %1154 = vmatpush1.msra.mxu0 0.0
    %1155 = vmatprep.subr.mxu0 0.0
    %1156 = vmatpush1.msra.mxu0 0.0
    %1157 = vmatprep.subr.mxu0 0.0
    %1158 = vmatpush1.msra.mxu0 0.0
    %1159 = vmatprep.subr.mxu0 0.0
    %1160 = vmatpush1.msra.mxu0 0.0
    %1161 = vmatprep.subr.mxu0 0.0
    %1162 = vmatpush1.msra.mxu0 0.0
    %1163 = vmatprep.subr.mxu0 0.0
    %1164 = vmatpush1.msra.mxu0 0.0
    %1165 = vmatprep.mubr.f32.mxu0 0.0
    %1166 = vmatmul.mubr.f32.gmra.mrb[0].mxu0 %v959
    %v1167 = vpop.f32.mrb[0].mxu0
    %v1168 = vadd.f32 %v322, %v1167
    %v1169 = vpop.f32.mrb[0].mxu0
    %1170 = vdwg.mxu0
    %v1172 = vrot.slane %v1028, 5
    %v1174 = vadd.f32 %v134, %v1172
    %v1175 = vxor.u32 %v1174, 2147483648
    %v1176 = vmul.f32 %v1175, 1.442695
    %v1177 = vpow.pop %v1176
    %v1178 = vadd.f32 %v1177, 1.0
    %v1179 = vrcp.pop %v1178
    %v1180 = vmul.f32 1.0, %v1179
    %v1182 = vrot.slane %v1098, 5
    %1183 = vrot.lane.b32.xlu0 %v1182, 32
    %v1184 = vpop.permute.xlu0 %1183
    %v1186 = vadd.f32 %v134, %v1184
    %v1187 = vxor.u32 %v1186, 2147483648
    %v1188 = vmul.f32 %v1187, 1.442695
    %v1189 = vpow.pop %v1188
    %v1190 = vadd.f32 %v1189, 1.0
    %v1191 = vrcp.pop %v1190
    %v1192 = vmul.f32 1.0, %v1191
    %v1194 = vrot.slane %v1168, 5
    %v1196 = vmul.f32 %v1180, %v1194
    %1198 = vrot.lane.b32.xlu0 %v1196, 64
    %v1199 = vpop.permute.xlu0 %1198
    %v1201 = vadd.f32 %v134, %v1199
    %v1202 = vtanh.pop %v1201
    %v1203 = vsub.f32 1.0, %v1192
    %1205 = vrot.lane.b32.xlu0 %v1202, 96
    %v1206 = vpop.permute.xlu0 %1205
    %v1208 = vmul.f32 %v1203, %v1206
    %v1209 = vrot.slane %v949, 7
    %v1211 = vmul.f32 %v1192, %v1209
    %v1212 = vadd.f32 %v1208, %v1211
    %1214 = vrot.lane.b32.xlu0 %v1212, 96
    %v1215 = vpop.permute.xlu0 %1214
    %vm1217 = vcmask 257027
    %1218 = vst.msk [vmem:[#allocation2] sm:$0x8] %vm1217, %v1215
    %v1219 = vrot.slane %v1212, 3
    %1220 = vrot.lane.b32.xlu0 %v1219, 96
    %v1221 = vpop.permute.xlu0 %1220
    %v1222 = vsel %vm63, %v1221, 0
    %1224 = vmatprep.subr.mxu0 0.0
    %1225 = vmatpush1.msra.mxu0 %v137
    %1226 = vmatprep.subr.mxu0 0.0
    %1227 = vmatpush1.msra.mxu0 %v138
    %1228 = vmatprep.subr.mxu0 0.0
    %1229 = vmatpush1.msra.mxu0 %v139
    %1230 = vmatprep.subr.mxu0 0.0
    %1231 = vmatpush1.msra.mxu0 %v140
    %1232 = vmatprep.subr.mxu0 0.0
    %1233 = vmatpush1.msra.mxu0 0.0
    %1234 = vmatprep.subr.mxu0 0.0
    %1235 = vmatpush1.msra.mxu0 0.0
    %1236 = vmatprep.subr.mxu0 0.0
    %1237 = vmatpush1.msra.mxu0 0.0
    %1238 = vmatprep.subr.mxu0 0.0
    %1239 = vmatpush1.msra.mxu0 0.0
    %1240 = vmatprep.subr.mxu0 0.0
    %1241 = vmatpush1.msra.mxu0 0.0
    %1242 = vmatprep.subr.mxu0 0.0
    %1243 = vmatpush1.msra.mxu0 0.0
    %1244 = vmatprep.subr.mxu0 0.0
    %1245 = vmatpush1.msra.mxu0 0.0
    %1246 = vmatprep.subr.mxu0 0.0
    %1247 = vmatpush1.msra.mxu0 0.0
    %1248 = vmatprep.subr.mxu0 0.0
    %1249 = vmatpush1.msra.mxu0 0.0
    %1250 = vmatprep.subr.mxu0 0.0
    %1251 = vmatpush1.msra.mxu0 0.0
    %1252 = vmatprep.subr.mxu0 0.0
    %1253 = vmatpush1.msra.mxu0 0.0
    %1254 = vmatprep.subr.mxu0 0.0
    %1255 = vmatpush1.msra.mxu0 0.0
    %1256 = vmatprep.subr.mxu0 0.0
    %1257 = vmatpush1.msra.mxu0 0.0
    %1258 = vmatprep.subr.mxu0 0.0
    %1259 = vmatpush1.msra.mxu0 0.0
    %1260 = vmatprep.subr.mxu0 0.0
    %1261 = vmatpush1.msra.mxu0 0.0
    %1262 = vmatprep.subr.mxu0 0.0
    %1263 = vmatpush1.msra.mxu0 0.0
    %1264 = vmatprep.subr.mxu0 0.0
    %1265 = vmatpush1.msra.mxu0 0.0
    %1266 = vmatprep.subr.mxu0 0.0
    %1267 = vmatpush1.msra.mxu0 0.0
    %1268 = vmatprep.subr.mxu0 0.0
    %1269 = vmatpush1.msra.mxu0 0.0
    %1270 = vmatprep.subr.mxu0 0.0
    %1271 = vmatpush1.msra.mxu0 0.0
    %1272 = vmatprep.subr.mxu0 0.0
    %1273 = vmatpush1.msra.mxu0 0.0
    %1274 = vmatprep.subr.mxu0 0.0
    %1275 = vmatpush1.msra.mxu0 0.0
    %1276 = vmatprep.subr.mxu0 0.0
    %1277 = vmatpush1.msra.mxu0 0.0
    %1278 = vmatprep.subr.mxu0 0.0
    %1279 = vmatpush1.msra.mxu0 0.0
    %1280 = vmatprep.subr.mxu0 0.0
    %1281 = vmatpush1.msra.mxu0 0.0
    %1282 = vmatprep.subr.mxu0 0.0
    %1283 = vmatpush1.msra.mxu0 0.0
    %1284 = vmatprep.subr.mxu0 0.0
    %1285 = vmatpush1.msra.mxu0 0.0
    %1286 = vmatprep.subr.mxu0 0.0
    %1287 = vmatpush1.msra.mxu0 0.0
    %1288 = vmatprep.mubr.f32.mxu0 0.0
    %1289 = vmatmul.mubr.f32.gmra.mrb[0].mxu0 %v1222
    %v1290 = vpop.f32.mrb[0].mxu0
    %v1291 = vadd.f32 %v141, %v1290
    %v1292 = vpop.f32.mrb[0].mxu0
    %1293 = vdwg.mxu0
    %1294 = vmatprep.subr.mxu0 0.0
    %1295 = vmatpush1.msra.mxu0 %v220
    %1296 = vmatprep.subr.mxu0 0.0
    %1297 = vmatpush1.msra.mxu0 %v222
    %1298 = vmatprep.subr.mxu0 0.0
    %1299 = vmatpush1.msra.mxu0 %v224
    %1300 = vmatprep.subr.mxu0 0.0
    %1301 = vmatpush1.msra.mxu0 %v226
    %1302 = vmatprep.subr.mxu0 0.0
    %1303 = vmatpush1.msra.mxu0 0.0
    %1304 = vmatprep.subr.mxu0 0.0
    %1305 = vmatpush1.msra.mxu0 0.0
    %1306 = vmatprep.subr.mxu0 0.0
    %1307 = vmatpush1.msra.mxu0 0.0
    %1308 = vmatprep.subr.mxu0 0.0
    %1309 = vmatpush1.msra.mxu0 0.0
    %1310 = vmatprep.subr.mxu0 0.0
    %1311 = vmatpush1.msra.mxu0 0.0
    %1312 = vmatprep.subr.mxu0 0.0
    %1313 = vmatpush1.msra.mxu0 0.0
    %1314 = vmatprep.subr.mxu0 0.0
    %1315 = vmatpush1.msra.mxu0 0.0
    %1316 = vmatprep.subr.mxu0 0.0
    %1317 = vmatpush1.msra.mxu0 0.0
    %1318 = vmatprep.subr.mxu0 0.0
    %1319 = vmatpush1.msra.mxu0 0.0
    %1320 = vmatprep.subr.mxu0 0.0
    %1321 = vmatpush1.msra.mxu0 0.0
    %1322 = vmatprep.subr.mxu0 0.0
    %1323 = vmatpush1.msra.mxu0 0.0
    %1324 = vmatprep.subr.mxu0 0.0
    %1325 = vmatpush1.msra.mxu0 0.0
    %1326 = vmatprep.subr.mxu0 0.0
    %1327 = vmatpush1.msra.mxu0 0.0
    %1328 = vmatprep.subr.mxu0 0.0
    %1329 = vmatpush1.msra.mxu0 0.0
    %1330 = vmatprep.subr.mxu0 0.0
    %1331 = vmatpush1.msra.mxu0 0.0
    %1332 = vmatprep.subr.mxu0 0.0
    %1333 = vmatpush1.msra.mxu0 0.0
    %1334 = vmatprep.subr.mxu0 0.0
    %1335 = vmatpush1.msra.mxu0 0.0
    %1336 = vmatprep.subr.mxu0 0.0
    %1337 = vmatpush1.msra.mxu0 0.0
    %1338 = vmatprep.subr.mxu0 0.0
    %1339 = vmatpush1.msra.mxu0 0.0
    %1340 = vmatprep.subr.mxu0 0.0
    %1341 = vmatpush1.msra.mxu0 0.0
    %1342 = vmatprep.subr.mxu0 0.0
    %1343 = vmatpush1.msra.mxu0 0.0
    %1344 = vmatprep.subr.mxu0 0.0
    %1345 = vmatpush1.msra.mxu0 0.0
    %1346 = vmatprep.subr.mxu0 0.0
    %1347 = vmatpush1.msra.mxu0 0.0
    %1348 = vmatprep.subr.mxu0 0.0
    %1349 = vmatpush1.msra.mxu0 0.0
    %1350 = vmatprep.subr.mxu0 0.0
    %1351 = vmatpush1.msra.mxu0 0.0
    %1352 = vmatprep.subr.mxu0 0.0
    %1353 = vmatpush1.msra.mxu0 0.0
    %1354 = vmatprep.subr.mxu0 0.0
    %1355 = vmatpush1.msra.mxu0 0.0
    %1356 = vmatprep.subr.mxu0 0.0
    %1357 = vmatpush1.msra.mxu0 0.0
    %1358 = vmatprep.mubr.f32.mxu0 0.0
    %1359 = vmatmul.mubr.f32.gmra.mrb[0].mxu0 %v1222
    %v1360 = vpop.f32.mrb[0].mxu0
    %v1361 = vadd.f32 %v237, %v1360
    %v1362 = vpop.f32.mrb[0].mxu0
    %1363 = vdwg.mxu0
    %1364 = vmatprep.subr.mxu0 0.0
    %1365 = vmatpush1.msra.mxu0 %v310
    %1366 = vmatprep.subr.mxu0 0.0
    %1367 = vmatpush1.msra.mxu0 %v312
    %1368 = vmatprep.subr.mxu0 0.0
    %1369 = vmatpush1.msra.mxu0 %v314
    %1370 = vmatprep.subr.mxu0 0.0
    %1371 = vmatpush1.msra.mxu0 %v316
    %1372 = vmatprep.subr.mxu0 0.0
    %1373 = vmatpush1.msra.mxu0 0.0
    %1374 = vmatprep.subr.mxu0 0.0
    %1375 = vmatpush1.msra.mxu0 0.0
    %1376 = vmatprep.subr.mxu0 0.0
    %1377 = vmatpush1.msra.mxu0 0.0
    %1378 = vmatprep.subr.mxu0 0.0
    %1379 = vmatpush1.msra.mxu0 0.0
    %1380 = vmatprep.subr.mxu0 0.0
    %1381 = vmatpush1.msra.mxu0 0.0
    %1382 = vmatprep.subr.mxu0 0.0
    %1383 = vmatpush1.msra.mxu0 0.0
    %1384 = vmatprep.subr.mxu0 0.0
    %1385 = vmatpush1.msra.mxu0 0.0
    %1386 = vmatprep.subr.mxu0 0.0
    %1387 = vmatpush1.msra.mxu0 0.0
    %1388 = vmatprep.subr.mxu0 0.0
    %1389 = vmatpush1.msra.mxu0 0.0
    %1390 = vmatprep.subr.mxu0 0.0
    %1391 = vmatpush1.msra.mxu0 0.0
    %1392 = vmatprep.subr.mxu0 0.0
    %1393 = vmatpush1.msra.mxu0 0.0
    %1394 = vmatprep.subr.mxu0 0.0
    %1395 = vmatpush1.msra.mxu0 0.0
    %1396 = vmatprep.subr.mxu0 0.0
    %1397 = vmatpush1.msra.mxu0 0.0
    %1398 = vmatprep.subr.mxu0 0.0
    %1399 = vmatpush1.msra.mxu0 0.0
    %1400 = vmatprep.subr.mxu0 0.0
    %1401 = vmatpush1.msra.mxu0 0.0
    %1402 = vmatprep.subr.mxu0 0.0
    %1403 = vmatpush1.msra.mxu0 0.0
    %1404 = vmatprep.subr.mxu0 0.0
    %1405 = vmatpush1.msra.mxu0 0.0
    %1406 = vmatprep.subr.mxu0 0.0
    %1407 = vmatpush1.msra.mxu0 0.0
    %1408 = vmatprep.subr.mxu0 0.0
    %1409 = vmatpush1.msra.mxu0 0.0
    %1410 = vmatprep.subr.mxu0 0.0
    %1411 = vmatpush1.msra.mxu0 0.0
    %1412 = vmatprep.subr.mxu0 0.0
    %1413 = vmatpush1.msra.mxu0 0.0
    %1414 = vmatprep.subr.mxu0 0.0
    %1415 = vmatpush1.msra.mxu0 0.0
    %1416 = vmatprep.subr.mxu0 0.0
    %1417 = vmatpush1.msra.mxu0 0.0
    %1418 = vmatprep.subr.mxu0 0.0
    %1419 = vmatpush1.msra.mxu0 0.0
    %1420 = vmatprep.subr.mxu0 0.0
    %1421 = vmatpush1.msra.mxu0 0.0
    %1422 = vmatprep.subr.mxu0 0.0
    %1423 = vmatpush1.msra.mxu0 0.0
    %1424 = vmatprep.subr.mxu0 0.0
    %1425 = vmatpush1.msra.mxu0 0.0
    %1426 = vmatprep.subr.mxu0 0.0
    %1427 = vmatpush1.msra.mxu0 0.0
    %1428 = vmatprep.mubr.f32.mxu0 0.0
    %1429 = vmatmul.mubr.f32.gmra.mrb[0].mxu0 %v1222
    %v1430 = vpop.f32.mrb[0].mxu0
    %v1431 = vadd.f32 %v322, %v1430
    %v1432 = vpop.f32.mrb[0].mxu0
    %1433 = vdwg.mxu0
    %v1435 = vrot.slane %v1291, 4
    %v1437 = vadd.f32 %v134, %v1435
    %v1438 = vxor.u32 %v1437, 2147483648
    %v1439 = vmul.f32 %v1438, 1.442695
    %v1440 = vpow.pop %v1439
    %v1441 = vadd.f32 %v1440, 1.0
    %v1442 = vrcp.pop %v1441
    %v1443 = vmul.f32 1.0, %v1442
    %v1445 = vrot.slane %v1361, 4
    %1446 = vrot.lane.b32.xlu0 %v1445, 32
    %v1447 = vpop.permute.xlu0 %1446
    %v1449 = vadd.f32 %v134, %v1447
    %v1450 = vxor.u32 %v1449, 2147483648
    %v1451 = vmul.f32 %v1450, 1.442695
    %v1452 = vpow.pop %v1451
    %v1453 = vadd.f32 %v1452, 1.0
    %v1454 = vrcp.pop %v1453
    %v1455 = vmul.f32 1.0, %v1454
    %v1457 = vrot.slane %v1431, 4
    %v1459 = vmul.f32 %v1443, %v1457
    %1461 = vrot.lane.b32.xlu0 %v1459, 64
    %v1462 = vpop.permute.xlu0 %1461
    %v1464 = vadd.f32 %v134, %v1462
    %v1465 = vtanh.pop %v1464
    %v1466 = vsub.f32 1.0, %v1455
    %1468 = vrot.lane.b32.xlu0 %v1465, 96
    %v1469 = vpop.permute.xlu0 %1468
    %v1471 = vmul.f32 %v1466, %v1469
    %v1472 = vrot.slane %v1212, 7
    %v1474 = vmul.f32 %v1455, %v1472
    %v1475 = vadd.f32 %v1471, %v1474
    %1477 = vrot.lane.b32.xlu0 %v1475, 96
    %v1478 = vpop.permute.xlu0 %1477
    %vm1480 = vcmask 258052
    %1481 = vst.msk [vmem:[#allocation2] sm:$0x10] %vm1480, %v1478
    %v1482 = vrot.slane %v1475, 4
    %1483 = vrot.lane.b32.xlu0 %v1482, 96
    %v1484 = vpop.permute.xlu0 %1483
    %v1485 = vsel %vm63, %v1484, 0
    %1487 = vmatprep.subr.mxu0 0.0
    %1488 = vmatpush1.msra.mxu0 %v137
    %1489 = vmatprep.subr.mxu0 0.0
    %1490 = vmatpush1.msra.mxu0 %v138
    %1491 = vmatprep.subr.mxu0 0.0
    %1492 = vmatpush1.msra.mxu0 %v139
    %1493 = vmatprep.subr.mxu0 0.0
    %1494 = vmatpush1.msra.mxu0 %v140
    %1495 = vmatprep.subr.mxu0 0.0
    %1496 = vmatpush1.msra.mxu0 0.0
    %1497 = vmatprep.subr.mxu0 0.0
    %1498 = vmatpush1.msra.mxu0 0.0
    %1499 = vmatprep.subr.mxu0 0.0
    %1500 = vmatpush1.msra.mxu0 0.0
    %1501 = vmatprep.subr.mxu0 0.0
    %1502 = vmatpush1.msra.mxu0 0.0
    %1503 = vmatprep.subr.mxu0 0.0
    %1504 = vmatpush1.msra.mxu0 0.0
    %1505 = vmatprep.subr.mxu0 0.0
    %1506 = vmatpush1.msra.mxu0 0.0
    %1507 = vmatprep.subr.mxu0 0.0
    %1508 = vmatpush1.msra.mxu0 0.0
    %1509 = vmatprep.subr.mxu0 0.0
    %1510 = vmatpush1.msra.mxu0 0.0
    %1511 = vmatprep.subr.mxu0 0.0
    %1512 = vmatpush1.msra.mxu0 0.0
    %1513 = vmatprep.subr.mxu0 0.0
    %1514 = vmatpush1.msra.mxu0 0.0
    %1515 = vmatprep.subr.mxu0 0.0
    %1516 = vmatpush1.msra.mxu0 0.0
    %1517 = vmatprep.subr.mxu0 0.0
    %1518 = vmatpush1.msra.mxu0 0.0
    %1519 = vmatprep.subr.mxu0 0.0
    %1520 = vmatpush1.msra.mxu0 0.0
    %1521 = vmatprep.subr.mxu0 0.0
    %1522 = vmatpush1.msra.mxu0 0.0
    %1523 = vmatprep.subr.mxu0 0.0
    %1524 = vmatpush1.msra.mxu0 0.0
    %1525 = vmatprep.subr.mxu0 0.0
    %1526 = vmatpush1.msra.mxu0 0.0
    %1527 = vmatprep.subr.mxu0 0.0
    %1528 = vmatpush1.msra.mxu0 0.0
    %1529 = vmatprep.subr.mxu0 0.0
    %1530 = vmatpush1.msra.mxu0 0.0
    %1531 = vmatprep.subr.mxu0 0.0
    %1532 = vmatpush1.msra.mxu0 0.0
    %1533 = vmatprep.subr.mxu0 0.0
    %1534 = vmatpush1.msra.mxu0 0.0
    %1535 = vmatprep.subr.mxu0 0.0
    %1536 = vmatpush1.msra.mxu0 0.0
    %1537 = vmatprep.subr.mxu0 0.0
    %1538 = vmatpush1.msra.mxu0 0.0
    %1539 = vmatprep.subr.mxu0 0.0
    %1540 = vmatpush1.msra.mxu0 0.0
    %1541 = vmatprep.subr.mxu0 0.0
    %1542 = vmatpush1.msra.mxu0 0.0
    %1543 = vmatprep.subr.mxu0 0.0
    %1544 = vmatpush1.msra.mxu0 0.0
    %1545 = vmatprep.subr.mxu0 0.0
    %1546 = vmatpush1.msra.mxu0 0.0
    %1547 = vmatprep.subr.mxu0 0.0
    %1548 = vmatpush1.msra.mxu0 0.0
    %1549 = vmatprep.subr.mxu0 0.0
    %1550 = vmatpush1.msra.mxu0 0.0
    %1551 = vmatprep.mubr.f32.mxu0 0.0
    %1552 = vmatmul.mubr.f32.gmra.mrb[0].mxu0 %v1485
    %v1553 = vpop.f32.mrb[0].mxu0
    %v1554 = vadd.f32 %v141, %v1553
    %v1555 = vpop.f32.mrb[0].mxu0
    %1556 = vdwg.mxu0
    %1557 = vmatprep.subr.mxu0 0.0
    %1558 = vmatpush1.msra.mxu0 %v220
    %1559 = vmatprep.subr.mxu0 0.0
    %1560 = vmatpush1.msra.mxu0 %v222
    %1561 = vmatprep.subr.mxu0 0.0
    %1562 = vmatpush1.msra.mxu0 %v224
    %1563 = vmatprep.subr.mxu0 0.0
    %1564 = vmatpush1.msra.mxu0 %v226
    %1565 = vmatprep.subr.mxu0 0.0
    %1566 = vmatpush1.msra.mxu0 0.0
    %1567 = vmatprep.subr.mxu0 0.0
    %1568 = vmatpush1.msra.mxu0 0.0
    %1569 = vmatprep.subr.mxu0 0.0
    %1570 = vmatpush1.msra.mxu0 0.0
    %1571 = vmatprep.subr.mxu0 0.0
    %1572 = vmatpush1.msra.mxu0 0.0
    %1573 = vmatprep.subr.mxu0 0.0
    %1574 = vmatpush1.msra.mxu0 0.0
    %1575 = vmatprep.subr.mxu0 0.0
    %1576 = vmatpush1.msra.mxu0 0.0
    %1577 = vmatprep.subr.mxu0 0.0
    %1578 = vmatpush1.msra.mxu0 0.0
    %1579 = vmatprep.subr.mxu0 0.0
    %1580 = vmatpush1.msra.mxu0 0.0
    %1581 = vmatprep.subr.mxu0 0.0
    %1582 = vmatpush1.msra.mxu0 0.0
    %1583 = vmatprep.subr.mxu0 0.0
    %1584 = vmatpush1.msra.mxu0 0.0
    %1585 = vmatprep.subr.mxu0 0.0
    %1586 = vmatpush1.msra.mxu0 0.0
    %1587 = vmatprep.subr.mxu0 0.0
    %1588 = vmatpush1.msra.mxu0 0.0
    %1589 = vmatprep.subr.mxu0 0.0
    %1590 = vmatpush1.msra.mxu0 0.0
    %1591 = vmatprep.subr.mxu0 0.0
    %1592 = vmatpush1.msra.mxu0 0.0
    %1593 = vmatprep.subr.mxu0 0.0
    %1594 = vmatpush1.msra.mxu0 0.0
    %1595 = vmatprep.subr.mxu0 0.0
    %1596 = vmatpush1.msra.mxu0 0.0
    %1597 = vmatprep.subr.mxu0 0.0
    %1598 = vmatpush1.msra.mxu0 0.0
    %1599 = vmatprep.subr.mxu0 0.0
    %1600 = vmatpush1.msra.mxu0 0.0
    %1601 = vmatprep.subr.mxu0 0.0
    %1602 = vmatpush1.msra.mxu0 0.0
    %1603 = vmatprep.subr.mxu0 0.0
    %1604 = vmatpush1.msra.mxu0 0.0
    %1605 = vmatprep.subr.mxu0 0.0
    %1606 = vmatpush1.msra.mxu0 0.0
    %1607 = vmatprep.subr.mxu0 0.0
    %1608 = vmatpush1.msra.mxu0 0.0
    %1609 = vmatprep.subr.mxu0 0.0
    %1610 = vmatpush1.msra.mxu0 0.0
    %1611 = vmatprep.subr.mxu0 0.0
    %1612 = vmatpush1.msra.mxu0 0.0
    %1613 = vmatprep.subr.mxu0 0.0
    %1614 = vmatpush1.msra.mxu0 0.0
    %1615 = vmatprep.subr.mxu0 0.0
    %1616 = vmatpush1.msra.mxu0 0.0
    %1617 = vmatprep.subr.mxu0 0.0
    %1618 = vmatpush1.msra.mxu0 0.0
    %1619 = vmatprep.subr.mxu0 0.0
    %1620 = vmatpush1.msra.mxu0 0.0
    %1621 = vmatprep.mubr.f32.mxu0 0.0
    %1622 = vmatmul.mubr.f32.gmra.mrb[0].mxu0 %v1485
    %v1623 = vpop.f32.mrb[0].mxu0
    %v1624 = vadd.f32 %v237, %v1623
    %v1625 = vpop.f32.mrb[0].mxu0
    %1626 = vdwg.mxu0
    %1627 = vmatprep.subr.mxu0 0.0
    %1628 = vmatpush1.msra.mxu0 %v310
    %1629 = vmatprep.subr.mxu0 0.0
    %1630 = vmatpush1.msra.mxu0 %v312
    %1631 = vmatprep.subr.mxu0 0.0
    %1632 = vmatpush1.msra.mxu0 %v314
    %1633 = vmatprep.subr.mxu0 0.0
    %1634 = vmatpush1.msra.mxu0 %v316
    %1635 = vmatprep.subr.mxu0 0.0
    %1636 = vmatpush1.msra.mxu0 0.0
    %1637 = vmatprep.subr.mxu0 0.0
    %1638 = vmatpush1.msra.mxu0 0.0
    %1639 = vmatprep.subr.mxu0 0.0
    %1640 = vmatpush1.msra.mxu0 0.0
    %1641 = vmatprep.subr.mxu0 0.0
    %1642 = vmatpush1.msra.mxu0 0.0
    %1643 = vmatprep.subr.mxu0 0.0
    %1644 = vmatpush1.msra.mxu0 0.0
    %1645 = vmatprep.subr.mxu0 0.0
    %1646 = vmatpush1.msra.mxu0 0.0
    %1647 = vmatprep.subr.mxu0 0.0
    %1648 = vmatpush1.msra.mxu0 0.0
    %1649 = vmatprep.subr.mxu0 0.0
    %1650 = vmatpush1.msra.mxu0 0.0
    %1651 = vmatprep.subr.mxu0 0.0
    %1652 = vmatpush1.msra.mxu0 0.0
    %1653 = vmatprep.subr.mxu0 0.0
    %1654 = vmatpush1.msra.mxu0 0.0
    %1655 = vmatprep.subr.mxu0 0.0
    %1656 = vmatpush1.msra.mxu0 0.0
    %1657 = vmatprep.subr.mxu0 0.0
    %1658 = vmatpush1.msra.mxu0 0.0
    %1659 = vmatprep.subr.mxu0 0.0
    %1660 = vmatpush1.msra.mxu0 0.0
    %1661 = vmatprep.subr.mxu0 0.0
    %1662 = vmatpush1.msra.mxu0 0.0
    %1663 = vmatprep.subr.mxu0 0.0
    %1664 = vmatpush1.msra.mxu0 0.0
    %1665 = vmatprep.subr.mxu0 0.0
    %1666 = vmatpush1.msra.mxu0 0.0
    %1667 = vmatprep.subr.mxu0 0.0
    %1668 = vmatpush1.msra.mxu0 0.0
    %1669 = vmatprep.subr.mxu0 0.0
    %1670 = vmatpush1.msra.mxu0 0.0
    %1671 = vmatprep.subr.mxu0 0.0
    %1672 = vmatpush1.msra.mxu0 0.0
    %1673 = vmatprep.subr.mxu0 0.0
    %1674 = vmatpush1.msra.mxu0 0.0
    %1675 = vmatprep.subr.mxu0 0.0
    %1676 = vmatpush1.msra.mxu0 0.0
    %1677 = vmatprep.subr.mxu0 0.0
    %1678 = vmatpush1.msra.mxu0 0.0
    %1679 = vmatprep.subr.mxu0 0.0
    %1680 = vmatpush1.msra.mxu0 0.0
    %1681 = vmatprep.subr.mxu0 0.0
    %1682 = vmatpush1.msra.mxu0 0.0
    %1683 = vmatprep.subr.mxu0 0.0
    %1684 = vmatpush1.msra.mxu0 0.0
    %1685 = vmatprep.subr.mxu0 0.0
    %1686 = vmatpush1.msra.mxu0 0.0
    %1687 = vmatprep.subr.mxu0 0.0
    %1688 = vmatpush1.msra.mxu0 0.0
    %1689 = vmatprep.subr.mxu0 0.0
    %1690 = vmatpush1.msra.mxu0 0.0
    %1691 = vmatprep.mubr.f32.mxu0 0.0
    %1692 = vmatmul.mubr.f32.gmra.mrb[0].mxu0 %v1485
    %v1693 = vpop.f32.mrb[0].mxu0
    %v1694 = vadd.f32 %v322, %v1693
    %v1695 = vpop.f32.mrb[0].mxu0
    %1696 = vdwg.mxu0
    %v1698 = vrot.slane %v1554, 3
    %v1700 = vadd.f32 %v134, %v1698
    %v1701 = vxor.u32 %v1700, 2147483648
    %v1702 = vmul.f32 %v1701, 1.442695
    %v1703 = vpow.pop %v1702
    %v1704 = vadd.f32 %v1703, 1.0
    %v1705 = vrcp.pop %v1704
    %v1706 = vmul.f32 1.0, %v1705
    %v1708 = vrot.slane %v1624, 3
    %1709 = vrot.lane.b32.xlu0 %v1708, 32
    %v1710 = vpop.permute.xlu0 %1709
    %v1712 = vadd.f32 %v134, %v1710
    %v1713 = vxor.u32 %v1712, 2147483648
    %v1714 = vmul.f32 %v1713, 1.442695
    %v1715 = vpow.pop %v1714
    %v1716 = vadd.f32 %v1715, 1.0
    %v1717 = vrcp.pop %v1716
    %v1718 = vmul.f32 1.0, %v1717
    %v1720 = vrot.slane %v1694, 3
    %v1722 = vmul.f32 %v1706, %v1720
    %1724 = vrot.lane.b32.xlu0 %v1722, 64
    %v1725 = vpop.permute.xlu0 %1724
    %v1727 = vadd.f32 %v134, %v1725
    %v1728 = vtanh.pop %v1727
    %v1729 = vsub.f32 1.0, %v1718
    %1731 = vrot.lane.b32.xlu0 %v1728, 96
    %v1732 = vpop.permute.xlu0 %1731
    %v1734 = vmul.f32 %v1729, %v1732
    %v1735 = vrot.slane %v1475, 7
    %v1737 = vmul.f32 %v1718, %v1735
    %v1738 = vadd.f32 %v1734, %v1737
    %1740 = vrot.lane.b32.xlu0 %v1738, 96
    %v1741 = vpop.permute.xlu0 %1740
    %vm1743 = vcmask 259077
    %1744 = vst.msk [vmem:[#allocation2] sm:$0x20] %vm1743, %v1741
    %v1745 = vrot.slane %v1738, 5
    %1746 = vrot.lane.b32.xlu0 %v1745, 96
    %v1747 = vpop.permute.xlu0 %1746
    %v1748 = vsel %vm63, %v1747, 0
    %1750 = vmatprep.subr.mxu0 0.0
    %1751 = vmatpush1.msra.mxu0 %v137
    %1752 = vmatprep.subr.mxu0 0.0
    %1753 = vmatpush1.msra.mxu0 %v138
    %1754 = vmatprep.subr.mxu0 0.0
    %1755 = vmatpush1.msra.mxu0 %v139
    %1756 = vmatprep.subr.mxu0 0.0
    %1757 = vmatpush1.msra.mxu0 %v140
    %1758 = vmatprep.subr.mxu0 0.0
    %1759 = vmatpush1.msra.mxu0 0.0
    %1760 = vmatprep.subr.mxu0 0.0
    %1761 = vmatpush1.msra.mxu0 0.0
    %1762 = vmatprep.subr.mxu0 0.0
    %1763 = vmatpush1.msra.mxu0 0.0
    %1764 = vmatprep.subr.mxu0 0.0
    %1765 = vmatpush1.msra.mxu0 0.0
    %1766 = vmatprep.subr.mxu0 0.0
    %1767 = vmatpush1.msra.mxu0 0.0
    %1768 = vmatprep.subr.mxu0 0.0
    %1769 = vmatpush1.msra.mxu0 0.0
    %1770 = vmatprep.subr.mxu0 0.0
    %1771 = vmatpush1.msra.mxu0 0.0
    %1772 = vmatprep.subr.mxu0 0.0
    %1773 = vmatpush1.msra.mxu0 0.0
    %1774 = vmatprep.subr.mxu0 0.0
    %1775 = vmatpush1.msra.mxu0 0.0
    %1776 = vmatprep.subr.mxu0 0.0
    %1777 = vmatpush1.msra.mxu0 0.0
    %1778 = vmatprep.subr.mxu0 0.0
    %1779 = vmatpush1.msra.mxu0 0.0
    %1780 = vmatprep.subr.mxu0 0.0
    %1781 = vmatpush1.msra.mxu0 0.0
    %1782 = vmatprep.subr.mxu0 0.0
    %1783 = vmatpush1.msra.mxu0 0.0
    %1784 = vmatprep.subr.mxu0 0.0
    %1785 = vmatpush1.msra.mxu0 0.0
    %1786 = vmatprep.subr.mxu0 0.0
    %1787 = vmatpush1.msra.mxu0 0.0
    %1788 = vmatprep.subr.mxu0 0.0
    %1789 = vmatpush1.msra.mxu0 0.0
    %1790 = vmatprep.subr.mxu0 0.0
    %1791 = vmatpush1.msra.mxu0 0.0
    %1792 = vmatprep.subr.mxu0 0.0
    %1793 = vmatpush1.msra.mxu0 0.0
    %1794 = vmatprep.subr.mxu0 0.0
    %1795 = vmatpush1.msra.mxu0 0.0
    %1796 = vmatprep.subr.mxu0 0.0
    %1797 = vmatpush1.msra.mxu0 0.0
    %1798 = vmatprep.subr.mxu0 0.0
    %1799 = vmatpush1.msra.mxu0 0.0
    %1800 = vmatprep.subr.mxu0 0.0
    %1801 = vmatpush1.msra.mxu0 0.0
    %1802 = vmatprep.subr.mxu0 0.0
    %1803 = vmatpush1.msra.mxu0 0.0
    %1804 = vmatprep.subr.mxu0 0.0
    %1805 = vmatpush1.msra.mxu0 0.0
    %1806 = vmatprep.subr.mxu0 0.0
    %1807 = vmatpush1.msra.mxu0 0.0
    %1808 = vmatprep.subr.mxu0 0.0
    %1809 = vmatpush1.msra.mxu0 0.0
    %1810 = vmatprep.subr.mxu0 0.0
    %1811 = vmatpush1.msra.mxu0 0.0
    %1812 = vmatprep.subr.mxu0 0.0
    %1813 = vmatpush1.msra.mxu0 0.0
    %1814 = vmatprep.mubr.f32.mxu0 0.0
    %1815 = vmatmul.mubr.f32.gmra.mrb[0].mxu0 %v1748
    %v1816 = vpop.f32.mrb[0].mxu0
    %v1817 = vadd.f32 %v141, %v1816
    %v1818 = vpop.f32.mrb[0].mxu0
    %1819 = vdwg.mxu0
    %1820 = vmatprep.subr.mxu0 0.0
    %1821 = vmatpush1.msra.mxu0 %v220
    %1822 = vmatprep.subr.mxu0 0.0
    %1823 = vmatpush1.msra.mxu0 %v222
    %1824 = vmatprep.subr.mxu0 0.0
    %1825 = vmatpush1.msra.mxu0 %v224
    %1826 = vmatprep.subr.mxu0 0.0
    %1827 = vmatpush1.msra.mxu0 %v226
    %1828 = vmatprep.subr.mxu0 0.0
    %1829 = vmatpush1.msra.mxu0 0.0
    %1830 = vmatprep.subr.mxu0 0.0
    %1831 = vmatpush1.msra.mxu0 0.0
    %1832 = vmatprep.subr.mxu0 0.0
    %1833 = vmatpush1.msra.mxu0 0.0
    %1834 = vmatprep.subr.mxu0 0.0
    %1835 = vmatpush1.msra.mxu0 0.0
    %1836 = vmatprep.subr.mxu0 0.0
    %1837 = vmatpush1.msra.mxu0 0.0
    %1838 = vmatprep.subr.mxu0 0.0
    %1839 = vmatpush1.msra.mxu0 0.0
    %1840 = vmatprep.subr.mxu0 0.0
    %1841 = vmatpush1.msra.mxu0 0.0
    %1842 = vmatprep.subr.mxu0 0.0
    %1843 = vmatpush1.msra.mxu0 0.0
    %1844 = vmatprep.subr.mxu0 0.0
    %1845 = vmatpush1.msra.mxu0 0.0
    %1846 = vmatprep.subr.mxu0 0.0
    %1847 = vmatpush1.msra.mxu0 0.0
    %1848 = vmatprep.subr.mxu0 0.0
    %1849 = vmatpush1.msra.mxu0 0.0
    %1850 = vmatprep.subr.mxu0 0.0
    %1851 = vmatpush1.msra.mxu0 0.0
    %1852 = vmatprep.subr.mxu0 0.0
    %1853 = vmatpush1.msra.mxu0 0.0
    %1854 = vmatprep.subr.mxu0 0.0
    %1855 = vmatpush1.msra.mxu0 0.0
    %1856 = vmatprep.subr.mxu0 0.0
    %1857 = vmatpush1.msra.mxu0 0.0
    %1858 = vmatprep.subr.mxu0 0.0
    %1859 = vmatpush1.msra.mxu0 0.0
    %1860 = vmatprep.subr.mxu0 0.0
    %1861 = vmatpush1.msra.mxu0 0.0
    %1862 = vmatprep.subr.mxu0 0.0
    %1863 = vmatpush1.msra.mxu0 0.0
    %1864 = vmatprep.subr.mxu0 0.0
    %1865 = vmatpush1.msra.mxu0 0.0
    %1866 = vmatprep.subr.mxu0 0.0
    %1867 = vmatpush1.msra.mxu0 0.0
    %1868 = vmatprep.subr.mxu0 0.0
    %1869 = vmatpush1.msra.mxu0 0.0
    %1870 = vmatprep.subr.mxu0 0.0
    %1871 = vmatpush1.msra.mxu0 0.0
    %1872 = vmatprep.subr.mxu0 0.0
    %1873 = vmatpush1.msra.mxu0 0.0
    %1874 = vmatprep.subr.mxu0 0.0
    %1875 = vmatpush1.msra.mxu0 0.0
    %1876 = vmatprep.subr.mxu0 0.0
    %1877 = vmatpush1.msra.mxu0 0.0
    %1878 = vmatprep.subr.mxu0 0.0
    %1879 = vmatpush1.msra.mxu0 0.0
    %1880 = vmatprep.subr.mxu0 0.0
    %1881 = vmatpush1.msra.mxu0 0.0
    %1882 = vmatprep.subr.mxu0 0.0
    %1883 = vmatpush1.msra.mxu0 0.0
    %1884 = vmatprep.mubr.f32.mxu0 0.0
    %1885 = vmatmul.mubr.f32.gmra.mrb[0].mxu0 %v1748
    %v1886 = vpop.f32.mrb[0].mxu0
    %v1887 = vadd.f32 %v237, %v1886
    %v1888 = vpop.f32.mrb[0].mxu0
    %1889 = vdwg.mxu0
    %1890 = vmatprep.subr.mxu0 0.0
    %1891 = vmatpush1.msra.mxu0 %v310
    %1892 = vmatprep.subr.mxu0 0.0
    %1893 = vmatpush1.msra.mxu0 %v312
    %1894 = vmatprep.subr.mxu0 0.0
    %1895 = vmatpush1.msra.mxu0 %v314
    %1896 = vmatprep.subr.mxu0 0.0
    %1897 = vmatpush1.msra.mxu0 %v316
    %1898 = vmatprep.subr.mxu0 0.0
    %1899 = vmatpush1.msra.mxu0 0.0
    %1900 = vmatprep.subr.mxu0 0.0
    %1901 = vmatpush1.msra.mxu0 0.0
    %1902 = vmatprep.subr.mxu0 0.0
    %1903 = vmatpush1.msra.mxu0 0.0
    %1904 = vmatprep.subr.mxu0 0.0
    %1905 = vmatpush1.msra.mxu0 0.0
    %1906 = vmatprep.subr.mxu0 0.0
    %1907 = vmatpush1.msra.mxu0 0.0
    %1908 = vmatprep.subr.mxu0 0.0
    %1909 = vmatpush1.msra.mxu0 0.0
    %1910 = vmatprep.subr.mxu0 0.0
    %1911 = vmatpush1.msra.mxu0 0.0
    %1912 = vmatprep.subr.mxu0 0.0
    %1913 = vmatpush1.msra.mxu0 0.0
    %1914 = vmatprep.subr.mxu0 0.0
    %1915 = vmatpush1.msra.mxu0 0.0
    %1916 = vmatprep.subr.mxu0 0.0
    %1917 = vmatpush1.msra.mxu0 0.0
    %1918 = vmatprep.subr.mxu0 0.0
    %1919 = vmatpush1.msra.mxu0 0.0
    %1920 = vmatprep.subr.mxu0 0.0
    %1921 = vmatpush1.msra.mxu0 0.0
    %1922 = vmatprep.subr.mxu0 0.0
    %1923 = vmatpush1.msra.mxu0 0.0
    %1924 = vmatprep.subr.mxu0 0.0
    %1925 = vmatpush1.msra.mxu0 0.0
    %1926 = vmatprep.subr.mxu0 0.0
    %1927 = vmatpush1.msra.mxu0 0.0
    %1928 = vmatprep.subr.mxu0 0.0
    %1929 = vmatpush1.msra.mxu0 0.0
    %1930 = vmatprep.subr.mxu0 0.0
    %1931 = vmatpush1.msra.mxu0 0.0
    %1932 = vmatprep.subr.mxu0 0.0
    %1933 = vmatpush1.msra.mxu0 0.0
    %1934 = vmatprep.subr.mxu0 0.0
    %1935 = vmatpush1.msra.mxu0 0.0
    %1936 = vmatprep.subr.mxu0 0.0
    %1937 = vmatpush1.msra.mxu0 0.0
    %1938 = vmatprep.subr.mxu0 0.0
    %1939 = vmatpush1.msra.mxu0 0.0
    %1940 = vmatprep.subr.mxu0 0.0
    %1941 = vmatpush1.msra.mxu0 0.0
    %1942 = vmatprep.subr.mxu0 0.0
    %1943 = vmatpush1.msra.mxu0 0.0
    %1944 = vmatprep.subr.mxu0 0.0
    %1945 = vmatpush1.msra.mxu0 0.0
    %1946 = vmatprep.subr.mxu0 0.0
    %1947 = vmatpush1.msra.mxu0 0.0
    %1948 = vmatprep.subr.mxu0 0.0
    %1949 = vmatpush1.msra.mxu0 0.0
    %1950 = vmatprep.subr.mxu0 0.0
    %1951 = vmatpush1.msra.mxu0 0.0
    %1952 = vmatprep.subr.mxu0 0.0
    %1953 = vmatpush1.msra.mxu0 0.0
    %1954 = vmatprep.mubr.f32.mxu0 0.0
    %1955 = vmatmul.mubr.f32.gmra.mrb[0].mxu0 %v1748
    %v1956 = vpop.f32.mrb[0].mxu0
    %v1957 = vadd.f32 %v322, %v1956
    %v1958 = vpop.f32.mrb[0].mxu0
    %1959 = vdwg.mxu0
    %v1961 = vrot.slane %v1817, 2
    %v1963 = vadd.f32 %v134, %v1961
    %v1964 = vxor.u32 %v1963, 2147483648
    %v1965 = vmul.f32 %v1964, 1.442695
    %v1966 = vpow.pop %v1965
    %v1967 = vadd.f32 %v1966, 1.0
    %v1968 = vrcp.pop %v1967
    %v1969 = vmul.f32 1.0, %v1968
    %v1971 = vrot.slane %v1887, 2
    %1972 = vrot.lane.b32.xlu0 %v1971, 32
    %v1973 = vpop.permute.xlu0 %1972
    %v1975 = vadd.f32 %v134, %v1973
    %v1976 = vxor.u32 %v1975, 2147483648
    %v1977 = vmul.f32 %v1976, 1.442695
    %v1978 = vpow.pop %v1977
    %v1979 = vadd.f32 %v1978, 1.0
    %v1980 = vrcp.pop %v1979
    %v1981 = vmul.f32 1.0, %v1980
    %v1983 = vrot.slane %v1957, 2
    %v1985 = vmul.f32 %v1969, %v1983
    %1987 = vrot.lane.b32.xlu0 %v1985, 64
    %v1988 = vpop.permute.xlu0 %1987
    %v1990 = vadd.f32 %v134, %v1988
    %v1991 = vtanh.pop %v1990
    %v1992 = vsub.f32 1.0, %v1981
    %1994 = vrot.lane.b32.xlu0 %v1991, 96
    %v1995 = vpop.permute.xlu0 %1994
    %v1997 = vmul.f32 %v1992, %v1995
    %v1998 = vrot.slane %v1738, 7
    %v2000 = vmul.f32 %v1981, %v1998
    %v2001 = vadd.f32 %v1997, %v2000
    %2003 = vrot.lane.b32.xlu0 %v2001, 96
    %v2004 = vpop.permute.xlu0 %2003
    %vm2006 = vcmask 260102
    %2007 = vst.msk [vmem:[#allocation2] sm:$0x40] %vm2006, %v2004
    %v2008 = vrot.slane %v2001, 6
    %2009 = vrot.lane.b32.xlu0 %v2008, 96
    %v2010 = vpop.permute.xlu0 %2009
    %v2011 = vsel %vm63, %v2010, 0
    %2013 = vmatprep.subr.mxu0 0.0
    %2014 = vmatpush1.msra.mxu0 %v137
    %2015 = vmatprep.subr.mxu0 0.0
    %2016 = vmatpush1.msra.mxu0 %v138
    %2017 = vmatprep.subr.mxu0 0.0
    %2018 = vmatpush1.msra.mxu0 %v139
    %2019 = vmatprep.subr.mxu0 0.0
    %2020 = vmatpush1.msra.mxu0 %v140
    %2021 = vmatprep.subr.mxu0 0.0
    %2022 = vmatpush1.msra.mxu0 0.0
    %2023 = vmatprep.subr.mxu0 0.0
    %2024 = vmatpush1.msra.mxu0 0.0
    %2025 = vmatprep.subr.mxu0 0.0
    %2026 = vmatpush1.msra.mxu0 0.0
    %2027 = vmatprep.subr.mxu0 0.0
    %2028 = vmatpush1.msra.mxu0 0.0
    %2029 = vmatprep.subr.mxu0 0.0
    %2030 = vmatpush1.msra.mxu0 0.0
    %2031 = vmatprep.subr.mxu0 0.0
    %2032 = vmatpush1.msra.mxu0 0.0
    %2033 = vmatprep.subr.mxu0 0.0
    %2034 = vmatpush1.msra.mxu0 0.0
    %2035 = vmatprep.subr.mxu0 0.0
    %2036 = vmatpush1.msra.mxu0 0.0
    %2037 = vmatprep.subr.mxu0 0.0
    %2038 = vmatpush1.msra.mxu0 0.0
    %2039 = vmatprep.subr.mxu0 0.0
    %2040 = vmatpush1.msra.mxu0 0.0
    %2041 = vmatprep.subr.mxu0 0.0
    %2042 = vmatpush1.msra.mxu0 0.0
    %2043 = vmatprep.subr.mxu0 0.0
    %2044 = vmatpush1.msra.mxu0 0.0
    %2045 = vmatprep.subr.mxu0 0.0
    %2046 = vmatpush1.msra.mxu0 0.0
    %2047 = vmatprep.subr.mxu0 0.0
    %2048 = vmatpush1.msra.mxu0 0.0
    %2049 = vmatprep.subr.mxu0 0.0
    %2050 = vmatpush1.msra.mxu0 0.0
    %2051 = vmatprep.subr.mxu0 0.0
    %2052 = vmatpush1.msra.mxu0 0.0
    %2053 = vmatprep.subr.mxu0 0.0
    %2054 = vmatpush1.msra.mxu0 0.0
    %2055 = vmatprep.subr.mxu0 0.0
    %2056 = vmatpush1.msra.mxu0 0.0
    %2057 = vmatprep.subr.mxu0 0.0
    %2058 = vmatpush1.msra.mxu0 0.0
    %2059 = vmatprep.subr.mxu0 0.0
    %2060 = vmatpush1.msra.mxu0 0.0
    %2061 = vmatprep.subr.mxu0 0.0
    %2062 = vmatpush1.msra.mxu0 0.0
    %2063 = vmatprep.subr.mxu0 0.0
    %2064 = vmatpush1.msra.mxu0 0.0
    %2065 = vmatprep.subr.mxu0 0.0
    %2066 = vmatpush1.msra.mxu0 0.0
    %2067 = vmatprep.subr.mxu0 0.0
    %2068 = vmatpush1.msra.mxu0 0.0
    %2069 = vmatprep.subr.mxu0 0.0
    %2070 = vmatpush1.msra.mxu0 0.0
    %2071 = vmatprep.subr.mxu0 0.0
    %2072 = vmatpush1.msra.mxu0 0.0
    %2073 = vmatprep.subr.mxu0 0.0
    %2074 = vmatpush1.msra.mxu0 0.0
    %2075 = vmatprep.subr.mxu0 0.0
    %2076 = vmatpush1.msra.mxu0 0.0
    %2077 = vmatprep.mubr.f32.mxu0 0.0
    %2078 = vmatmul.mubr.f32.gmra.mrb[0].mxu0 %v2011
    %v2079 = vpop.f32.mrb[0].mxu0
    %v2080 = vadd.f32 %v141, %v2079
    %v2081 = vpop.f32.mrb[0].mxu0
    %2082 = vdwg.mxu0
    %2083 = vmatprep.subr.mxu0 0.0
    %2084 = vmatpush1.msra.mxu0 %v220
    %2085 = vmatprep.subr.mxu0 0.0
    %2086 = vmatpush1.msra.mxu0 %v222
    %2087 = vmatprep.subr.mxu0 0.0
    %2088 = vmatpush1.msra.mxu0 %v224
    %2089 = vmatprep.subr.mxu0 0.0
    %2090 = vmatpush1.msra.mxu0 %v226
    %2091 = vmatprep.subr.mxu0 0.0
    %2092 = vmatpush1.msra.mxu0 0.0
    %2093 = vmatprep.subr.mxu0 0.0
    %2094 = vmatpush1.msra.mxu0 0.0
    %2095 = vmatprep.subr.mxu0 0.0
    %2096 = vmatpush1.msra.mxu0 0.0
    %2097 = vmatprep.subr.mxu0 0.0
    %2098 = vmatpush1.msra.mxu0 0.0
    %2099 = vmatprep.subr.mxu0 0.0
    %2100 = vmatpush1.msra.mxu0 0.0
    %2101 = vmatprep.subr.mxu0 0.0
    %2102 = vmatpush1.msra.mxu0 0.0
    %2103 = vmatprep.subr.mxu0 0.0
    %2104 = vmatpush1.msra.mxu0 0.0
    %2105 = vmatprep.subr.mxu0 0.0
    %2106 = vmatpush1.msra.mxu0 0.0
    %2107 = vmatprep.subr.mxu0 0.0
    %2108 = vmatpush1.msra.mxu0 0.0
    %2109 = vmatprep.subr.mxu0 0.0
    %2110 = vmatpush1.msra.mxu0 0.0
    %2111 = vmatprep.subr.mxu0 0.0
    %2112 = vmatpush1.msra.mxu0 0.0
    %2113 = vmatprep.subr.mxu0 0.0
    %2114 = vmatpush1.msra.mxu0 0.0
    %2115 = vmatprep.subr.mxu0 0.0
    %2116 = vmatpush1.msra.mxu0 0.0
    %2117 = vmatprep.subr.mxu0 0.0
    %2118 = vmatpush1.msra.mxu0 0.0
    %2119 = vmatprep.subr.mxu0 0.0
    %2120 = vmatpush1.msra.mxu0 0.0
    %2121 = vmatprep.subr.mxu0 0.0
    %2122 = vmatpush1.msra.mxu0 0.0
    %2123 = vmatprep.subr.mxu0 0.0
    %2124 = vmatpush1.msra.mxu0 0.0
    %2125 = vmatprep.subr.mxu0 0.0
    %2126 = vmatpush1.msra.mxu0 0.0
    %2127 = vmatprep.subr.mxu0 0.0
    %2128 = vmatpush1.msra.mxu0 0.0
    %2129 = vmatprep.subr.mxu0 0.0
    %2130 = vmatpush1.msra.mxu0 0.0
    %2131 = vmatprep.subr.mxu0 0.0
    %2132 = vmatpush1.msra.mxu0 0.0
    %2133 = vmatprep.subr.mxu0 0.0
    %2134 = vmatpush1.msra.mxu0 0.0
    %2135 = vmatprep.subr.mxu0 0.0
    %2136 = vmatpush1.msra.mxu0 0.0
    %2137 = vmatprep.subr.mxu0 0.0
    %2138 = vmatpush1.msra.mxu0 0.0
    %2139 = vmatprep.subr.mxu0 0.0
    %2140 = vmatpush1.msra.mxu0 0.0
    %2141 = vmatprep.subr.mxu0 0.0
    %2142 = vmatpush1.msra.mxu0 0.0
    %2143 = vmatprep.subr.mxu0 0.0
    %2144 = vmatpush1.msra.mxu0 0.0
    %2145 = vmatprep.subr.mxu0 0.0
    %2146 = vmatpush1.msra.mxu0 0.0
    %2147 = vmatprep.mubr.f32.mxu0 0.0
    %2148 = vmatmul.mubr.f32.gmra.mrb[0].mxu0 %v2011
    %v2149 = vpop.f32.mrb[0].mxu0
    %v2150 = vadd.f32 %v237, %v2149
    %v2151 = vpop.f32.mrb[0].mxu0
    %2152 = vdwg.mxu0
    %2153 = vmatprep.subr.mxu0 0.0
    %2154 = vmatpush1.msra.mxu0 %v310
    %2155 = vmatprep.subr.mxu0 0.0
    %2156 = vmatpush1.msra.mxu0 %v312
    %2157 = vmatprep.subr.mxu0 0.0
    %2158 = vmatpush1.msra.mxu0 %v314
    %2159 = vmatprep.subr.mxu0 0.0
    %2160 = vmatpush1.msra.mxu0 %v316
    %2161 = vmatprep.subr.mxu0 0.0
    %2162 = vmatpush1.msra.mxu0 0.0
    %2163 = vmatprep.subr.mxu0 0.0
    %2164 = vmatpush1.msra.mxu0 0.0
    %2165 = vmatprep.subr.mxu0 0.0
    %2166 = vmatpush1.msra.mxu0 0.0
    %2167 = vmatprep.subr.mxu0 0.0
    %2168 = vmatpush1.msra.mxu0 0.0
    %2169 = vmatprep.subr.mxu0 0.0
    %2170 = vmatpush1.msra.mxu0 0.0
    %2171 = vmatprep.subr.mxu0 0.0
    %2172 = vmatpush1.msra.mxu0 0.0
    %2173 = vmatprep.subr.mxu0 0.0
    %2174 = vmatpush1.msra.mxu0 0.0
    %2175 = vmatprep.subr.mxu0 0.0
    %2176 = vmatpush1.msra.mxu0 0.0
    %2177 = vmatprep.subr.mxu0 0.0
    %2178 = vmatpush1.msra.mxu0 0.0
    %2179 = vmatprep.subr.mxu0 0.0
    %2180 = vmatpush1.msra.mxu0 0.0
    %2181 = vmatprep.subr.mxu0 0.0
    %2182 = vmatpush1.msra.mxu0 0.0
    %2183 = vmatprep.subr.mxu0 0.0
    %2184 = vmatpush1.msra.mxu0 0.0
    %2185 = vmatprep.subr.mxu0 0.0
    %2186 = vmatpush1.msra.mxu0 0.0
    %2187 = vmatprep.subr.mxu0 0.0
    %2188 = vmatpush1.msra.mxu0 0.0
    %2189 = vmatprep.subr.mxu0 0.0
    %2190 = vmatpush1.msra.mxu0 0.0
    %2191 = vmatprep.subr.mxu0 0.0
    %2192 = vmatpush1.msra.mxu0 0.0
    %2193 = vmatprep.subr.mxu0 0.0
    %2194 = vmatpush1.msra.mxu0 0.0
    %2195 = vmatprep.subr.mxu0 0.0
    %2196 = vmatpush1.msra.mxu0 0.0
    %2197 = vmatprep.subr.mxu0 0.0
    %2198 = vmatpush1.msra.mxu0 0.0
    %2199 = vmatprep.subr.mxu0 0.0
    %2200 = vmatpush1.msra.mxu0 0.0
    %2201 = vmatprep.subr.mxu0 0.0
    %2202 = vmatpush1.msra.mxu0 0.0
    %2203 = vmatprep.subr.mxu0 0.0
    %2204 = vmatpush1.msra.mxu0 0.0
    %2205 = vmatprep.subr.mxu0 0.0
    %2206 = vmatpush1.msra.mxu0 0.0
    %2207 = vmatprep.subr.mxu0 0.0
    %2208 = vmatpush1.msra.mxu0 0.0
    %2209 = vmatprep.subr.mxu0 0.0
    %2210 = vmatpush1.msra.mxu0 0.0
    %2211 = vmatprep.subr.mxu0 0.0
    %2212 = vmatpush1.msra.mxu0 0.0
    %2213 = vmatprep.subr.mxu0 0.0
    %2214 = vmatpush1.msra.mxu0 0.0
    %2215 = vmatprep.subr.mxu0 0.0
    %2216 = vmatpush1.msra.mxu0 0.0
    %2217 = vmatprep.mubr.f32.mxu0 0.0
    %2218 = vmatmul.mubr.f32.gmra.mrb[0].mxu0 %v2011
    %v2219 = vpop.f32.mrb[0].mxu0
    %v2220 = vadd.f32 %v322, %v2219
    %v2221 = vpop.f32.mrb[0].mxu0
    %2222 = vdwg.mxu0
    %v2224 = vrot.slane %v2080, 1
    %v2226 = vadd.f32 %v134, %v2224
    %v2227 = vxor.u32 %v2226, 2147483648
    %v2228 = vmul.f32 %v2227, 1.442695
    %v2229 = vpow.pop %v2228
    %v2230 = vadd.f32 %v2229, 1.0
    %v2231 = vrcp.pop %v2230
    %v2232 = vmul.f32 1.0, %v2231
    %v2234 = vrot.slane %v2150, 1
    %2235 = vrot.lane.b32.xlu0 %v2234, 32
    %v2236 = vpop.permute.xlu0 %2235
    %v2238 = vadd.f32 %v134, %v2236
    %v2239 = vxor.u32 %v2238, 2147483648
    %v2240 = vmul.f32 %v2239, 1.442695
    %v2241 = vpow.pop %v2240
    %v2242 = vadd.f32 %v2241, 1.0
    %v2243 = vrcp.pop %v2242
    %v2244 = vmul.f32 1.0, %v2243
    %v2246 = vrot.slane %v2220, 1
    %v2248 = vmul.f32 %v2232, %v2246
    %2250 = vrot.lane.b32.xlu0 %v2248, 64
    %v2251 = vpop.permute.xlu0 %2250
    %v2253 = vadd.f32 %v134, %v2251
    %v2254 = vtanh.pop %v2253
    %v2255 = vsub.f32 1.0, %v2244
    %2257 = vrot.lane.b32.xlu0 %v2254, 96
    %v2258 = vpop.permute.xlu0 %2257
    %v2260 = vmul.f32 %v2255, %v2258
    %v2261 = vrot.slane %v2001, 7
    %v2263 = vmul.f32 %v2244, %v2261
    %v2264 = vadd.f32 %v2260, %v2263
    %2266 = vrot.lane.b32.xlu0 %v2264, 96
    %v2267 = vpop.permute.xlu0 %2266
    %vm2269 = vcmask 261127
    %2270 = vst.msk [vmem:[#allocation2] sm:$0x80] %vm2269, %v2267
    %v2271 = vld [vmem:[%s1] sm:$0xf]
    %v2272 = vld [vmem:[%s6] sm:$0xff]
    %v2273 = vld [vmem:[%s6 + $0x8] sm:$0xff]
    %v2274 = vld [vmem:[%s6 + $0x10] sm:$0xff]
    %v2275 = vld [vmem:[%s6 + $0x18] sm:$0xff]
    %v2276 = vld [vmem:[%s8] sm:$0x1]
    %v2278 = vlaneseq
    %v2279 = vshrl.u32 %v2278, 7
    %v2280 = vsub.s32 0, %v2279
    %v2281 = vrot.slane %v2276, %v2280
    %v2284 = vsel %vm63, %v2271, 0
    %2286 = vmatprep.subr.mxu0 0.0
    %2287 = vmatpush1.msra.mxu0 %v2272
    %2288 = vmatprep.subr.mxu0 0.0
    %2289 = vmatpush1.msra.mxu0 %v2273
    %2290 = vmatprep.subr.mxu0 0.0
    %2291 = vmatpush1.msra.mxu0 %v2274
    %2292 = vmatprep.subr.mxu0 0.0
    %2293 = vmatpush1.msra.mxu0 %v2275
    %2294 = vmatprep.subr.mxu0 0.0
    %2295 = vmatpush1.msra.mxu0 0.0
    %2296 = vmatprep.subr.mxu0 0.0
    %2297 = vmatpush1.msra.mxu0 0.0
    %2298 = vmatprep.subr.mxu0 0.0
    %2299 = vmatpush1.msra.mxu0 0.0
    %2300 = vmatprep.subr.mxu0 0.0
    %2301 = vmatpush1.msra.mxu0 0.0
    %2302 = vmatprep.subr.mxu0 0.0
    %2303 = vmatpush1.msra.mxu0 0.0
    %2304 = vmatprep.subr.mxu0 0.0
    %2305 = vmatpush1.msra.mxu0 0.0
    %2306 = vmatprep.subr.mxu0 0.0
    %2307 = vmatpush1.msra.mxu0 0.0
    %2308 = vmatprep.subr.mxu0 0.0
    %2309 = vmatpush1.msra.mxu0 0.0
    %2310 = vmatprep.subr.mxu0 0.0
    %2311 = vmatpush1.msra.mxu0 0.0
    %2312 = vmatprep.subr.mxu0 0.0
    %2313 = vmatpush1.msra.mxu0 0.0
    %2314 = vmatprep.subr.mxu0 0.0
    %2315 = vmatpush1.msra.mxu0 0.0
    %2316 = vmatprep.subr.mxu0 0.0
    %2317 = vmatpush1.msra.mxu0 0.0
    %2318 = vmatprep.subr.mxu0 0.0
    %2319 = vmatpush1.msra.mxu0 0.0
    %2320 = vmatprep.subr.mxu0 0.0
    %2321 = vmatpush1.msra.mxu0 0.0
    %2322 = vmatprep.subr.mxu0 0.0
    %2323 = vmatpush1.msra.mxu0 0.0
    %2324 = vmatprep.subr.mxu0 0.0
    %2325 = vmatpush1.msra.mxu0 0.0
    %2326 = vmatprep.subr.mxu0 0.0
    %2327 = vmatpush1.msra.mxu0 0.0
    %2328 = vmatprep.subr.mxu0 0.0
    %2329 = vmatpush1.msra.mxu0 0.0
    %2330 = vmatprep.subr.mxu0 0.0
    %2331 = vmatpush1.msra.mxu0 0.0
    %2332 = vmatprep.subr.mxu0 0.0
    %2333 = vmatpush1.msra.mxu0 0.0
    %2334 = vmatprep.subr.mxu0 0.0
    %2335 = vmatpush1.msra.mxu0 0.0
    %2336 = vmatprep.subr.mxu0 0.0
    %2337 = vmatpush1.msra.mxu0 0.0
    %2338 = vmatprep.subr.mxu0 0.0
    %2339 = vmatpush1.msra.mxu0 0.0
    %2340 = vmatprep.subr.mxu0 0.0
    %2341 = vmatpush1.msra.mxu0 0.0
    %2342 = vmatprep.subr.mxu0 0.0
    %2343 = vmatpush1.msra.mxu0 0.0
    %2344 = vmatprep.subr.mxu0 0.0
    %2345 = vmatpush1.msra.mxu0 0.0
    %2346 = vmatprep.subr.mxu0 0.0
    %2347 = vmatpush1.msra.mxu0 0.0
    %2348 = vmatprep.subr.mxu0 0.0
    %2349 = vmatpush1.msra.mxu0 0.0
    %2350 = vmatprep.mubr.f32.mxu0 0.0
    %2351 = vmatmul.mubr.f32.gmra.mrb[0].mxu0 %v2284
    %v2352 = vpop.f32.mrb[0].mxu0
    %v2353 = vadd.f32 %v2281, %v2352
    %v2354 = vpop.f32.mrb[0].mxu0
    %2355 = vdwg.mxu0
    %v2356 = vld [vmem:[%s7] sm:$0xff]
    %v2357 = vld [vmem:[%s7 + $0x8] sm:$0xff]
    %v2358 = vld [vmem:[%s7 + $0x10] sm:$0xff]
    %v2359 = vld [vmem:[%s7 + $0x18] sm:$0xff]
    %v2360 = vld [vmem:[%s9] sm:$0x1]
    %2361 = vmatprep.subr.mxu0 0.0
    %2362 = vmatpush1.msra.mxu0 %v2356
    %2363 = vmatprep.subr.mxu0 0.0
    %2364 = vmatpush1.msra.mxu0 %v2357
    %2365 = vmatprep.subr.mxu0 0.0
    %2366 = vmatpush1.msra.mxu0 %v2358
    %2367 = vmatprep.subr.mxu0 0.0
    %2368 = vmatpush1.msra.mxu0 %v2359
    %2369 = vmatprep.subr.mxu0 0.0
    %2370 = vmatpush1.msra.mxu0 0.0
    %2371 = vmatprep.subr.mxu0 0.0
    %2372 = vmatpush1.msra.mxu0 0.0
    %2373 = vmatprep.subr.mxu0 0.0
    %2374 = vmatpush1.msra.mxu0 0.0
    %2375 = vmatprep.subr.mxu0 0.0
    %2376 = vmatpush1.msra.mxu0 0.0
    %2377 = vmatprep.subr.mxu0 0.0
    %2378 = vmatpush1.msra.mxu0 0.0
    %2379 = vmatprep.subr.mxu0 0.0
    %2380 = vmatpush1.msra.mxu0 0.0
    %2381 = vmatprep.subr.mxu0 0.0
    %2382 = vmatpush1.msra.mxu0 0.0
    %2383 = vmatprep.subr.mxu0 0.0
    %2384 = vmatpush1.msra.mxu0 0.0
    %2385 = vmatprep.subr.mxu0 0.0
    %2386 = vmatpush1.msra.mxu0 0.0
    %2387 = vmatprep.subr.mxu0 0.0
    %2388 = vmatpush1.msra.mxu0 0.0
    %2389 = vmatprep.subr.mxu0 0.0
    %2390 = vmatpush1.msra.mxu0 0.0
    %2391 = vmatprep.subr.mxu0 0.0
    %2392 = vmatpush1.msra.mxu0 0.0
    %2393 = vmatprep.subr.mxu0 0.0
    %2394 = vmatpush1.msra.mxu0 0.0
    %2395 = vmatprep.subr.mxu0 0.0
    %2396 = vmatpush1.msra.mxu0 0.0
    %2397 = vmatprep.subr.mxu0 0.0
    %2398 = vmatpush1.msra.mxu0 0.0
    %2399 = vmatprep.subr.mxu0 0.0
    %2400 = vmatpush1.msra.mxu0 0.0
    %2401 = vmatprep.subr.mxu0 0.0
    %2402 = vmatpush1.msra.mxu0 0.0
    %2403 = vmatprep.subr.mxu0 0.0
    %2404 = vmatpush1.msra.mxu0 0.0
    %2405 = vmatprep.subr.mxu0 0.0
    %2406 = vmatpush1.msra.mxu0 0.0
    %2407 = vmatprep.subr.mxu0 0.0
    %2408 = vmatpush1.msra.mxu0 0.0
    %2409 = vmatprep.subr.mxu0 0.0
    %2410 = vmatpush1.msra.mxu0 0.0
    %2411 = vmatprep.subr.mxu0 0.0
    %2412 = vmatpush1.msra.mxu0 0.0
    %2413 = vmatprep.subr.mxu0 0.0
    %2414 = vmatpush1.msra.mxu0 0.0
    %2415 = vmatprep.subr.mxu0 0.0
    %2416 = vmatpush1.msra.mxu0 0.0
    %2417 = vmatprep.subr.mxu0 0.0
    %2418 = vmatpush1.msra.mxu0 0.0
    %2419 = vmatprep.subr.mxu0 0.0
    %2420 = vmatpush1.msra.mxu0 0.0
    %2421 = vmatprep.subr.mxu0 0.0
    %2422 = vmatpush1.msra.mxu0 0.0
    %2423 = vmatprep.subr.mxu0 0.0
    %2424 = vmatpush1.msra.mxu0 0.0
    %2425 = vmatprep.mubr.f32.mxu0 0.0
    %2426 = vmatmul.mubr.f32.gmra.mrb[0].mxu0 %v143
    %v2427 = vpop.f32.mrb[0].mxu0
    %v2428 = vadd.f32 %v2360, %v2427
    %v2429 = vpop.f32.mrb[0].mxu0
    %2430 = vdwg.mxu0
    %2435 = vrot.lane.b32.xlu0 %v2356, 96
    %v2436 = vpop.permute.xlu0 %2435
    %2437 = vrot.lane.b32.xlu0 %v2357, 96
    %v2438 = vpop.permute.xlu0 %2437
    %2439 = vrot.lane.b32.xlu0 %v2358, 96
    %v2440 = vpop.permute.xlu0 %2439
    %2441 = vrot.lane.b32.xlu0 %v2359, 96
    %v2442 = vpop.permute.xlu0 %2441
    %v2448 = vlaneseq
    %v2449 = vshrl.u32 %v2448, 7
    %v2450 = vsub.s32 0, %v2449
    %v2451 = vrot.slane %v2360, %v2450
    %2452 = vrot.lane.b32.xlu0 %v2451, 96
    %v2453 = vpop.permute.xlu0 %2452
    %2455 = vmatprep.subr.mxu0 0.0
    %2456 = vmatpush1.msra.mxu0 %v2436
    %2457 = vmatprep.subr.mxu0 0.0
    %2458 = vmatpush1.msra.mxu0 %v2438
    %2459 = vmatprep.subr.mxu0 0.0
    %2460 = vmatpush1.msra.mxu0 %v2440
    %2461 = vmatprep.subr.mxu0 0.0
    %2462 = vmatpush1.msra.mxu0 %v2442
    %2463 = vmatprep.subr.mxu0 0.0
    %2464 = vmatpush1.msra.mxu0 0.0
    %2465 = vmatprep.subr.mxu0 0.0
    %2466 = vmatpush1.msra.mxu0 0.0
    %2467 = vmatprep.subr.mxu0 0.0
    %2468 = vmatpush1.msra.mxu0 0.0
    %2469 = vmatprep.subr.mxu0 0.0
    %2470 = vmatpush1.msra.mxu0 0.0
    %2471 = vmatprep.subr.mxu0 0.0
    %2472 = vmatpush1.msra.mxu0 0.0
    %2473 = vmatprep.subr.mxu0 0.0
    %2474 = vmatpush1.msra.mxu0 0.0
    %2475 = vmatprep.subr.mxu0 0.0
    %2476 = vmatpush1.msra.mxu0 0.0
    %2477 = vmatprep.subr.mxu0 0.0
    %2478 = vmatpush1.msra.mxu0 0.0
    %2479 = vmatprep.subr.mxu0 0.0
    %2480 = vmatpush1.msra.mxu0 0.0
    %2481 = vmatprep.subr.mxu0 0.0
    %2482 = vmatpush1.msra.mxu0 0.0
    %2483 = vmatprep.subr.mxu0 0.0
    %2484 = vmatpush1.msra.mxu0 0.0
    %2485 = vmatprep.subr.mxu0 0.0
    %2486 = vmatpush1.msra.mxu0 0.0
    %2487 = vmatprep.subr.mxu0 0.0
    %2488 = vmatpush1.msra.mxu0 0.0
    %2489 = vmatprep.subr.mxu0 0.0
    %2490 = vmatpush1.msra.mxu0 0.0
    %2491 = vmatprep.subr.mxu0 0.0
    %2492 = vmatpush1.msra.mxu0 0.0
    %2493 = vmatprep.subr.mxu0 0.0
    %2494 = vmatpush1.msra.mxu0 0.0
    %2495 = vmatprep.subr.mxu0 0.0
    %2496 = vmatpush1.msra.mxu0 0.0
    %2497 = vmatprep.subr.mxu0 0.0
    %2498 = vmatpush1.msra.mxu0 0.0
    %2499 = vmatprep.subr.mxu0 0.0
    %2500 = vmatpush1.msra.mxu0 0.0
    %2501 = vmatprep.subr.mxu0 0.0
    %2502 = vmatpush1.msra.mxu0 0.0
    %2503 = vmatprep.subr.mxu0 0.0
    %2504 = vmatpush1.msra.mxu0 0.0
    %2505 = vmatprep.subr.mxu0 0.0
    %2506 = vmatpush1.msra.mxu0 0.0
    %2507 = vmatprep.subr.mxu0 0.0
    %2508 = vmatpush1.msra.mxu0 0.0
    %2509 = vmatprep.subr.mxu0 0.0
    %2510 = vmatpush1.msra.mxu0 0.0
    %2511 = vmatprep.subr.mxu0 0.0
    %2512 = vmatpush1.msra.mxu0 0.0
    %2513 = vmatprep.subr.mxu0 0.0
    %2514 = vmatpush1.msra.mxu0 0.0
    %2515 = vmatprep.subr.mxu0 0.0
    %2516 = vmatpush1.msra.mxu0 0.0
    %2517 = vmatprep.subr.mxu0 0.0
    %2518 = vmatpush1.msra.mxu0 0.0
    %2519 = vmatprep.mubr.f32.mxu0 0.0
    %2520 = vmatmul.mubr.f32.gmra.mrb[0].mxu0 %v143
    %v2521 = vpop.f32.mrb[0].mxu0
    %v2522 = vadd.f32 %v2453, %v2521
    %v2523 = vpop.f32.mrb[0].mxu0
    %2524 = vdwg.mxu0
    %2525 = vrot.lane.b32.xlu0 %v2356, 64
    %v2526 = vpop.permute.xlu0 %2525
    %2527 = vrot.lane.b32.xlu0 %v2357, 64
    %v2528 = vpop.permute.xlu0 %2527
    %2529 = vrot.lane.b32.xlu0 %v2358, 64
    %v2530 = vpop.permute.xlu0 %2529
    %2531 = vrot.lane.b32.xlu0 %v2359, 64
    %v2532 = vpop.permute.xlu0 %2531
    %2537 = vrot.lane.b32.xlu0 %v2451, 64
    %v2538 = vpop.permute.xlu0 %2537
    %2540 = vmatprep.subr.mxu0 0.0
    %2541 = vmatpush1.msra.mxu0 %v2526
    %2542 = vmatprep.subr.mxu0 0.0
    %2543 = vmatpush1.msra.mxu0 %v2528
    %2544 = vmatprep.subr.mxu0 0.0
    %2545 = vmatpush1.msra.mxu0 %v2530
    %2546 = vmatprep.subr.mxu0 0.0
    %2547 = vmatpush1.msra.mxu0 %v2532
    %2548 = vmatprep.subr.mxu0 0.0
    %2549 = vmatpush1.msra.mxu0 0.0
    %2550 = vmatprep.subr.mxu0 0.0
    %2551 = vmatpush1.msra.mxu0 0.0
    %2552 = vmatprep.subr.mxu0 0.0
    %2553 = vmatpush1.msra.mxu0 0.0
    %2554 = vmatprep.subr.mxu0 0.0
    %2555 = vmatpush1.msra.mxu0 0.0
    %2556 = vmatprep.subr.mxu0 0.0
    %2557 = vmatpush1.msra.mxu0 0.0
    %2558 = vmatprep.subr.mxu0 0.0
    %2559 = vmatpush1.msra.mxu0 0.0
    %2560 = vmatprep.subr.mxu0 0.0
    %2561 = vmatpush1.msra.mxu0 0.0
    %2562 = vmatprep.subr.mxu0 0.0
    %2563 = vmatpush1.msra.mxu0 0.0
    %2564 = vmatprep.subr.mxu0 0.0
    %2565 = vmatpush1.msra.mxu0 0.0
    %2566 = vmatprep.subr.mxu0 0.0
    %2567 = vmatpush1.msra.mxu0 0.0
    %2568 = vmatprep.subr.mxu0 0.0
    %2569 = vmatpush1.msra.mxu0 0.0
    %2570 = vmatprep.subr.mxu0 0.0
    %2571 = vmatpush1.msra.mxu0 0.0
    %2572 = vmatprep.subr.mxu0 0.0
    %2573 = vmatpush1.msra.mxu0 0.0
    %2574 = vmatprep.subr.mxu0 0.0
    %2575 = vmatpush1.msra.mxu0 0.0
    %2576 = vmatprep.subr.mxu0 0.0
    %2577 = vmatpush1.msra.mxu0 0.0
    %2578 = vmatprep.subr.mxu0 0.0
    %2579 = vmatpush1.msra.mxu0 0.0
    %2580 = vmatprep.subr.mxu0 0.0
    %2581 = vmatpush1.msra.mxu0 0.0
    %2582 = vmatprep.subr.mxu0 0.0
    %2583 = vmatpush1.msra.mxu0 0.0
    %2584 = vmatprep.subr.mxu0 0.0
    %2585 = vmatpush1.msra.mxu0 0.0
    %2586 = vmatprep.subr.mxu0 0.0
    %2587 = vmatpush1.msra.mxu0 0.0
    %2588 = vmatprep.subr.mxu0 0.0
    %2589 = vmatpush1.msra.mxu0 0.0
    %2590 = vmatprep.subr.mxu0 0.0
    %2591 = vmatpush1.msra.mxu0 0.0
    %2592 = vmatprep.subr.mxu0 0.0
    %2593 = vmatpush1.msra.mxu0 0.0
    %2594 = vmatprep.subr.mxu0 0.0
    %2595 = vmatpush1.msra.mxu0 0.0
    %2596 = vmatprep.subr.mxu0 0.0
    %2597 = vmatpush1.msra.mxu0 0.0
    %2598 = vmatprep.subr.mxu0 0.0
    %2599 = vmatpush1.msra.mxu0 0.0
    %2600 = vmatprep.subr.mxu0 0.0
    %2601 = vmatpush1.msra.mxu0 0.0
    %2602 = vmatprep.subr.mxu0 0.0
    %2603 = vmatpush1.msra.mxu0 0.0
    %2604 = vmatprep.mubr.f32.mxu0 0.0
    %2605 = vmatmul.mubr.f32.gmra.mrb[0].mxu0 %v143
    %v2606 = vpop.f32.mrb[0].mxu0
    %v2607 = vadd.f32 %v2538, %v2606
    %v2608 = vpop.f32.mrb[0].mxu0
    %2609 = vdwg.mxu0
    %v2610 = vadd.f32 %v2353, %v2428
    %v2611 = vxor.u32 %v2610, 2147483648
    %v2612 = vmul.f32 %v2611, 1.442695
    %v2613 = vpow.pop %v2612
    %v2614 = vadd.f32 %v2613, 1.0
    %v2615 = vrcp.pop %v2614
    %v2616 = vmul.f32 1.0, %v2615
    %2618 = vrot.lane.b32.xlu0 %v2522, 32
    %v2619 = vpop.permute.xlu0 %2618
    %v2621 = vadd.f32 %v2353, %v2619
    %v2622 = vxor.u32 %v2621, 2147483648
    %v2623 = vmul.f32 %v2622, 1.442695
    %v2624 = vpow.pop %v2623
    %v2625 = vadd.f32 %v2624, 1.0
    %v2626 = vrcp.pop %v2625
    %v2627 = vmul.f32 1.0, %v2626
    %v2628 = vmul.f32 %v2616, %v2607
    %2630 = vrot.lane.b32.xlu0 %v2628, 64
    %v2631 = vpop.permute.xlu0 %2630
    %v2633 = vadd.f32 %v2353, %v2631
    %v2634 = vtanh.pop %v2633
    %v2635 = vsub.f32 1.0, %v2627
    %2637 = vrot.lane.b32.xlu0 %v2634, 96
    %v2638 = vpop.permute.xlu0 %2637
    %v2640 = vmul.f32 %v2635, %v2638
    %v2641 = vmul.f32 %v2627, 0.0
    %v2642 = vadd.f32 %v2640, %v2641
    %2644 = vrot.lane.b32.xlu0 %v2642, 96
    %v2645 = vpop.permute.xlu0 %2644
    %2647 = vst.msk [vmem:[#allocation3] sm:$0x1] %vm431, %v2645
    %v2648 = vsel %vm63, %v2645, 0
    %2650 = vmatprep.subr.mxu0 0.0
    %2651 = vmatpush1.msra.mxu0 %v2356
    %2652 = vmatprep.subr.mxu0 0.0
    %2653 = vmatpush1.msra.mxu0 %v2357
    %2654 = vmatprep.subr.mxu0 0.0
    %2655 = vmatpush1.msra.mxu0 %v2358
    %2656 = vmatprep.subr.mxu0 0.0
    %2657 = vmatpush1.msra.mxu0 %v2359
    %2658 = vmatprep.subr.mxu0 0.0
    %2659 = vmatpush1.msra.mxu0 0.0
    %2660 = vmatprep.subr.mxu0 0.0
    %2661 = vmatpush1.msra.mxu0 0.0
    %2662 = vmatprep.subr.mxu0 0.0
    %2663 = vmatpush1.msra.mxu0 0.0
    %2664 = vmatprep.subr.mxu0 0.0
    %2665 = vmatpush1.msra.mxu0 0.0
    %2666 = vmatprep.subr.mxu0 0.0
    %2667 = vmatpush1.msra.mxu0 0.0
    %2668 = vmatprep.subr.mxu0 0.0
    %2669 = vmatpush1.msra.mxu0 0.0
    %2670 = vmatprep.subr.mxu0 0.0
    %2671 = vmatpush1.msra.mxu0 0.0
    %2672 = vmatprep.subr.mxu0 0.0
    %2673 = vmatpush1.msra.mxu0 0.0
    %2674 = vmatprep.subr.mxu0 0.0
    %2675 = vmatpush1.msra.mxu0 0.0
    %2676 = vmatprep.subr.mxu0 0.0
    %2677 = vmatpush1.msra.mxu0 0.0
    %2678 = vmatprep.subr.mxu0 0.0
    %2679 = vmatpush1.msra.mxu0 0.0
    %2680 = vmatprep.subr.mxu0 0.0
    %2681 = vmatpush1.msra.mxu0 0.0
    %2682 = vmatprep.subr.mxu0 0.0
    %2683 = vmatpush1.msra.mxu0 0.0
    %2684 = vmatprep.subr.mxu0 0.0
    %2685 = vmatpush1.msra.mxu0 0.0
    %2686 = vmatprep.subr.mxu0 0.0
    %2687 = vmatpush1.msra.mxu0 0.0
    %2688 = vmatprep.subr.mxu0 0.0
    %2689 = vmatpush1.msra.mxu0 0.0
    %2690 = vmatprep.subr.mxu0 0.0
    %2691 = vmatpush1.msra.mxu0 0.0
    %2692 = vmatprep.subr.mxu0 0.0
    %2693 = vmatpush1.msra.mxu0 0.0
    %2694 = vmatprep.subr.mxu0 0.0
    %2695 = vmatpush1.msra.mxu0 0.0
    %2696 = vmatprep.subr.mxu0 0.0
    %2697 = vmatpush1.msra.mxu0 0.0
    %2698 = vmatprep.subr.mxu0 0.0
    %2699 = vmatpush1.msra.mxu0 0.0
    %2700 = vmatprep.subr.mxu0 0.0
    %2701 = vmatpush1.msra.mxu0 0.0
    %2702 = vmatprep.subr.mxu0 0.0
    %2703 = vmatpush1.msra.mxu0 0.0
    %2704 = vmatprep.subr.mxu0 0.0
    %2705 = vmatpush1.msra.mxu0 0.0
    %2706 = vmatprep.subr.mxu0 0.0
    %2707 = vmatpush1.msra.mxu0 0.0
    %2708 = vmatprep.subr.mxu0 0.0
    %2709 = vmatpush1.msra.mxu0 0.0
    %2710 = vmatprep.subr.mxu0 0.0
    %2711 = vmatpush1.msra.mxu0 0.0
    %2712 = vmatprep.subr.mxu0 0.0
    %2713 = vmatpush1.msra.mxu0 0.0
    %2714 = vmatprep.mubr.f32.mxu0 0.0
    %2715 = vmatmul.mubr.f32.gmra.mrb[0].mxu0 %v2648
    %v2716 = vpop.f32.mrb[0].mxu0
    %v2717 = vadd.f32 %v2360, %v2716
    %v2718 = vpop.f32.mrb[0].mxu0
    %2719 = vdwg.mxu0
    %2720 = vmatprep.subr.mxu0 0.0
    %2721 = vmatpush1.msra.mxu0 %v2436
    %2722 = vmatprep.subr.mxu0 0.0
    %2723 = vmatpush1.msra.mxu0 %v2438
    %2724 = vmatprep.subr.mxu0 0.0
    %2725 = vmatpush1.msra.mxu0 %v2440
    %2726 = vmatprep.subr.mxu0 0.0
    %2727 = vmatpush1.msra.mxu0 %v2442
    %2728 = vmatprep.subr.mxu0 0.0
    %2729 = vmatpush1.msra.mxu0 0.0
    %2730 = vmatprep.subr.mxu0 0.0
    %2731 = vmatpush1.msra.mxu0 0.0
    %2732 = vmatprep.subr.mxu0 0.0
    %2733 = vmatpush1.msra.mxu0 0.0
    %2734 = vmatprep.subr.mxu0 0.0
    %2735 = vmatpush1.msra.mxu0 0.0
    %2736 = vmatprep.subr.mxu0 0.0
    %2737 = vmatpush1.msra.mxu0 0.0
    %2738 = vmatprep.subr.mxu0 0.0
    %2739 = vmatpush1.msra.mxu0 0.0
    %2740 = vmatprep.subr.mxu0 0.0
    %2741 = vmatpush1.msra.mxu0 0.0
    %2742 = vmatprep.subr.mxu0 0.0
    %2743 = vmatpush1.msra.mxu0 0.0
    %2744 = vmatprep.subr.mxu0 0.0
    %2745 = vmatpush1.msra.mxu0 0.0
    %2746 = vmatprep.subr.mxu0 0.0
    %2747 = vmatpush1.msra.mxu0 0.0
    %2748 = vmatprep.subr.mxu0 0.0
    %2749 = vmatpush1.msra.mxu0 0.0
    %2750 = vmatprep.subr.mxu0 0.0
    %2751 = vmatpush1.msra.mxu0 0.0
    %2752 = vmatprep.subr.mxu0 0.0
    %2753 = vmatpush1.msra.mxu0 0.0
    %2754 = vmatprep.subr.mxu0 0.0
    %2755 = vmatpush1.msra.mxu0 0.0
    %2756 = vmatprep.subr.mxu0 0.0
    %2757 = vmatpush1.msra.mxu0 0.0
    %2758 = vmatprep.subr.mxu0 0.0
    %2759 = vmatpush1.msra.mxu0 0.0
    %2760 = vmatprep.subr.mxu0 0.0
    %2761 = vmatpush1.msra.mxu0 0.0
    %2762 = vmatprep.subr.mxu0 0.0
    %2763 = vmatpush1.msra.mxu0 0.0
    %2764 = vmatprep.subr.mxu0 0.0
    %2765 = vmatpush1.msra.mxu0 0.0
    %2766 = vmatprep.subr.mxu0 0.0
    %2767 = vmatpush1.msra.mxu0 0.0
    %2768 = vmatprep.subr.mxu0 0.0
    %2769 = vmatpush1.msra.mxu0 0.0
    %2770 = vmatprep.subr.mxu0 0.0
    %2771 = vmatpush1.msra.mxu0 0.0
    %2772 = vmatprep.subr.mxu0 0.0
    %2773 = vmatpush1.msra.mxu0 0.0
    %2774 = vmatprep.subr.mxu0 0.0
    %2775 = vmatpush1.msra.mxu0 0.0
    %2776 = vmatprep.subr.mxu0 0.0
    %2777 = vmatpush1.msra.mxu0 0.0
    %2778 = vmatprep.subr.mxu0 0.0
    %2779 = vmatpush1.msra.mxu0 0.0
    %2780 = vmatprep.subr.mxu0 0.0
    %2781 = vmatpush1.msra.mxu0 0.0
    %2782 = vmatprep.subr.mxu0 0.0
    %2783 = vmatpush1.msra.mxu0 0.0
    %2784 = vmatprep.mubr.f32.mxu0 0.0
    %2785 = vmatmul.mubr.f32.gmra.mrb[0].mxu0 %v2648
    %v2786 = vpop.f32.mrb[0].mxu0
    %v2787 = vadd.f32 %v2453, %v2786
    %v2788 = vpop.f32.mrb[0].mxu0
    %2789 = vdwg.mxu0
    %2790 = vmatprep.subr.mxu0 0.0
    %2791 = vmatpush1.msra.mxu0 %v2526
    %2792 = vmatprep.subr.mxu0 0.0
    %2793 = vmatpush1.msra.mxu0 %v2528
    %2794 = vmatprep.subr.mxu0 0.0
    %2795 = vmatpush1.msra.mxu0 %v2530
    %2796 = vmatprep.subr.mxu0 0.0
    %2797 = vmatpush1.msra.mxu0 %v2532
    %2798 = vmatprep.subr.mxu0 0.0
    %2799 = vmatpush1.msra.mxu0 0.0
    %2800 = vmatprep.subr.mxu0 0.0
    %2801 = vmatpush1.msra.mxu0 0.0
    %2802 = vmatprep.subr.mxu0 0.0
    %2803 = vmatpush1.msra.mxu0 0.0
    %2804 = vmatprep.subr.mxu0 0.0
    %2805 = vmatpush1.msra.mxu0 0.0
    %2806 = vmatprep.subr.mxu0 0.0
    %2807 = vmatpush1.msra.mxu0 0.0
    %2808 = vmatprep.subr.mxu0 0.0
    %2809 = vmatpush1.msra.mxu0 0.0
    %2810 = vmatprep.subr.mxu0 0.0
    %2811 = vmatpush1.msra.mxu0 0.0
    %2812 = vmatprep.subr.mxu0 0.0
    %2813 = vmatpush1.msra.mxu0 0.0
    %2814 = vmatprep.subr.mxu0 0.0
    %2815 = vmatpush1.msra.mxu0 0.0
    %2816 = vmatprep.subr.mxu0 0.0
    %2817 = vmatpush1.msra.mxu0 0.0
    %2818 = vmatprep.subr.mxu0 0.0
    %2819 = vmatpush1.msra.mxu0 0.0
    %2820 = vmatprep.subr.mxu0 0.0
    %2821 = vmatpush1.msra.mxu0 0.0
    %2822 = vmatprep.subr.mxu0 0.0
    %2823 = vmatpush1.msra.mxu0 0.0
    %2824 = vmatprep.subr.mxu0 0.0
    %2825 = vmatpush1.msra.mxu0 0.0
    %2826 = vmatprep.subr.mxu0 0.0
    %2827 = vmatpush1.msra.mxu0 0.0
    %2828 = vmatprep.subr.mxu0 0.0
    %2829 = vmatpush1.msra.mxu0 0.0
    %2830 = vmatprep.subr.mxu0 0.0
    %2831 = vmatpush1.msra.mxu0 0.0
    %2832 = vmatprep.subr.mxu0 0.0
    %2833 = vmatpush1.msra.mxu0 0.0
    %2834 = vmatprep.subr.mxu0 0.0
    %2835 = vmatpush1.msra.mxu0 0.0
    %2836 = vmatprep.subr.mxu0 0.0
    %2837 = vmatpush1.msra.mxu0 0.0
    %2838 = vmatprep.subr.mxu0 0.0
    %2839 = vmatpush1.msra.mxu0 0.0
    %2840 = vmatprep.subr.mxu0 0.0
    %2841 = vmatpush1.msra.mxu0 0.0
    %2842 = vmatprep.subr.mxu0 0.0
    %2843 = vmatpush1.msra.mxu0 0.0
    %2844 = vmatprep.subr.mxu0 0.0
    %2845 = vmatpush1.msra.mxu0 0.0
    %2846 = vmatprep.subr.mxu0 0.0
    %2847 = vmatpush1.msra.mxu0 0.0
    %2848 = vmatprep.subr.mxu0 0.0
    %2849 = vmatpush1.msra.mxu0 0.0
    %2850 = vmatprep.subr.mxu0 0.0
    %2851 = vmatpush1.msra.mxu0 0.0
    %2852 = vmatprep.subr.mxu0 0.0
    %2853 = vmatpush1.msra.mxu0 0.0
    %2854 = vmatprep.mubr.f32.mxu0 0.0
    %2855 = vmatmul.mubr.f32.gmra.mrb[0].mxu0 %v2648
    %v2856 = vpop.f32.mrb[0].mxu0
    %v2857 = vadd.f32 %v2538, %v2856
    %v2858 = vpop.f32.mrb[0].mxu0
    %2859 = vdwg.mxu0
    %v2861 = vrot.slane %v2717, 7
    %v2863 = vadd.f32 %v2353, %v2861
    %v2864 = vxor.u32 %v2863, 2147483648
    %v2865 = vmul.f32 %v2864, 1.442695
    %v2866 = vpow.pop %v2865
    %v2867 = vadd.f32 %v2866, 1.0
    %v2868 = vrcp.pop %v2867
    %v2869 = vmul.f32 1.0, %v2868
    %v2871 = vrot.slane %v2787, 7
    %2872 = vrot.lane.b32.xlu0 %v2871, 32
    %v2873 = vpop.permute.xlu0 %2872
    %v2875 = vadd.f32 %v2353, %v2873
    %v2876 = vxor.u32 %v2875, 2147483648
    %v2877 = vmul.f32 %v2876, 1.442695
    %v2878 = vpow.pop %v2877
    %v2879 = vadd.f32 %v2878, 1.0
    %v2880 = vrcp.pop %v2879
    %v2881 = vmul.f32 1.0, %v2880
    %v2883 = vrot.slane %v2857, 7
    %v2885 = vmul.f32 %v2869, %v2883
    %2887 = vrot.lane.b32.xlu0 %v2885, 64
    %v2888 = vpop.permute.xlu0 %2887
    %v2890 = vadd.f32 %v2353, %v2888
    %v2891 = vtanh.pop %v2890
    %v2892 = vsub.f32 1.0, %v2881
    %2894 = vrot.lane.b32.xlu0 %v2891, 96
    %v2895 = vpop.permute.xlu0 %2894
    %v2897 = vmul.f32 %v2892, %v2895
    %v2898 = vrot.slane %v2642, 7
    %v2900 = vmul.f32 %v2881, %v2898
    %v2901 = vadd.f32 %v2897, %v2900
    %2903 = vrot.lane.b32.xlu0 %v2901, 96
    %v2904 = vpop.permute.xlu0 %2903
    %2906 = vst.msk [vmem:[#allocation3] sm:$0x2] %vm691, %v2904
    %v2907 = vrot.slane %v2901, 1
    %2908 = vrot.lane.b32.xlu0 %v2907, 96
    %v2909 = vpop.permute.xlu0 %2908
    %v2910 = vsel %vm63, %v2909, 0
    %2912 = vmatprep.subr.mxu0 0.0
    %2913 = vmatpush1.msra.mxu0 %v2356
    %2914 = vmatprep.subr.mxu0 0.0
    %2915 = vmatpush1.msra.mxu0 %v2357
    %2916 = vmatprep.subr.mxu0 0.0
    %2917 = vmatpush1.msra.mxu0 %v2358
    %2918 = vmatprep.subr.mxu0 0.0
    %2919 = vmatpush1.msra.mxu0 %v2359
    %2920 = vmatprep.subr.mxu0 0.0
    %2921 = vmatpush1.msra.mxu0 0.0
    %2922 = vmatprep.subr.mxu0 0.0
    %2923 = vmatpush1.msra.mxu0 0.0
    %2924 = vmatprep.subr.mxu0 0.0
    %2925 = vmatpush1.msra.mxu0 0.0
    %2926 = vmatprep.subr.mxu0 0.0
    %2927 = vmatpush1.msra.mxu0 0.0
    %2928 = vmatprep.subr.mxu0 0.0
    %2929 = vmatpush1.msra.mxu0 0.0
    %2930 = vmatprep.subr.mxu0 0.0
    %2931 = vmatpush1.msra.mxu0 0.0
    %2932 = vmatprep.subr.mxu0 0.0
    %2933 = vmatpush1.msra.mxu0 0.0
    %2934 = vmatprep.subr.mxu0 0.0
    %2935 = vmatpush1.msra.mxu0 0.0
    %2936 = vmatprep.subr.mxu0 0.0
    %2937 = vmatpush1.msra.mxu0 0.0
    %2938 = vmatprep.subr.mxu0 0.0
    %2939 = vmatpush1.msra.mxu0 0.0
    %2940 = vmatprep.subr.mxu0 0.0
    %2941 = vmatpush1.msra.mxu0 0.0
    %2942 = vmatprep.subr.mxu0 0.0
    %2943 = vmatpush1.msra.mxu0 0.0
    %2944 = vmatprep.subr.mxu0 0.0
    %2945 = vmatpush1.msra.mxu0 0.0
    %2946 = vmatprep.subr.mxu0 0.0
    %2947 = vmatpush1.msra.mxu0 0.0
    %2948 = vmatprep.subr.mxu0 0.0
    %2949 = vmatpush1.msra.mxu0 0.0
    %2950 = vmatprep.subr.mxu0 0.0
    %2951 = vmatpush1.msra.mxu0 0.0
    %2952 = vmatprep.subr.mxu0 0.0
    %2953 = vmatpush1.msra.mxu0 0.0
    %2954 = vmatprep.subr.mxu0 0.0
    %2955 = vmatpush1.msra.mxu0 0.0
    %2956 = vmatprep.subr.mxu0 0.0
    %2957 = vmatpush1.msra.mxu0 0.0
    %2958 = vmatprep.subr.mxu0 0.0
    %2959 = vmatpush1.msra.mxu0 0.0
    %2960 = vmatprep.subr.mxu0 0.0
    %2961 = vmatpush1.msra.mxu0 0.0
    %2962 = vmatprep.subr.mxu0 0.0
    %2963 = vmatpush1.msra.mxu0 0.0
    %2964 = vmatprep.subr.mxu0 0.0
    %2965 = vmatpush1.msra.mxu0 0.0
    %2966 = vmatprep.subr.mxu0 0.0
    %2967 = vmatpush1.msra.mxu0 0.0
    %2968 = vmatprep.subr.mxu0 0.0
    %2969 = vmatpush1.msra.mxu0 0.0
    %2970 = vmatprep.subr.mxu0 0.0
    %2971 = vmatpush1.msra.mxu0 0.0
    %2972 = vmatprep.subr.mxu0 0.0
    %2973 = vmatpush1.msra.mxu0 0.0
    %2974 = vmatprep.subr.mxu0 0.0
    %2975 = vmatpush1.msra.mxu0 0.0
    %2976 = vmatprep.mubr.f32.mxu0 0.0
    %2977 = vmatmul.mubr.f32.gmra.mrb[0].mxu0 %v2910
    %v2978 = vpop.f32.mrb[0].mxu0
    %v2979 = vadd.f32 %v2360, %v2978
    %v2980 = vpop.f32.mrb[0].mxu0
    %2981 = vdwg.mxu0
    %2982 = vmatprep.subr.mxu0 0.0
    %2983 = vmatpush1.msra.mxu0 %v2436
    %2984 = vmatprep.subr.mxu0 0.0
    %2985 = vmatpush1.msra.mxu0 %v2438
    %2986 = vmatprep.subr.mxu0 0.0
    %2987 = vmatpush1.msra.mxu0 %v2440
    %2988 = vmatprep.subr.mxu0 0.0
    %2989 = vmatpush1.msra.mxu0 %v2442
    %2990 = vmatprep.subr.mxu0 0.0
    %2991 = vmatpush1.msra.mxu0 0.0
    %2992 = vmatprep.subr.mxu0 0.0
    %2993 = vmatpush1.msra.mxu0 0.0
    %2994 = vmatprep.subr.mxu0 0.0
    %2995 = vmatpush1.msra.mxu0 0.0
    %2996 = vmatprep.subr.mxu0 0.0
    %2997 = vmatpush1.msra.mxu0 0.0
    %2998 = vmatprep.subr.mxu0 0.0
    %2999 = vmatpush1.msra.mxu0 0.0
    %3000 = vmatprep.subr.mxu0 0.0
    %3001 = vmatpush1.msra.mxu0 0.0
    %3002 = vmatprep.subr.mxu0 0.0
    %3003 = vmatpush1.msra.mxu0 0.0
    %3004 = vmatprep.subr.mxu0 0.0
    %3005 = vmatpush1.msra.mxu0 0.0
    %3006 = vmatprep.subr.mxu0 0.0
    %3007 = vmatpush1.msra.mxu0 0.0
    %3008 = vmatprep.subr.mxu0 0.0
    %3009 = vmatpush1.msra.mxu0 0.0
    %3010 = vmatprep.subr.mxu0 0.0
    %3011 = vmatpush1.msra.mxu0 0.0
    %3012 = vmatprep.subr.mxu0 0.0
    %3013 = vmatpush1.msra.mxu0 0.0
    %3014 = vmatprep.subr.mxu0 0.0
    %3015 = vmatpush1.msra.mxu0 0.0
    %3016 = vmatprep.subr.mxu0 0.0
    %3017 = vmatpush1.msra.mxu0 0.0
    %3018 = vmatprep.subr.mxu0 0.0
    %3019 = vmatpush1.msra.mxu0 0.0
    %3020 = vmatprep.subr.mxu0 0.0
    %3021 = vmatpush1.msra.mxu0 0.0
    %3022 = vmatprep.subr.mxu0 0.0
    %3023 = vmatpush1.msra.mxu0 0.0
    %3024 = vmatprep.subr.mxu0 0.0
    %3025 = vmatpush1.msra.mxu0 0.0
    %3026 = vmatprep.subr.mxu0 0.0
    %3027 = vmatpush1.msra.mxu0 0.0
    %3028 = vmatprep.subr.mxu0 0.0
    %3029 = vmatpush1.msra.mxu0 0.0
    %3030 = vmatprep.subr.mxu0 0.0
    %3031 = vmatpush1.msra.mxu0 0.0
    %3032 = vmatprep.subr.mxu0 0.0
    %3033 = vmatpush1.msra.mxu0 0.0
    %3034 = vmatprep.subr.mxu0 0.0
    %3035 = vmatpush1.msra.mxu0 0.0
    %3036 = vmatprep.subr.mxu0 0.0
    %3037 = vmatpush1.msra.mxu0 0.0
    %3038 = vmatprep.subr.mxu0 0.0
    %3039 = vmatpush1.msra.mxu0 0.0
    %3040 = vmatprep.subr.mxu0 0.0
    %3041 = vmatpush1.msra.mxu0 0.0
    %3042 = vmatprep.subr.mxu0 0.0
    %3043 = vmatpush1.msra.mxu0 0.0
    %3044 = vmatprep.subr.mxu0 0.0
    %3045 = vmatpush1.msra.mxu0 0.0
    %3046 = vmatprep.mubr.f32.mxu0 0.0
    %3047 = vmatmul.mubr.f32.gmra.mrb[0].mxu0 %v2910
    %v3048 = vpop.f32.mrb[0].mxu0
    %v3049 = vadd.f32 %v2453, %v3048
    %v3050 = vpop.f32.mrb[0].mxu0
    %3051 = vdwg.mxu0
    %3052 = vmatprep.subr.mxu0 0.0
    %3053 = vmatpush1.msra.mxu0 %v2526
    %3054 = vmatprep.subr.mxu0 0.0
    %3055 = vmatpush1.msra.mxu0 %v2528
    %3056 = vmatprep.subr.mxu0 0.0
    %3057 = vmatpush1.msra.mxu0 %v2530
    %3058 = vmatprep.subr.mxu0 0.0
    %3059 = vmatpush1.msra.mxu0 %v2532
    %3060 = vmatprep.subr.mxu0 0.0
    %3061 = vmatpush1.msra.mxu0 0.0
    %3062 = vmatprep.subr.mxu0 0.0
    %3063 = vmatpush1.msra.mxu0 0.0
    %3064 = vmatprep.subr.mxu0 0.0
    %3065 = vmatpush1.msra.mxu0 0.0
    %3066 = vmatprep.subr.mxu0 0.0
    %3067 = vmatpush1.msra.mxu0 0.0
    %3068 = vmatprep.subr.mxu0 0.0
    %3069 = vmatpush1.msra.mxu0 0.0
    %3070 = vmatprep.subr.mxu0 0.0
    %3071 = vmatpush1.msra.mxu0 0.0
    %3072 = vmatprep.subr.mxu0 0.0
    %3073 = vmatpush1.msra.mxu0 0.0
    %3074 = vmatprep.subr.mxu0 0.0
    %3075 = vmatpush1.msra.mxu0 0.0
    %3076 = vmatprep.subr.mxu0 0.0
    %3077 = vmatpush1.msra.mxu0 0.0
    %3078 = vmatprep.subr.mxu0 0.0
    %3079 = vmatpush1.msra.mxu0 0.0
    %3080 = vmatprep.subr.mxu0 0.0
    %3081 = vmatpush1.msra.mxu0 0.0
    %3082 = vmatprep.subr.mxu0 0.0
    %3083 = vmatpush1.msra.mxu0 0.0
    %3084 = vmatprep.subr.mxu0 0.0
    %3085 = vmatpush1.msra.mxu0 0.0
    %3086 = vmatprep.subr.mxu0 0.0
    %3087 = vmatpush1.msra.mxu0 0.0
    %3088 = vmatprep.subr.mxu0 0.0
    %3089 = vmatpush1.msra.mxu0 0.0
    %3090 = vmatprep.subr.mxu0 0.0
    %3091 = vmatpush1.msra.mxu0 0.0
    %3092 = vmatprep.subr.mxu0 0.0
    %3093 = vmatpush1.msra.mxu0 0.0
    %3094 = vmatprep.subr.mxu0 0.0
    %3095 = vmatpush1.msra.mxu0 0.0
    %3096 = vmatprep.subr.mxu0 0.0
    %3097 = vmatpush1.msra.mxu0 0.0
    %3098 = vmatprep.subr.mxu0 0.0
    %3099 = vmatpush1.msra.mxu0 0.0
    %3100 = vmatprep.subr.mxu0 0.0
    %3101 = vmatpush1.msra.mxu0 0.0
    %3102 = vmatprep.subr.mxu0 0.0
    %3103 = vmatpush1.msra.mxu0 0.0
    %3104 = vmatprep.subr.mxu0 0.0
    %3105 = vmatpush1.msra.mxu0 0.0
    %3106 = vmatprep.subr.mxu0 0.0
    %3107 = vmatpush1.msra.mxu0 0.0
    %3108 = vmatprep.subr.mxu0 0.0
    %3109 = vmatpush1.msra.mxu0 0.0
    %3110 = vmatprep.subr.mxu0 0.0
    %3111 = vmatpush1.msra.mxu0 0.0
    %3112 = vmatprep.subr.mxu0 0.0
    %3113 = vmatpush1.msra.mxu0 0.0
    %3114 = vmatprep.subr.mxu0 0.0
    %3115 = vmatpush1.msra.mxu0 0.0
    %3116 = vmatprep.mubr.f32.mxu0 0.0
    %3117 = vmatmul.mubr.f32.gmra.mrb[0].mxu0 %v2910
    %v3118 = vpop.f32.mrb[0].mxu0
    %v3119 = vadd.f32 %v2538, %v3118
    %v3120 = vpop.f32.mrb[0].mxu0
    %3121 = vdwg.mxu0
    %v3123 = vrot.slane %v2979, 6
    %v3125 = vadd.f32 %v2353, %v3123
    %v3126 = vxor.u32 %v3125, 2147483648
    %v3127 = vmul.f32 %v3126, 1.442695
    %v3128 = vpow.pop %v3127
    %v3129 = vadd.f32 %v3128, 1.0
    %v3130 = vrcp.pop %v3129
    %v3131 = vmul.f32 1.0, %v3130
    %v3133 = vrot.slane %v3049, 6
    %3134 = vrot.lane.b32.xlu0 %v3133, 32
    %v3135 = vpop.permute.xlu0 %3134
    %v3137 = vadd.f32 %v2353, %v3135
    %v3138 = vxor.u32 %v3137, 2147483648
    %v3139 = vmul.f32 %v3138, 1.442695
    %v3140 = vpow.pop %v3139
    %v3141 = vadd.f32 %v3140, 1.0
    %v3142 = vrcp.pop %v3141
    %v3143 = vmul.f32 1.0, %v3142
    %v3145 = vrot.slane %v3119, 6
    %v3147 = vmul.f32 %v3131, %v3145
    %3149 = vrot.lane.b32.xlu0 %v3147, 64
    %v3150 = vpop.permute.xlu0 %3149
    %v3152 = vadd.f32 %v2353, %v3150
    %v3153 = vtanh.pop %v3152
    %v3154 = vsub.f32 1.0, %v3143
    %3156 = vrot.lane.b32.xlu0 %v3153, 96
    %v3157 = vpop.permute.xlu0 %3156
    %v3159 = vmul.f32 %v3154, %v3157
    %v3160 = vrot.slane %v2901, 7
    %v3162 = vmul.f32 %v3143, %v3160
    %v3163 = vadd.f32 %v3159, %v3162
    %3165 = vrot.lane.b32.xlu0 %v3163, 96
    %v3166 = vpop.permute.xlu0 %3165
    %3168 = vst.msk [vmem:[#allocation3] sm:$0x4] %vm954, %v3166
    %v3169 = vrot.slane %v3163, 2
    %3170 = vrot.lane.b32.xlu0 %v3169, 96
    %v3171 = vpop.permute.xlu0 %3170
    %v3172 = vsel %vm63, %v3171, 0
    %3174 = vmatprep.subr.mxu0 0.0
    %3175 = vmatpush1.msra.mxu0 %v2356
    %3176 = vmatprep.subr.mxu0 0.0
    %3177 = vmatpush1.msra.mxu0 %v2357
    %3178 = vmatprep.subr.mxu0 0.0
    %3179 = vmatpush1.msra.mxu0 %v2358
    %3180 = vmatprep.subr.mxu0 0.0
    %3181 = vmatpush1.msra.mxu0 %v2359
    %3182 = vmatprep.subr.mxu0 0.0
    %3183 = vmatpush1.msra.mxu0 0.0
    %3184 = vmatprep.subr.mxu0 0.0
    %3185 = vmatpush1.msra.mxu0 0.0
    %3186 = vmatprep.subr.mxu0 0.0
    %3187 = vmatpush1.msra.mxu0 0.0
    %3188 = vmatprep.subr.mxu0 0.0
    %3189 = vmatpush1.msra.mxu0 0.0
    %3190 = vmatprep.subr.mxu0 0.0
    %3191 = vmatpush1.msra.mxu0 0.0
    %3192 = vmatprep.subr.mxu0 0.0
    %3193 = vmatpush1.msra.mxu0 0.0
    %3194 = vmatprep.subr.mxu0 0.0
    %3195 = vmatpush1.msra.mxu0 0.0
    %3196 = vmatprep.subr.mxu0 0.0
    %3197 = vmatpush1.msra.mxu0 0.0
    %3198 = vmatprep.subr.mxu0 0.0
    %3199 = vmatpush1.msra.mxu0 0.0
    %3200 = vmatprep.subr.mxu0 0.0
    %3201 = vmatpush1.msra.mxu0 0.0
    %3202 = vmatprep.subr.mxu0 0.0
    %3203 = vmatpush1.msra.mxu0 0.0
    %3204 = vmatprep.subr.mxu0 0.0
    %3205 = vmatpush1.msra.mxu0 0.0
    %3206 = vmatprep.subr.mxu0 0.0
    %3207 = vmatpush1.msra.mxu0 0.0
    %3208 = vmatprep.subr.mxu0 0.0
    %3209 = vmatpush1.msra.mxu0 0.0
    %3210 = vmatprep.subr.mxu0 0.0
    %3211 = vmatpush1.msra.mxu0 0.0
    %3212 = vmatprep.subr.mxu0 0.0
    %3213 = vmatpush1.msra.mxu0 0.0
    %3214 = vmatprep.subr.mxu0 0.0
    %3215 = vmatpush1.msra.mxu0 0.0
    %3216 = vmatprep.subr.mxu0 0.0
    %3217 = vmatpush1.msra.mxu0 0.0
    %3218 = vmatprep.subr.mxu0 0.0
    %3219 = vmatpush1.msra.mxu0 0.0
    %3220 = vmatprep.subr.mxu0 0.0
    %3221 = vmatpush1.msra.mxu0 0.0
    %3222 = vmatprep.subr.mxu0 0.0
    %3223 = vmatpush1.msra.mxu0 0.0
    %3224 = vmatprep.subr.mxu0 0.0
    %3225 = vmatpush1.msra.mxu0 0.0
    %3226 = vmatprep.subr.mxu0 0.0
    %3227 = vmatpush1.msra.mxu0 0.0
    %3228 = vmatprep.subr.mxu0 0.0
    %3229 = vmatpush1.msra.mxu0 0.0
    %3230 = vmatprep.subr.mxu0 0.0
    %3231 = vmatpush1.msra.mxu0 0.0
    %3232 = vmatprep.subr.mxu0 0.0
    %3233 = vmatpush1.msra.mxu0 0.0
    %3234 = vmatprep.subr.mxu0 0.0
    %3235 = vmatpush1.msra.mxu0 0.0
    %3236 = vmatprep.subr.mxu0 0.0
    %3237 = vmatpush1.msra.mxu0 0.0
    %3238 = vmatprep.mubr.f32.mxu0 0.0
    %3239 = vmatmul.mubr.f32.gmra.mrb[0].mxu0 %v3172
    %v3240 = vpop.f32.mrb[0].mxu0
    %v3241 = vadd.f32 %v2360, %v3240
    %v3242 = vpop.f32.mrb[0].mxu0
    %3243 = vdwg.mxu0
    %3244 = vmatprep.subr.mxu0 0.0
    %3245 = vmatpush1.msra.mxu0 %v2436
    %3246 = vmatprep.subr.mxu0 0.0
    %3247 = vmatpush1.msra.mxu0 %v2438
    %3248 = vmatprep.subr.mxu0 0.0
    %3249 = vmatpush1.msra.mxu0 %v2440
    %3250 = vmatprep.subr.mxu0 0.0
    %3251 = vmatpush1.msra.mxu0 %v2442
    %3252 = vmatprep.subr.mxu0 0.0
    %3253 = vmatpush1.msra.mxu0 0.0
    %3254 = vmatprep.subr.mxu0 0.0
    %3255 = vmatpush1.msra.mxu0 0.0
    %3256 = vmatprep.subr.mxu0 0.0
    %3257 = vmatpush1.msra.mxu0 0.0
    %3258 = vmatprep.subr.mxu0 0.0
    %3259 = vmatpush1.msra.mxu0 0.0
    %3260 = vmatprep.subr.mxu0 0.0
    %3261 = vmatpush1.msra.mxu0 0.0
    %3262 = vmatprep.subr.mxu0 0.0
    %3263 = vmatpush1.msra.mxu0 0.0
    %3264 = vmatprep.subr.mxu0 0.0
    %3265 = vmatpush1.msra.mxu0 0.0
    %3266 = vmatprep.subr.mxu0 0.0
    %3267 = vmatpush1.msra.mxu0 0.0
    %3268 = vmatprep.subr.mxu0 0.0
    %3269 = vmatpush1.msra.mxu0 0.0
    %3270 = vmatprep.subr.mxu0 0.0
    %3271 = vmatpush1.msra.mxu0 0.0
    %3272 = vmatprep.subr.mxu0 0.0
    %3273 = vmatpush1.msra.mxu0 0.0
    %3274 = vmatprep.subr.mxu0 0.0
    %3275 = vmatpush1.msra.mxu0 0.0
    %3276 = vmatprep.subr.mxu0 0.0
    %3277 = vmatpush1.msra.mxu0 0.0
    %3278 = vmatprep.subr.mxu0 0.0
    %3279 = vmatpush1.msra.mxu0 0.0
    %3280 = vmatprep.subr.mxu0 0.0
    %3281 = vmatpush1.msra.mxu0 0.0
    %3282 = vmatprep.subr.mxu0 0.0
    %3283 = vmatpush1.msra.mxu0 0.0
    %3284 = vmatprep.subr.mxu0 0.0
    %3285 = vmatpush1.msra.mxu0 0.0
    %3286 = vmatprep.subr.mxu0 0.0
    %3287 = vmatpush1.msra.mxu0 0.0
    %3288 = vmatprep.subr.mxu0 0.0
    %3289 = vmatpush1.msra.mxu0 0.0
    %3290 = vmatprep.subr.mxu0 0.0
    %3291 = vmatpush1.msra.mxu0 0.0
    %3292 = vmatprep.subr.mxu0 0.0
    %3293 = vmatpush1.msra.mxu0 0.0
    %3294 = vmatprep.subr.mxu0 0.0
    %3295 = vmatpush1.msra.mxu0 0.0
    %3296 = vmatprep.subr.mxu0 0.0
    %3297 = vmatpush1.msra.mxu0 0.0
    %3298 = vmatprep.subr.mxu0 0.0
    %3299 = vmatpush1.msra.mxu0 0.0
    %3300 = vmatprep.subr.mxu0 0.0
    %3301 = vmatpush1.msra.mxu0 0.0
    %3302 = vmatprep.subr.mxu0 0.0
    %3303 = vmatpush1.msra.mxu0 0.0
    %3304 = vmatprep.subr.mxu0 0.0
    %3305 = vmatpush1.msra.mxu0 0.0
    %3306 = vmatprep.subr.mxu0 0.0
    %3307 = vmatpush1.msra.mxu0 0.0
    %3308 = vmatprep.mubr.f32.mxu0 0.0
    %3309 = vmatmul.mubr.f32.gmra.mrb[0].mxu0 %v3172
    %v3310 = vpop.f32.mrb[0].mxu0
    %v3311 = vadd.f32 %v2453, %v3310
    %v3312 = vpop.f32.mrb[0].mxu0
    %3313 = vdwg.mxu0
    %3314 = vmatprep.subr.mxu0 0.0
    %3315 = vmatpush1.msra.mxu0 %v2526
    %3316 = vmatprep.subr.mxu0 0.0
    %3317 = vmatpush1.msra.mxu0 %v2528
    %3318 = vmatprep.subr.mxu0 0.0
    %3319 = vmatpush1.msra.mxu0 %v2530
    %3320 = vmatprep.subr.mxu0 0.0
    %3321 = vmatpush1.msra.mxu0 %v2532
    %3322 = vmatprep.subr.mxu0 0.0
    %3323 = vmatpush1.msra.mxu0 0.0
    %3324 = vmatprep.subr.mxu0 0.0
    %3325 = vmatpush1.msra.mxu0 0.0
    %3326 = vmatprep.subr.mxu0 0.0
    %3327 = vmatpush1.msra.mxu0 0.0
    %3328 = vmatprep.subr.mxu0 0.0
    %3329 = vmatpush1.msra.mxu0 0.0
    %3330 = vmatprep.subr.mxu0 0.0
    %3331 = vmatpush1.msra.mxu0 0.0
    %3332 = vmatprep.subr.mxu0 0.0
    %3333 = vmatpush1.msra.mxu0 0.0
    %3334 = vmatprep.subr.mxu0 0.0
    %3335 = vmatpush1.msra.mxu0 0.0
    %3336 = vmatprep.subr.mxu0 0.0
    %3337 = vmatpush1.msra.mxu0 0.0
    %3338 = vmatprep.subr.mxu0 0.0
    %3339 = vmatpush1.msra.mxu0 0.0
    %3340 = vmatprep.subr.mxu0 0.0
    %3341 = vmatpush1.msra.mxu0 0.0
    %3342 = vmatprep.subr.mxu0 0.0
    %3343 = vmatpush1.msra.mxu0 0.0
    %3344 = vmatprep.subr.mxu0 0.0
    %3345 = vmatpush1.msra.mxu0 0.0
    %3346 = vmatprep.subr.mxu0 0.0
    %3347 = vmatpush1.msra.mxu0 0.0
    %3348 = vmatprep.subr.mxu0 0.0
    %3349 = vmatpush1.msra.mxu0 0.0
    %3350 = vmatprep.subr.mxu0 0.0
    %3351 = vmatpush1.msra.mxu0 0.0
    %3352 = vmatprep.subr.mxu0 0.0
    %3353 = vmatpush1.msra.mxu0 0.0
    %3354 = vmatprep.subr.mxu0 0.0
    %3355 = vmatpush1.msra.mxu0 0.0
    %3356 = vmatprep.subr.mxu0 0.0
    %3357 = vmatpush1.msra.mxu0 0.0
    %3358 = vmatprep.subr.mxu0 0.0
    %3359 = vmatpush1.msra.mxu0 0.0
    %3360 = vmatprep.subr.mxu0 0.0
    %3361 = vmatpush1.msra.mxu0 0.0
    %3362 = vmatprep.subr.mxu0 0.0
    %3363 = vmatpush1.msra.mxu0 0.0
    %3364 = vmatprep.subr.mxu0 0.0
    %3365 = vmatpush1.msra.mxu0 0.0
    %3366 = vmatprep.subr.mxu0 0.0
    %3367 = vmatpush1.msra.mxu0 0.0
    %3368 = vmatprep.subr.mxu0 0.0
    %3369 = vmatpush1.msra.mxu0 0.0
    %3370 = vmatprep.subr.mxu0 0.0
    %3371 = vmatpush1.msra.mxu0 0.0
    %3372 = vmatprep.subr.mxu0 0.0
    %3373 = vmatpush1.msra.mxu0 0.0
    %3374 = vmatprep.subr.mxu0 0.0
    %3375 = vmatpush1.msra.mxu0 0.0
    %3376 = vmatprep.subr.mxu0 0.0
    %3377 = vmatpush1.msra.mxu0 0.0
    %3378 = vmatprep.mubr.f32.mxu0 0.0
    %3379 = vmatmul.mubr.f32.gmra.mrb[0].mxu0 %v3172
    %v3380 = vpop.f32.mrb[0].mxu0
    %v3381 = vadd.f32 %v2538, %v3380
    %v3382 = vpop.f32.mrb[0].mxu0
    %3383 = vdwg.mxu0
    %v3385 = vrot.slane %v3241, 5
    %v3387 = vadd.f32 %v2353, %v3385
    %v3388 = vxor.u32 %v3387, 2147483648
    %v3389 = vmul.f32 %v3388, 1.442695
    %v3390 = vpow.pop %v3389
    %v3391 = vadd.f32 %v3390, 1.0
    %v3392 = vrcp.pop %v3391
    %v3393 = vmul.f32 1.0, %v3392
    %v3395 = vrot.slane %v3311, 5
    %3396 = vrot.lane.b32.xlu0 %v3395, 32
    %v3397 = vpop.permute.xlu0 %3396
    %v3399 = vadd.f32 %v2353, %v3397
    %v3400 = vxor.u32 %v3399, 2147483648
    %v3401 = vmul.f32 %v3400, 1.442695
    %v3402 = vpow.pop %v3401
    %v3403 = vadd.f32 %v3402, 1.0
    %v3404 = vrcp.pop %v3403
    %v3405 = vmul.f32 1.0, %v3404
    %v3407 = vrot.slane %v3381, 5
    %v3409 = vmul.f32 %v3393, %v3407
    %3411 = vrot.lane.b32.xlu0 %v3409, 64
    %v3412 = vpop.permute.xlu0 %3411
    %v3414 = vadd.f32 %v2353, %v3412
    %v3415 = vtanh.pop %v3414
    %v3416 = vsub.f32 1.0, %v3405
    %3418 = vrot.lane.b32.xlu0 %v3415, 96
    %v3419 = vpop.permute.xlu0 %3418
    %v3421 = vmul.f32 %v3416, %v3419
    %v3422 = vrot.slane %v3163, 7
    %v3424 = vmul.f32 %v3405, %v3422
    %v3425 = vadd.f32 %v3421, %v3424
    %3427 = vrot.lane.b32.xlu0 %v3425, 96
    %v3428 = vpop.permute.xlu0 %3427
    %3430 = vst.msk [vmem:[#allocation3] sm:$0x8] %vm1217, %v3428
    %v3431 = vld [vmem:[#allocation3] sm:$0xf]
    %v3432 = vld [vmem:[#allocation2] sm:$0xff]
    %v3434 = vsel %vm63, %v3431, 0
    %v3437 = vsel %vm63, %v3432, 0
    %3439 = vmatprep.subr.mxu0 0.0
    %3440 = vmatpush1.xpose.msra.mxu0 %v3437
    %3441 = vmatprep.subr.mxu0 0.0
    %3442 = vmatpush1.xpose.msra.mxu0 0.0
    %3443 = vmatprep.subr.mxu0 0.0
    %3444 = vmatpush1.xpose.msra.mxu0 0.0
    %3445 = vmatprep.subr.mxu0 0.0
    %3446 = vmatpush1.xpose.msra.mxu0 0.0
    %3447 = vmatprep.subr.mxu0 0.0
    %3448 = vmatpush1.xpose.msra.mxu0 0.0
    %3449 = vmatprep.subr.mxu0 0.0
    %3450 = vmatpush1.xpose.msra.mxu0 0.0
    %3451 = vmatprep.subr.mxu0 0.0
    %3452 = vmatpush1.xpose.msra.mxu0 0.0
    %3453 = vmatprep.subr.mxu0 0.0
    %3454 = vmatpush1.xpose.msra.mxu0 0.0
    %3455 = vmatprep.subr.mxu0 0.0
    %3456 = vmatpush1.xpose.msra.mxu0 0.0
    %3457 = vmatprep.subr.mxu0 0.0
    %3458 = vmatpush1.xpose.msra.mxu0 0.0
    %3459 = vmatprep.subr.mxu0 0.0
    %3460 = vmatpush1.xpose.msra.mxu0 0.0
    %3461 = vmatprep.subr.mxu0 0.0
    %3462 = vmatpush1.xpose.msra.mxu0 0.0
    %3463 = vmatprep.subr.mxu0 0.0
    %3464 = vmatpush1.xpose.msra.mxu0 0.0
    %3465 = vmatprep.subr.mxu0 0.0
    %3466 = vmatpush1.xpose.msra.mxu0 0.0
    %3467 = vmatprep.subr.mxu0 0.0
    %3468 = vmatpush1.xpose.msra.mxu0 0.0
    %3469 = vmatprep.subr.mxu0 0.0
    %3470 = vmatpush1.xpose.msra.mxu0 0.0
    %3471 = vmatprep.subr.mxu0 0.0
    %3472 = vmatpush1.xpose.msra.mxu0 0.0
    %3473 = vmatprep.subr.mxu0 0.0
    %3474 = vmatpush1.xpose.msra.mxu0 0.0
    %3475 = vmatprep.subr.mxu0 0.0
    %3476 = vmatpush1.xpose.msra.mxu0 0.0
    %3477 = vmatprep.subr.mxu0 0.0
    %3478 = vmatpush1.xpose.msra.mxu0 0.0
    %3479 = vmatprep.subr.mxu0 0.0
    %3480 = vmatpush1.xpose.msra.mxu0 0.0
    %3481 = vmatprep.subr.mxu0 0.0
    %3482 = vmatpush1.xpose.msra.mxu0 0.0
    %3483 = vmatprep.subr.mxu0 0.0
    %3484 = vmatpush1.xpose.msra.mxu0 0.0
    %3485 = vmatprep.subr.mxu0 0.0
    %3486 = vmatpush1.xpose.msra.mxu0 0.0
    %3487 = vmatprep.subr.mxu0 0.0
    %3488 = vmatpush1.xpose.msra.mxu0 0.0
    %3489 = vmatprep.subr.mxu0 0.0
    %3490 = vmatpush1.xpose.msra.mxu0 0.0
    %3491 = vmatprep.subr.mxu0 0.0
    %3492 = vmatpush1.xpose.msra.mxu0 0.0
    %3493 = vmatprep.subr.mxu0 0.0
    %3494 = vmatpush1.xpose.msra.mxu0 0.0
    %3495 = vmatprep.subr.mxu0 0.0
    %3496 = vmatpush1.xpose.msra.mxu0 0.0
    %3497 = vmatprep.subr.mxu0 0.0
    %3498 = vmatpush1.xpose.msra.mxu0 0.0
    %3499 = vmatprep.subr.mxu0 0.0
    %3500 = vmatpush1.xpose.msra.mxu0 0.0
    %3501 = vmatprep.subr.mxu0 0.0
    %3502 = vmatpush1.xpose.msra.mxu0 0.0
    %3503 = vmatprep.mubr.f32.mxu0 0.0
    %3504 = vmatmul.mubr.f32.gmra.mrb[0].mxu0 %v3434
    %v3505 = vpop.f32.mrb[0].mxu0
    %v3506 = vadd.f32 0.0, %v3505
    %v3507 = vpop.f32.mrb[0].mxu0
    %3508 = vdwg.mxu0
    %vm3509 = vcmask 60416
    %v3510 = vsel %vm3509, %v3506, -inf
    %3511 = vmax.xlane.f32.xlu0 %v3510
    %v3512 = vpop.xlane.xlu0 %3511
    %v3513 = vsub.f32 %v3506, %v3512
    %v3514 = vmul.f32 %v3513, 1.442695
    %v3515 = vpow.pop %v3514
    %v3516 = vsel %vm3509, %v3515, 0.0
    %3517 = vadd.xlane.f32.xlu0 %v3516
    %v3518 = vpop.xlane.xlu0 %3517
    %v3519 = vrcp.pop %v3518
    %v3520 = vmul.f32 %v3515, %v3519
    %vm3521 = vcmask 64512
    %v3523 = vsel %vm3521, %v3520, 0
    %3525 = vmatprep.subr.mxu0 0.0
    %3526 = vmatpush1.msra.mxu0 %v3432
    %3527 = vmatprep.subr.mxu0 0.0
    %3528 = vmatpush1.msra.mxu0 0.0
    %3529 = vmatprep.subr.mxu0 0.0
    %3530 = vmatpush1.msra.mxu0 0.0
    %3531 = vmatprep.subr.mxu0 0.0
    %3532 = vmatpush1.msra.mxu0 0.0
    %3533 = vmatprep.subr.mxu0 0.0
    %3534 = vmatpush1.msra.mxu0 0.0
    %3535 = vmatprep.subr.mxu0 0.0
    %3536 = vmatpush1.msra.mxu0 0.0
    %3537 = vmatprep.subr.mxu0 0.0
    %3538 = vmatpush1.msra.mxu0 0.0
    %3539 = vmatprep.subr.mxu0 0.0
    %3540 = vmatpush1.msra.mxu0 0.0
    %3541 = vmatprep.subr.mxu0 0.0
    %3542 = vmatpush1.msra.mxu0 0.0
    %3543 = vmatprep.subr.mxu0 0.0
    %3544 = vmatpush1.msra.mxu0 0.0
    %3545 = vmatprep.subr.mxu0 0.0
    %3546 = vmatpush1.msra.mxu0 0.0
    %3547 = vmatprep.subr.mxu0 0.0
    %3548 = vmatpush1.msra.mxu0 0.0
    %3549 = vmatprep.subr.mxu0 0.0
    %3550 = vmatpush1.msra.mxu0 0.0
    %3551 = vmatprep.subr.mxu0 0.0
    %3552 = vmatpush1.msra.mxu0 0.0
    %3553 = vmatprep.subr.mxu0 0.0
    %3554 = vmatpush1.msra.mxu0 0.0
    %3555 = vmatprep.subr.mxu0 0.0
    %3556 = vmatpush1.msra.mxu0 0.0
    %3557 = vmatprep.subr.mxu0 0.0
    %3558 = vmatpush1.msra.mxu0 0.0
    %3559 = vmatprep.subr.mxu0 0.0
    %3560 = vmatpush1.msra.mxu0 0.0
    %3561 = vmatprep.subr.mxu0 0.0
    %3562 = vmatpush1.msra.mxu0 0.0
    %3563 = vmatprep.subr.mxu0 0.0
    %3564 = vmatpush1.msra.mxu0 0.0
    %3565 = vmatprep.subr.mxu0 0.0
    %3566 = vmatpush1.msra.mxu0 0.0
    %3567 = vmatprep.subr.mxu0 0.0
    %3568 = vmatpush1.msra.mxu0 0.0
    %3569 = vmatprep.subr.mxu0 0.0
    %3570 = vmatpush1.msra.mxu0 0.0
    %3571 = vmatprep.subr.mxu0 0.0
    %3572 = vmatpush1.msra.mxu0 0.0
    %3573 = vmatprep.subr.mxu0 0.0
    %3574 = vmatpush1.msra.mxu0 0.0
    %3575 = vmatprep.subr.mxu0 0.0
    %3576 = vmatpush1.msra.mxu0 0.0
    %3577 = vmatprep.subr.mxu0 0.0
    %3578 = vmatpush1.msra.mxu0 0.0
    %3579 = vmatprep.subr.mxu0 0.0
    %3580 = vmatpush1.msra.mxu0 0.0
    %3581 = vmatprep.subr.mxu0 0.0
    %3582 = vmatpush1.msra.mxu0 0.0
    %3583 = vmatprep.subr.mxu0 0.0
    %3584 = vmatpush1.msra.mxu0 0.0
    %3585 = vmatprep.subr.mxu0 0.0
    %3586 = vmatpush1.msra.mxu0 0.0
    %3587 = vmatprep.subr.mxu0 0.0
    %3588 = vmatpush1.msra.mxu0 0.0
    %3589 = vmatprep.mubr.f32.mxu0 0.0
    %3590 = vmatmul.mubr.f32.gmra.mrb[0].mxu0 %v3523
    %v3591 = vpop.f32.mrb[0].mxu0
    %v3592 = vadd.f32 0.0, %v3591
    %v3593 = vpop.f32.mrb[0].mxu0
    %3594 = vdwg.mxu0
    %v3595 = vld [vmem:[%s11] sm:$0xff]
    %v3596 = vld [vmem:[%s11 + $0x8] sm:$0xff]
    %v3597 = vld [vmem:[%s11 + $0x10] sm:$0xff]
    %v3598 = vld [vmem:[%s11 + $0x18] sm:$0xff]
    %v3599 = vld [vmem:[%s12] sm:$0xff]
    %v3600 = vld [vmem:[%s12 + $0x8] sm:$0xff]
    %v3601 = vld [vmem:[%s12 + $0x10] sm:$0xff]
    %v3602 = vld [vmem:[%s12 + $0x18] sm:$0xff]
    %v3604 = vsel %vm63, %v3592, 0
    %3606 = vmatprep.subr.mxu0 0.0
    %3607 = vmatpush1.msra.mxu0 %v3599
    %3608 = vmatprep.subr.mxu0 0.0
    %3609 = vmatpush1.msra.mxu0 %v3600
    %3610 = vmatprep.subr.mxu0 0.0
    %3611 = vmatpush1.msra.mxu0 %v3601
    %3612 = vmatprep.subr.mxu0 0.0
    %3613 = vmatpush1.msra.mxu0 %v3602
    %3614 = vmatprep.subr.mxu0 0.0
    %3615 = vmatpush1.msra.mxu0 0.0
    %3616 = vmatprep.subr.mxu0 0.0
    %3617 = vmatpush1.msra.mxu0 0.0
    %3618 = vmatprep.subr.mxu0 0.0
    %3619 = vmatpush1.msra.mxu0 0.0
    %3620 = vmatprep.subr.mxu0 0.0
    %3621 = vmatpush1.msra.mxu0 0.0
    %3622 = vmatprep.subr.mxu0 0.0
    %3623 = vmatpush1.msra.mxu0 0.0
    %3624 = vmatprep.subr.mxu0 0.0
    %3625 = vmatpush1.msra.mxu0 0.0
    %3626 = vmatprep.subr.mxu0 0.0
    %3627 = vmatpush1.msra.mxu0 0.0
    %3628 = vmatprep.subr.mxu0 0.0
    %3629 = vmatpush1.msra.mxu0 0.0
    %3630 = vmatprep.subr.mxu0 0.0
    %3631 = vmatpush1.msra.mxu0 0.0
    %3632 = vmatprep.subr.mxu0 0.0
    %3633 = vmatpush1.msra.mxu0 0.0
    %3634 = vmatprep.subr.mxu0 0.0
    %3635 = vmatpush1.msra.mxu0 0.0
    %3636 = vmatprep.subr.mxu0 0.0
    %3637 = vmatpush1.msra.mxu0 0.0
    %3638 = vmatprep.subr.mxu0 0.0
    %3639 = vmatpush1.msra.mxu0 0.0
    %3640 = vmatprep.subr.mxu0 0.0
    %3641 = vmatpush1.msra.mxu0 0.0
    %3642 = vmatprep.subr.mxu0 0.0
    %3643 = vmatpush1.msra.mxu0 0.0
    %3644 = vmatprep.subr.mxu0 0.0
    %3645 = vmatpush1.msra.mxu0 0.0
    %3646 = vmatprep.subr.mxu0 0.0
    %3647 = vmatpush1.msra.mxu0 0.0
    %3648 = vmatprep.subr.mxu0 0.0
    %3649 = vmatpush1.msra.mxu0 0.0
    %3650 = vmatprep.subr.mxu0 0.0
    %3651 = vmatpush1.msra.mxu0 0.0
    %3652 = vmatprep.subr.mxu0 0.0
    %3653 = vmatpush1.msra.mxu0 0.0
    %3654 = vmatprep.subr.mxu0 0.0
    %3655 = vmatpush1.msra.mxu0 0.0
    %3656 = vmatprep.subr.mxu0 0.0
    %3657 = vmatpush1.msra.mxu0 0.0
    %3658 = vmatprep.subr.mxu0 0.0
    %3659 = vmatpush1.msra.mxu0 0.0
    %3660 = vmatprep.subr.mxu0 0.0
    %3661 = vmatpush1.msra.mxu0 0.0
    %3662 = vmatprep.subr.mxu0 0.0
    %3663 = vmatpush1.msra.mxu0 0.0
    %3664 = vmatprep.subr.mxu0 0.0
    %3665 = vmatpush1.msra.mxu0 0.0
    %3666 = vmatprep.subr.mxu0 0.0
    %3667 = vmatpush1.msra.mxu0 0.0
    %3668 = vmatprep.subr.mxu0 0.0
    %3669 = vmatpush1.msra.mxu0 0.0
    %3670 = vmatprep.mubr.f32.mxu0 0.0
    %3671 = vmatmul.mubr.f32.gmra.mrb[0].mxu0 %v3604
    %v3672 = vpop.f32.mrb[0].mxu0
    %v3673 = vadd.f32 0.0, %v3672
    %v3674 = vpop.f32.mrb[0].mxu0
    %3675 = vdwg.mxu0
    %3676 = vmatprep.subr.mxu0 0.0
    %3677 = vmatpush1.msra.mxu0 %v3595
    %3678 = vmatprep.subr.mxu0 0.0
    %3679 = vmatpush1.msra.mxu0 %v3596
    %3680 = vmatprep.subr.mxu0 0.0
    %3681 = vmatpush1.msra.mxu0 %v3597
    %3682 = vmatprep.subr.mxu0 0.0
    %3683 = vmatpush1.msra.mxu0 %v3598
    %3684 = vmatprep.subr.mxu0 0.0
    %3685 = vmatpush1.msra.mxu0 0.0
    %3686 = vmatprep.subr.mxu0 0.0
    %3687 = vmatpush1.msra.mxu0 0.0
    %3688 = vmatprep.subr.mxu0 0.0
    %3689 = vmatpush1.msra.mxu0 0.0
    %3690 = vmatprep.subr.mxu0 0.0
    %3691 = vmatpush1.msra.mxu0 0.0
    %3692 = vmatprep.subr.mxu0 0.0
    %3693 = vmatpush1.msra.mxu0 0.0
    %3694 = vmatprep.subr.mxu0 0.0
    %3695 = vmatpush1.msra.mxu0 0.0
    %3696 = vmatprep.subr.mxu0 0.0
    %3697 = vmatpush1.msra.mxu0 0.0
    %3698 = vmatprep.subr.mxu0 0.0
    %3699 = vmatpush1.msra.mxu0 0.0
    %3700 = vmatprep.subr.mxu0 0.0
    %3701 = vmatpush1.msra.mxu0 0.0
    %3702 = vmatprep.subr.mxu0 0.0
    %3703 = vmatpush1.msra.mxu0 0.0
    %3704 = vmatprep.subr.mxu0 0.0
    %3705 = vmatpush1.msra.mxu0 0.0
    %3706 = vmatprep.subr.mxu0 0.0
    %3707 = vmatpush1.msra.mxu0 0.0
    %3708 = vmatprep.subr.mxu0 0.0
    %3709 = vmatpush1.msra.mxu0 0.0
    %3710 = vmatprep.subr.mxu0 0.0
    %3711 = vmatpush1.msra.mxu0 0.0
    %3712 = vmatprep.subr.mxu0 0.0
    %3713 = vmatpush1.msra.mxu0 0.0
    %3714 = vmatprep.subr.mxu0 0.0
    %3715 = vmatpush1.msra.mxu0 0.0
    %3716 = vmatprep.subr.mxu0 0.0
    %3717 = vmatpush1.msra.mxu0 0.0
    %3718 = vmatprep.subr.mxu0 0.0
    %3719 = vmatpush1.msra.mxu0 0.0
    %3720 = vmatprep.subr.mxu0 0.0
    %3721 = vmatpush1.msra.mxu0 0.0
    %3722 = vmatprep.subr.mxu0 0.0
    %3723 = vmatpush1.msra.mxu0 0.0
    %3724 = vmatprep.subr.mxu0 0.0
    %3725 = vmatpush1.msra.mxu0 0.0
    %3726 = vmatprep.subr.mxu0 0.0
    %3727 = vmatpush1.msra.mxu0 0.0
    %3728 = vmatprep.subr.mxu0 0.0
    %3729 = vmatpush1.msra.mxu0 0.0
    %3730 = vmatprep.subr.mxu0 0.0
    %3731 = vmatpush1.msra.mxu0 0.0
    %3732 = vmatprep.subr.mxu0 0.0
    %3733 = vmatpush1.msra.mxu0 0.0
    %3734 = vmatprep.subr.mxu0 0.0
    %3735 = vmatpush1.msra.mxu0 0.0
    %3736 = vmatprep.subr.mxu0 0.0
    %3737 = vmatpush1.msra.mxu0 0.0
    %3738 = vmatprep.subr.mxu0 0.0
    %3739 = vmatpush1.msra.mxu0 0.0
    %3740 = vmatprep.mubr.f32.mxu0 0.0
    %3741 = vmatmul.mubr.f32.gmra.mrb[0].mxu0 %v3434
    %v3742 = vpop.f32.mrb[0].mxu0
    %v3743 = vadd.f32 %v3673, %v3742
    %v3744 = vpop.f32.mrb[0].mxu0
    %3745 = vdwg.mxu0
    %v3746 = vld [vmem:[%s10] sm:$0x1]
    %v3747 = vld [vmem:[%s13] sm:$0xff]
    %v3749 = vsel %vm3521, %v3746, 0
    %3751 = vmatprep.subr.mxu0 0.0
    %3752 = vmatpush1.msra.mxu0 %v3747
    %3753 = vmatprep.subr.mxu0 0.0
    %3754 = vmatpush1.msra.mxu0 0.0
    %3755 = vmatprep.subr.mxu0 0.0
    %3756 = vmatpush1.msra.mxu0 0.0
    %3757 = vmatprep.subr.mxu0 0.0
    %3758 = vmatpush1.msra.mxu0 0.0
    %3759 = vmatprep.subr.mxu0 0.0
    %3760 = vmatpush1.msra.mxu0 0.0
    %3761 = vmatprep.subr.mxu0 0.0
    %3762 = vmatpush1.msra.mxu0 0.0
    %3763 = vmatprep.subr.mxu0 0.0
    %3764 = vmatpush1.msra.mxu0 0.0
    %3765 = vmatprep.subr.mxu0 0.0
    %3766 = vmatpush1.msra.mxu0 0.0
    %3767 = vmatprep.subr.mxu0 0.0
    %3768 = vmatpush1.msra.mxu0 0.0
    %3769 = vmatprep.subr.mxu0 0.0
    %3770 = vmatpush1.msra.mxu0 0.0
    %3771 = vmatprep.subr.mxu0 0.0
    %3772 = vmatpush1.msra.mxu0 0.0
    %3773 = vmatprep.subr.mxu0 0.0
    %3774 = vmatpush1.msra.mxu0 0.0
    %3775 = vmatprep.subr.mxu0 0.0
    %3776 = vmatpush1.msra.mxu0 0.0
    %3777 = vmatprep.subr.mxu0 0.0
    %3778 = vmatpush1.msra.mxu0 0.0
    %3779 = vmatprep.subr.mxu0 0.0
    %3780 = vmatpush1.msra.mxu0 0.0
    %3781 = vmatprep.subr.mxu0 0.0
    %3782 = vmatpush1.msra.mxu0 0.0
    %3783 = vmatprep.subr.mxu0 0.0
    %3784 = vmatpush1.msra.mxu0 0.0
    %3785 = vmatprep.subr.mxu0 0.0
    %3786 = vmatpush1.msra.mxu0 0.0
    %3787 = vmatprep.subr.mxu0 0.0
    %3788 = vmatpush1.msra.mxu0 0.0
    %3789 = vmatprep.subr.mxu0 0.0
    %3790 = vmatpush1.msra.mxu0 0.0
    %3791 = vmatprep.subr.mxu0 0.0
    %3792 = vmatpush1.msra.mxu0 0.0
    %3793 = vmatprep.subr.mxu0 0.0
    %3794 = vmatpush1.msra.mxu0 0.0
    %3795 = vmatprep.subr.mxu0 0.0
    %3796 = vmatpush1.msra.mxu0 0.0
    %3797 = vmatprep.subr.mxu0 0.0
    %3798 = vmatpush1.msra.mxu0 0.0
    %3799 = vmatprep.subr.mxu0 0.0
    %3800 = vmatpush1.msra.mxu0 0.0
    %3801 = vmatprep.subr.mxu0 0.0
    %3802 = vmatpush1.msra.mxu0 0.0
    %3803 = vmatprep.subr.mxu0 0.0
    %3804 = vmatpush1.msra.mxu0 0.0
    %3805 = vmatprep.subr.mxu0 0.0
    %3806 = vmatpush1.msra.mxu0 0.0
    %3807 = vmatprep.subr.mxu0 0.0
    %3808 = vmatpush1.msra.mxu0 0.0
    %3809 = vmatprep.subr.mxu0 0.0
    %3810 = vmatpush1.msra.mxu0 0.0
    %3811 = vmatprep.subr.mxu0 0.0
    %3812 = vmatpush1.msra.mxu0 0.0
    %3813 = vmatprep.subr.mxu0 0.0
    %3814 = vmatpush1.msra.mxu0 0.0
    %3815 = vmatprep.mubr.f32.mxu0 0.0
    %3816 = vmatmul.mubr.f32.gmra.mrb[0].mxu0 %v3749
    %v3817 = vpop.f32.mrb[0].mxu0
    %v3818 = vadd.f32 0.0, %v3817
    %v3819 = vpop.f32.mrb[0].mxu0
    %3820 = vdwg.mxu0
    %v3821 = vlaneseq
    %v3822 = vshrl.u32 %v3821, 7
    %v3823 = vsub.s32 0, %v3822
    %v3824 = vrot.slane %v3818, %v3823
    %v3825 = vadd.f32 %v3743, %v3824
    %v3826 = vld [vmem:[%s14] sm:$0x1]
    %v3828 = vlaneseq
    %v3829 = vshrl.u32 %v3828, 7
    %v3830 = vsub.s32 0, %v3829
    %v3831 = vrot.slane %v3826, %v3830
    %v3833 = vadd.f32 %v3825, %v3831
    %vm3834 = vcmask 1043456
    %v3835 = vsel %vm3834, %v3833, -inf
    %3836 = vmax.xlane.f32.xlu0 %v3835
    %v3837 = vpop.xlane.xlu0 %3836
    %v3838 = vsub.f32 %v3833, %v3837
    %v3839 = vmul.f32 %v3838, 1.442695
    %v3840 = vpow.pop %v3839
    %v3841 = vsel %vm3834, %v3840, 0.0
    %3842 = vadd.xlane.f32.xlu0 %v3841
    %v3843 = vpop.xlane.xlu0 %3842
    %v3844 = vlog2.pop %v3843
    %v3845 = vmul.f32 %v3844, 0.6931472
    %v3846 = vadd.f32 %v3837, %v3845
    %v3847 = vsub.f32 %v3833, %v3846
    %3848 = vst [vmem:[#allocation4] sm:$0xf] %v3847
    // Predicated region
    $region62: #{traj_pre_local_attn_long_forward.1} parent=1 // pred_check
      _
    $region63: #{traj_pre_local_attn_long_forward.1} parent=1 // pred_check_branch
      %3850 = sbr.rel (0) target = $region65
    $region64: #{traj_pre_local_attn_long_forward.1} parent=1 // pred_region
      %s3852 = ssub.s32 64, 64
      %3853 = vsyncadd [#allocation5], %s3852
      %s3855 = sshll.u32 [#allocation4], 4
      %s3856 = int_to_ptr.vmem [resolvable:$true] %s3855
      %3858 = dma.vmem_to_hbm [thread:$0]  %s3856, 64, %s15, [#allocation5]
    $region65: #{traj_pre_local_attn_long_forward.1} parent=1 // pred_fallthru
      _
    // Predicated region
    $region66: #{traj_pre_local_attn_long_forward.1} parent=1 // pred_check
      _
    $region67: #{traj_pre_local_attn_long_forward.1} parent=1 // pred_check_branch
      %3860 = sbr.rel (0) target = $region69
    $region68: #{traj_pre_local_attn_long_forward.1} parent=1 // pred_region
      %3861 = dma.done [#allocation5], 64
    $region69: #{traj_pre_local_attn_long_forward.1} parent=1 // pred_fallthru
      _
    %3862 = vsyncpa [#allocation5], 1

</llo_original>
